<compile_context>
chip_gen: v7x
topology: tpu7x:2x2x1
jax: 0.10.0
libtpu: 0.0.40
codegen_flags: <defaults>
</compile_context>

<pallas_src>
import functools

import jax
import jax.numpy as jnp
from jax.experimental import pallas as pl
from jax.experimental.pallas import tpu as pltpu

D_IN = 768    # lstm1 input size
H1 = 128      # lstm1 hidden size
H2 = 32       # lstm2 hidden size
H2P = 128     # lstm2 hidden size padded to a full 128-lane panel


# ---------------------------------------------------------------------------
# Kernel 1: hoisted input projection  gx = bf16(x) @ W_ih1 + (b_ih1 + b_hh1)
# x arrives f32 and is cast in-kernel (single HBM read of x); gx is stored
# bf16 to halve the gate tensor's HBM write/read roundtrip.
# ---------------------------------------------------------------------------
def _proj_kernel(x_ref, w_ref, b_ref, o_ref):
    acc = jnp.dot(x_ref[...].astype(jnp.bfloat16), w_ref[...],
                  preferred_element_type=jnp.float32) + b_ref[...]
    o_ref[...] = acc.astype(o_ref.dtype)


# ---------------------------------------------------------------------------
# Kernel 2: two-layer LSTM recurrence over a block of timesteps.
# gx_ref: (time_block, B, 4*H1) bf16 (time-major -> leading-axis dynamic load)
# whh1_ref: (H1, 4*H1) bf16
# w2_ref:   (H1 + H2P, 4*H2P) bf16  -- fused, gate-panel-padded [W_ih2; W_hh2]
# b2_ref:   (1, 4*H2P) f32
# State is carried in fori_loop registers; VMEM scratch only bridges blocks.
# ---------------------------------------------------------------------------
def _recurrent_kernel(gx_ref, whh1_ref, w2_ref, b2_ref,
                      h2_out_ref, h1_ref, c1_ref, h2_ref, c2_ref):
    tb = pl.program_id(0)

    @pl.when(tb == 0)
    def _():
        h1_ref[...] = jnp.zeros_like(h1_ref)
        c1_ref[...] = jnp.zeros_like(c1_ref)
        h2_ref[...] = jnp.zeros_like(h2_ref)
        c2_ref[...] = jnp.zeros_like(c2_ref)

    tt_steps = gx_ref.shape[0]
    b_dim = gx_ref.shape[1]

    whh1 = whh1_ref[...]                                   # (128, 512) bf16
    w2 = w2_ref[...]                                       # (256, 512) bf16
    # Hoist the bias broadcast out of the loop (broadcast_in_dim is not CSE'd).
    b2 = jnp.broadcast_to(b2_ref[...], (b_dim, 4 * H2P))   # f32

    def step(tt, carry):
        h1_bf, c1, h2, c2 = carry

        # ---- LSTM layer 1 (768 -> 128); x @ W_ih1 + b precomputed ----
        # Per-timestep gate load bounds vreg pressure (no whole-block read).
        g1 = gx_ref[tt].astype(jnp.float32) + jnp.dot(
            h1_bf, whh1, preferred_element_type=jnp.float32)
        # PyTorch gate order: i, f, g, o (each a full 128-lane panel).
        i1 = jax.nn.sigmoid(g1[:, 0 * H1:1 * H1])
        f1 = jax.nn.sigmoid(g1[:, 1 * H1:2 * H1])
        gg1 = jnp.tanh(g1[:, 2 * H1:3 * H1])
        o1 = jax.nn.sigmoid(g1[:, 3 * H1:4 * H1])
        c1 = f1 * c1 + i1 * gg1
        h1_bf = (o1 * jnp.tanh(c1)).astype(jnp.bfloat16)   # single cast/step

        # ---- LSTM layer 2 (128 -> 32), single fused MXU matmul ----
        # Gates padded to 128-lane panels; h2/c2 padding lanes stay exactly 0.
        hcat = jnp.concatenate([h1_bf, h2.astype(jnp.bfloat16)], axis=-1)
        g2 = jnp.dot(hcat, w2, preferred_element_type=jnp.float32) + b2
        i2 = jax.nn.sigmoid(g2[:, 0 * H2P:1 * H2P])
        f2 = jax.nn.sigmoid(g2[:, 1 * H2P:2 * H2P])
        gg2 = jnp.tanh(g2[:, 2 * H2P:3 * H2P])
        o2 = jax.nn.sigmoid(g2[:, 3 * H2P:4 * H2P])
        c2 = f2 * c2 + i2 * gg2
        h2 = o2 * jnp.tanh(c2)
        return h1_bf, c1, h2, c2

    carry = (h1_ref[...], c1_ref[...], h2_ref[...], c2_ref[...])
    h1_bf, c1, h2, c2 = jax.lax.fori_loop(0, tt_steps, step, carry, unroll=8)

    # Touch VMEM state only at block exit (bridges to the next time block).
    h1_ref[...] = h1_bf
    c1_ref[...] = c1
    h2_ref[...] = h2
    c2_ref[...] = c2

    # Only the final hidden state is needed downstream.
    @pl.when(tb == pl.num_programs(0) - 1)
    def _():
        h2_out_ref[...] = h2


@functools.partial(jax.jit, static_argnames=("time_block",))
def bert_text_lstm_net(x, params, time_block=None):
    """x: (B, T, 768) float32. Returns (B, 1) float32 logits."""
    B, T, _ = x.shape
    wih1, whh1, b1, wih2, whh2, b2, wc, bc = params
    bf = jnp.bfloat16

    # Small-weight bf16 operands (MXU native); biases / state stay f32.
    wih1_bf = wih1.astype(bf)
    whh1_bf = whh1.astype(bf)

    # Layer-2 weights: pad every 32-wide gate to its own 128-lane panel and
    # fuse [W_ih2; W_hh2] so the recurrence does one matmul per step on
    # concat([h1, h2]).  Zero padding keeps h2/c2 padding lanes exactly 0.
    def pad_gate_cols(w):
        k = w.shape[0]
        return jnp.pad(w.reshape(k, 4, H2),
                       ((0, 0), (0, 0), (0, H2P - H2))).reshape(k, 4 * H2P)

    wih2_p = pad_gate_cols(wih2)                                  # (128, 512)
    whh2_p = jnp.pad(pad_gate_cols(whh2), ((0, H2P - H2), (0, 0)))  # (128, 512)
    w2_bf = jnp.concatenate([wih2_p, whh2_p], axis=0).astype(bf)  # (256, 512)
    b2_p = pad_gate_cols(b2)                                      # (1, 512) f32

    # ---- hoisted lstm1 input projection: (M, 768) @ (768, 512) -> bf16 ----
    M = B * T
    x2d = x.reshape(M, D_IN)                 # free reshape; x stays f32
    if M >= 256:
        MP = ((M + 255) // 256) * 256        # pad ragged M instead of tm=M
        tm = 1024 if MP % 1024 == 0 else (512 if MP % 512 == 0 else 256)
    else:
        MP = ((M + 7) // 8) * 8              # single small 8-aligned block
        tm = MP
    if MP != M:
        x2d = jnp.pad(x2d, ((0, MP - M), (0, 0)))

    gx2d = pl.pallas_call(
        _proj_kernel,
        out_shape=jax.ShapeDtypeStruct((MP, 4 * H1), jnp.bfloat16),
        grid_spec=pltpu.PrefetchScalarGridSpec(
            num_scalar_prefetch=0,
            grid=(MP // tm,),
            in_specs=[
                pl.BlockSpec((tm, D_IN), lambda i: (i, 0)),        # x rows (f32)
                pl.BlockSpec((D_IN, 4 * H1), lambda i: (0, 0)),    # W_ih1^T
                pl.BlockSpec((1, 4 * H1), lambda i: (0, 0)),       # b_ih1+b_hh1
            ],
            out_specs=pl.BlockSpec((tm, 4 * H1), lambda i: (i, 0)),
        ),
        compiler_params=pltpu.CompilerParams(
            dimension_semantics=("parallel",)),
    )(x2d, wih1_bf, b1)
    if MP != M:
        gx2d = gx2d[:M]
    # Time-major gate tensor so the recurrent kernel indexes timesteps on the
    # leading (untiled) axis; bf16 keeps this transpose half-size.
    gx = jnp.swapaxes(gx2d.reshape(B, T, 4 * H1), 0, 1)     # (T, B, 512) bf16

    # ---- recurrence: grid over time blocks ----
    # Cap the gx block so the double-buffered pipeline fits the smallest
    # scoped-VMEM defaults (v5e 16 MiB / v7x 32 MiB): one buffer <= 4 MiB,
    # budgeted with the sublane-padded (bf16 tile = 16 sublanes) slab size.
    b_pad = ((B + 15) // 16) * 16
    cap = max(1, (4 << 20) // (b_pad * 4 * H1 * 2))
    if time_block is None or time_block <= 0 or T % time_block != 0:
        time_block = min(T, cap)
        while T % time_block:
            time_block -= 1
    n_tb = T // time_block

    h2_last = pl.pallas_call(
        _recurrent_kernel,
        out_shape=jax.ShapeDtypeStruct((B, H2P), jnp.float32),
        grid_spec=pltpu.PrefetchScalarGridSpec(
            num_scalar_prefetch=0,
            grid=(n_tb,),
            in_specs=[
                pl.BlockSpec((time_block, B, 4 * H1),
                             lambda tb: (tb, 0, 0)),               # gates1_x
                pl.BlockSpec((H1, 4 * H1), lambda tb: (0, 0)),     # W_hh1^T
                pl.BlockSpec((H1 + H2P, 4 * H2P),
                             lambda tb: (0, 0)),                   # [Wih2;Whh2]
                pl.BlockSpec((1, 4 * H2P), lambda tb: (0, 0)),     # b2 (padded)
            ],
            out_specs=pl.BlockSpec((B, H2P), lambda tb: (0, 0)),
            scratch_shapes=[
                pltpu.VMEM((B, H1), jnp.bfloat16),   # h1 (MXU operand dtype)
                pltpu.VMEM((B, H1), jnp.float32),    # c1
                pltpu.VMEM((B, H2P), jnp.float32),   # h2 (lane-padded)
                pltpu.VMEM((B, H2P), jnp.float32),   # c2 (lane-padded)
            ],
        ),
        compiler_params=pltpu.CompilerParams(
            dimension_semantics=("arbitrary",)),   # time recurrence is serial
    )(gx, whh1_bf, w2_bf, b2_p)

    # ---- classifier on the final hidden state (Dropout = identity) ----
    return h2_last[:, :H2] @ wc + bc


# ---------------- pure-JAX reference (mirrors kernel precision) ----------------
def _reference(x, params):
    wih1, whh1, b1, wih2, whh2, b2, wc, bc = params
    bf = jnp.bfloat16
    B, T, _ = x.shape
    whh1_bf = whh1.astype(bf)
    wih2_bf = wih2.astype(bf)
    whh2_bf = whh2.astype(bf)

    # Hoisted input projection, stored in bf16 (mirrors the proj kernel).
    gx = (jnp.dot(x.reshape(B * T, D_IN).astype(bf), wih1.astype(bf),
                  preferred_element_type=jnp.float32) + b1).astype(bf)
    gx = gx.reshape(B, T, 4 * H1)

    def step(carry, g_t):
        h1, c1, h2, c2 = carry
        g1 = g_t.astype(jnp.float32) + jnp.dot(
            h1.astype(bf), whh1_bf, preferred_element_type=jnp.float32)
        i1 = jax.nn.sigmoid(g1[:, 0 * H1:1 * H1])
        f1 = jax.nn.sigmoid(g1[:, 1 * H1:2 * H1])
        gg1 = jnp.tanh(g1[:, 2 * H1:3 * H1])
        o1 = jax.nn.sigmoid(g1[:, 3 * H1:4 * H1])
        c1 = f1 * c1 + i1 * gg1
        h1 = o1 * jnp.tanh(c1)

        g2 = (jnp.dot(h1.astype(bf), wih2_bf, preferred_element_type=jnp.float32)
              + jnp.dot(h2.astype(bf), whh2_bf, preferred_element_type=jnp.float32)
              + b2)
        i2 = jax.nn.sigmoid(g2[:, 0 * H2:1 * H2])
        f2 = jax.nn.sigmoid(g2[:, 1 * H2:2 * H2])
        gg2 = jnp.tanh(g2[:, 2 * H2:3 * H2])
        o2 = jax.nn.sigmoid(g2[:, 3 * H2:4 * H2])
        c2 = f2 * c2 + i2 * gg2
        h2 = o2 * jnp.tanh(c2)
        return (h1, c1, h2, c2), None

    init = (jnp.zeros((B, H1), jnp.float32), jnp.zeros((B, H1), jnp.float32),
            jnp.zeros((B, H2), jnp.float32), jnp.zeros((B, H2), jnp.float32))
    (_, _, h2, _), _ = jax.lax.scan(step, init, jnp.swapaxes(gx, 0, 1))
    return h2 @ wc + bc


def _init_params(key):
    ks = jax.random.split(key, 9)
    s = 0.05
    # PyTorch layout is (4H, in) / (4H, H); we store transposed for x @ W.
    wih1 = s * jax.random.normal(ks[0], (D_IN, 4 * H1), jnp.float32)
    whh1 = s * jax.random.normal(ks[1], (H1, 4 * H1), jnp.float32)
    b1 = s * jax.random.normal(ks[2], (1, 4 * H1), jnp.float32)   # b_ih + b_hh
    wih2 = s * jax.random.normal(ks[3], (H1, 4 * H2), jnp.float32)
    whh2 = s * jax.random.normal(ks[4], (H2, 4 * H2), jnp.float32)
    b2 = s * jax.random.normal(ks[5], (1, 4 * H2), jnp.float32)
    # Declared Linear(128, 1) weight; only its first 32 columns are usable
    # (see TODO(synk) above): take (1,128)[:, :32] -> transpose -> (32, 1).
    wc_full = s * jax.random.normal(ks[6], (1, H1), jnp.float32)
    wc = wc_full[:, :H2].T                                         # (32, 1)
    bc = s * jax.random.normal(ks[7], (1, 1), jnp.float32)
    return (wih1, whh1, b1, wih2, whh2, b2, wc, bc)


if __name__ == "__main__":
    key = jax.random.PRNGKey(0)
    kx, kp = jax.random.split(key)

    B, T = 2, 8
    x = jax.random.normal(kx, (B, T, D_IN), jnp.float32)
    params = _init_params(kp)

    out = jax.block_until_ready(bert_text_lstm_net(x, params))
    ref = _reference(x, params)

    assert out.shape == (B, 1), out.shape
    assert jnp.allclose(out, ref, atol=2e-3, rtol=2e-3), (out, ref)

    print("KERNEL_OK")
</pallas_src>

<mosaic_0001>
module attributes {stable_mosaic.version = 11 : i64} {
  func.func @_proj_kernel(%arg0: i32, %arg1: memref<16x768xf32, #tpu.memory_space<vmem>>, %arg2: memref<768x512xbf16, #tpu.memory_space<vmem>>, %arg3: memref<1x512xf32, #tpu.memory_space<vmem>>, %arg4: memref<16x512xbf16, #tpu.memory_space<vmem>>) attributes {dimension_semantics = [#tpu.dimension_semantics<parallel>], iteration_bounds = array<i64: 1>, scalar_prefetch = 0 : i64, scratch_operands = 0 : i64, tpu.core_type = #tpu.core_type<tc>, window_params = [{transform_indices = @transform_0, window_bounds = array<i64: 16, 768>}, {pipeline_mode = #tpu.pipeline_mode<synchronous>, transform_indices = @transform_1, window_bounds = array<i64: 768, 512>}, {pipeline_mode = #tpu.pipeline_mode<synchronous>, transform_indices = @transform_2, window_bounds = array<i64: 1, 512>}, {transform_indices = @transform_3, window_bounds = array<i64: 16, 512>}]} {
    %c0 = arith.constant 0 : index
    %c0_0 = arith.constant 0 : index
    %0 = vector.load %arg1[%c0, %c0_0] : memref<16x768xf32, #tpu.memory_space<vmem>>, vector<16x768xf32>
    %1 = arith.truncf %0 : vector<16x768xf32> to vector<16x768xbf16>
    %c0_1 = arith.constant 0 : index
    %c0_2 = arith.constant 0 : index
    %2 = vector.load %arg2[%c0_1, %c0_2] : memref<768x512xbf16, #tpu.memory_space<vmem>>, vector<768x512xbf16>
    %cst = arith.constant dense<0.000000e+00> : vector<16x512xf32>
    %3 = tpu.matmul %1, %2, %cst {dimension_numbers = #tpu.dot_dimension_numbers<[1], [0], [0], [1], [0, 0, 1, 1], [], []>} : vector<16x768xbf16>, vector<768x512xbf16>, vector<16x512xf32> -> vector<16x512xf32>
    %c0_3 = arith.constant 0 : index
    %c0_4 = arith.constant 0 : index
    %4 = vector.load %arg3[%c0_3, %c0_4] : memref<1x512xf32, #tpu.memory_space<vmem>>, vector<1x512xf32>
    %5 = vector.broadcast %4 : vector<1x512xf32> to vector<16x512xf32>
    %6 = arith.addf %3, %5 : vector<16x512xf32>
    %7 = arith.truncf %6 : vector<16x512xf32> to vector<16x512xbf16>
    %c0_5 = arith.constant 0 : index
    %c0_6 = arith.constant 0 : index
    %8 = vector.load %arg4[%c0_5, %c0_6] : memref<16x512xbf16, #tpu.memory_space<vmem>>, vector<16x512xbf16>
    tpu.vector_store %arg4[%c0_5, %c0_6], %7 {strides = array<i32>} : memref<16x512xbf16, #tpu.memory_space<vmem>>, vector<16x512xbf16>,
    return
  }
  func.func @transform_0(%arg0: i32) -> (i32, i32) {
    %c0_i32 = arith.constant 0 : i32
    %c0_i32_0 = arith.constant 0 : i32
    return %arg0, %c0_i32 : i32, i32
  }
  func.func @transform_1(%arg0: i32) -> (i32, i32) {
    %c0_i32 = arith.constant 0 : i32
    %c0_i32_0 = arith.constant 0 : i32
    %c0_i32_1 = arith.constant 0 : i32
    return %c0_i32, %c0_i32_0 : i32, i32
  }
  func.func @transform_2(%arg0: i32) -> (i32, i32) {
    %c0_i32 = arith.constant 0 : i32
    %c0_i32_0 = arith.constant 0 : i32
    %c0_i32_1 = arith.constant 0 : i32
    return %c0_i32, %c0_i32_0 : i32, i32
  }
  func.func @transform_3(%arg0: i32) -> (i32, i32) {
    %c0_i32 = arith.constant 0 : i32
    %c0_i32_0 = arith.constant 0 : i32
    return %arg0, %c0_i32 : i32, i32
  }
}

module attributes {stable_mosaic.version = 11 : i64} {
  func.func @_recurrent_kernel(%arg0: i32, %arg1: memref<8x2x512xbf16, #tpu.memory_space<vmem>>, %arg2: memref<128x512xbf16, #tpu.memory_space<vmem>>, %arg3: memref<256x512xbf16, #tpu.memory_space<vmem>>, %arg4: memref<1x512xf32, #tpu.memory_space<vmem>>, %arg5: memref<2x128xf32, #tpu.memory_space<vmem>>, %arg6: memref<2x128xbf16, #tpu.memory_space<vmem>>, %arg7: memref<2x128xf32, #tpu.memory_space<vmem>>, %arg8: memref<2x128xf32, #tpu.memory_space<vmem>>, %arg9: memref<2x128xf32, #tpu.memory_space<vmem>>) attributes {dimension_semantics = [#tpu.dimension_semantics<arbitrary>], iteration_bounds = array<i64: 1>, scalar_prefetch = 0 : i64, scratch_operands = 4 : i64, tpu.core_type = #tpu.core_type<tc>, window_params = [{transform_indices = @transform_0, window_bounds = array<i64: 8, 2, 512>}, {pipeline_mode = #tpu.pipeline_mode<synchronous>, transform_indices = @transform_1, window_bounds = array<i64: 128, 512>}, {pipeline_mode = #tpu.pipeline_mode<synchronous>, transform_indices = @transform_2, window_bounds = array<i64: 256, 512>}, {pipeline_mode = #tpu.pipeline_mode<synchronous>, transform_indices = @transform_3, window_bounds = array<i64: 1, 512>}, {pipeline_mode = #tpu.pipeline_mode<synchronous>, transform_indices = @transform_4, window_bounds = array<i64: 2, 128>}]} {
    %c0_i32 = arith.constant 0 : i32
    %0 = arith.cmpi eq, %arg0, %c0_i32 : i32
    %1 = arith.extui %0 : i1 to i32
    %c0_i32_0 = arith.constant 0 : i32
    %2 = arith.cmpi ne, %1, %c0_i32_0 : i32
    scf.if %2 {
      %cst_104 = arith.constant 0.000000e+00 : bf16
      %507 = vector.broadcast %cst_104 : bf16 to vector<2x128xbf16>
      %c0_105 = arith.constant 0 : index
      %c0_106 = arith.constant 0 : index
      %508 = vector.load %arg6[%c0_105, %c0_106] : memref<2x128xbf16, #tpu.memory_space<vmem>>, vector<2x128xbf16>
      tpu.vector_store %arg6[%c0_105, %c0_106], %507 {strides = array<i32>} : memref<2x128xbf16, #tpu.memory_space<vmem>>, vector<2x128xbf16>,
      %cst_107 = arith.constant 0.000000e+00 : f32
      %509 = vector.broadcast %cst_107 : f32 to vector<2x128xf32>
      %c0_108 = arith.constant 0 : index
      %c0_109 = arith.constant 0 : index
      %510 = vector.load %arg7[%c0_108, %c0_109] : memref<2x128xf32, #tpu.memory_space<vmem>>, vector<2x128xf32>
      tpu.vector_store %arg7[%c0_108, %c0_109], %509 {strides = array<i32>} : memref<2x128xf32, #tpu.memory_space<vmem>>, vector<2x128xf32>,
      %cst_110 = arith.constant 0.000000e+00 : f32
      %511 = vector.broadcast %cst_110 : f32 to vector<2x128xf32>
      %c0_111 = arith.constant 0 : index
      %c0_112 = arith.constant 0 : index
      %512 = vector.load %arg8[%c0_111, %c0_112] : memref<2x128xf32, #tpu.memory_space<vmem>>, vector<2x128xf32>
      tpu.vector_store %arg8[%c0_111, %c0_112], %511 {strides = array<i32>} : memref<2x128xf32, #tpu.memory_space<vmem>>, vector<2x128xf32>,
      %cst_113 = arith.constant 0.000000e+00 : f32
      %513 = vector.broadcast %cst_113 : f32 to vector<2x128xf32>
      %c0_114 = arith.constant 0 : index
      %c0_115 = arith.constant 0 : index
      %514 = vector.load %arg9[%c0_114, %c0_115] : memref<2x128xf32, #tpu.memory_space<vmem>>, vector<2x128xf32>
      tpu.vector_store %arg9[%c0_114, %c0_115], %513 {strides = array<i32>} : memref<2x128xf32, #tpu.memory_space<vmem>>, vector<2x128xf32>,
    } else {
    }
    %c0 = arith.constant 0 : index
    %c0_1 = arith.constant 0 : index
    %3 = vector.load %arg2[%c0, %c0_1] : memref<128x512xbf16, #tpu.memory_space<vmem>>, vector<128x512xbf16>
    %c0_2 = arith.constant 0 : index
    %c0_3 = arith.constant 0 : index
    %4 = vector.load %arg3[%c0_2, %c0_3] : memref<256x512xbf16, #tpu.memory_space<vmem>>, vector<256x512xbf16>
    %c0_4 = arith.constant 0 : index
    %c0_5 = arith.constant 0 : index
    %5 = vector.load %arg4[%c0_4, %c0_5] : memref<1x512xf32, #tpu.memory_space<vmem>>, vector<1x512xf32>
    %6 = vector.shape_cast %5 : vector<1x512xf32> to vector<1x512xf32>
    %7 = vector.broadcast %6 : vector<1x512xf32> to vector<2x512xf32>
    %c0_6 = arith.constant 0 : index
    %c0_7 = arith.constant 0 : index
    %8 = vector.load %arg6[%c0_6, %c0_7] : memref<2x128xbf16, #tpu.memory_space<vmem>>, vector<2x128xbf16>
    %c0_8 = arith.constant 0 : index
    %c0_9 = arith.constant 0 : index
    %9 = vector.load %arg7[%c0_8, %c0_9] : memref<2x128xf32, #tpu.memory_space<vmem>>, vector<2x128xf32>
    %c0_10 = arith.constant 0 : index
    %c0_11 = arith.constant 0 : index
    %10 = vector.load %arg8[%c0_10, %c0_11] : memref<2x128xf32, #tpu.memory_space<vmem>>, vector<2x128xf32>
    %c0_12 = arith.constant 0 : index
    %c0_13 = arith.constant 0 : index
    %11 = vector.load %arg9[%c0_12, %c0_13] : memref<2x128xf32, #tpu.memory_space<vmem>>, vector<2x128xf32>
    %c0_i32_14 = arith.constant 0 : i32
    %12 = arith.index_cast %c0_i32_14 : i32 to index
    %c0_15 = arith.constant 0 : index
    %c0_16 = arith.constant 0 : index
    %13 = vector.load %arg1[%12, %c0_15, %c0_16] : memref<8x2x512xbf16, #tpu.memory_space<vmem>>, vector<1x2x512xbf16>
    %14 = vector.shape_cast %13 : vector<1x2x512xbf16> to vector<2x512xbf16>
    %15 = arith.extf %14 : vector<2x512xbf16> to vector<2x512xf32>
    %cst = arith.constant dense<0.000000e+00> : vector<2x512xf32>
    %16 = tpu.matmul %8, %3, %cst {dimension_numbers = #tpu.dot_dimension_numbers<[1], [0], [0], [1], [0, 0, 1, 1], [], []>} : vector<2x128xbf16>, vector<128x512xbf16>, vector<2x512xf32> -> vector<2x512xf32>
    %17 = arith.addf %15, %16 : vector<2x512xf32>
    %18 = vector.extract_strided_slice %17 {offsets = [0, 0], sizes = [2, 128], strides = [1, 1]} : vector<2x512xf32> to vector<2x128xf32>
    %19 = arith.negf %18 : vector<2x128xf32>
    %20 = math.exp %19 : vector<2x128xf32>
    %cst_17 = arith.constant 1.000000e+00 : f32
    %21 = vector.broadcast %cst_17 : f32 to vector<2x128xf32>
    %22 = arith.addf %21, %20 : vector<2x128xf32>
    %23 = arith.divf %21, %22 : vector<2x128xf32>
    %24 = vector.extract_strided_slice %17 {offsets = [0, 128], sizes = [2, 128], strides = [1, 1]} : vector<2x512xf32> to vector<2x128xf32>
    %25 = arith.negf %24 : vector<2x128xf32>
    %26 = math.exp %25 : vector<2x128xf32>
    %cst_18 = arith.constant 1.000000e+00 : f32
    %27 = vector.broadcast %cst_18 : f32 to vector<2x128xf32>
    %28 = arith.addf %27, %26 : vector<2x128xf32>
    %29 = arith.divf %27, %28 : vector<2x128xf32>
    %30 = vector.extract_strided_slice %17 {offsets = [0, 256], sizes = [2, 128], strides = [1, 1]} : vector<2x512xf32> to vector<2x128xf32>
    %31 = math.tanh %30 : vector<2x128xf32>
    %32 = vector.extract_strided_slice %17 {offsets = [0, 384], sizes = [2, 128], strides = [1, 1]} : vector<2x512xf32> to vector<2x128xf32>
    %33 = arith.negf %32 : vector<2x128xf32>
    %34 = math.exp %33 : vector<2x128xf32>
    %cst_19 = arith.constant 1.000000e+00 : f32
    %35 = vector.broadcast %cst_19 : f32 to vector<2x128xf32>
    %36 = arith.addf %35, %34 : vector<2x128xf32>
    %37 = arith.divf %35, %36 : vector<2x128xf32>
    %38 = arith.mulf %29, %9 : vector<2x128xf32>
    %39 = arith.mulf %23, %31 : vector<2x128xf32>
    %40 = arith.addf %38, %39 : vector<2x128xf32>
    %41 = math.tanh %40 : vector<2x128xf32>
    %42 = arith.mulf %37, %41 : vector<2x128xf32>
    %43 = arith.truncf %42 : vector<2x128xf32> to vector<2x128xbf16>
    %44 = arith.truncf %10 : vector<2x128xf32> to vector<2x128xbf16>
    %45 = tpu.concatenate %43, %44 in 1 : vector<2x128xbf16>, vector<2x128xbf16> -> vector<2x256xbf16>
    %cst_20 = arith.constant dense<0.000000e+00> : vector<2x512xf32>
    %46 = tpu.matmul %45, %4, %cst_20 {dimension_numbers = #tpu.dot_dimension_numbers<[1], [0], [0], [1], [0, 0, 1, 1], [], []>} : vector<2x256xbf16>, vector<256x512xbf16>, vector<2x512xf32> -> vector<2x512xf32>
    %47 = arith.addf %46, %7 : vector<2x512xf32>
    %48 = vector.extract_strided_slice %47 {offsets = [0, 0], sizes = [2, 128], strides = [1, 1]} : vector<2x512xf32> to vector<2x128xf32>
    %49 = arith.negf %48 : vector<2x128xf32>
    %50 = math.exp %49 : vector<2x128xf32>
    %cst_21 = arith.constant 1.000000e+00 : f32
    %51 = vector.broadcast %cst_21 : f32 to vector<2x128xf32>
    %52 = arith.addf %51, %50 : vector<2x128xf32>
    %53 = arith.divf %51, %52 : vector<2x128xf32>
    %54 = vector.extract_strided_slice %47 {offsets = [0, 128], sizes = [2, 128], strides = [1, 1]} : vector<2x512xf32> to vector<2x128xf32>
    %55 = arith.negf %54 : vector<2x128xf32>
    %56 = math.exp %55 : vector<2x128xf32>
    %cst_22 = arith.constant 1.000000e+00 : f32
    %57 = vector.broadcast %cst_22 : f32 to vector<2x128xf32>
    %58 = arith.addf %57, %56 : vector<2x128xf32>
    %59 = arith.divf %57, %58 : vector<2x128xf32>
    %60 = vector.extract_strided_slice %47 {offsets = [0, 256], sizes = [2, 128], strides = [1, 1]} : vector<2x512xf32> to vector<2x128xf32>
    %61 = math.tanh %60 : vector<2x128xf32>
    %62 = vector.extract_strided_slice %47 {offsets = [0, 384], sizes = [2, 128], strides = [1, 1]} : vector<2x512xf32> to vector<2x128xf32>
    %63 = arith.negf %62 : vector<2x128xf32>
    %64 = math.exp %63 : vector<2x128xf32>
    %cst_23 = arith.constant 1.000000e+00 : f32
    %65 = vector.broadcast %cst_23 : f32 to vector<2x128xf32>
    %66 = arith.addf %65, %64 : vector<2x128xf32>
    %67 = arith.divf %65, %66 : vector<2x128xf32>
    %68 = arith.mulf %59, %11 : vector<2x128xf32>
    %69 = arith.mulf %53, %61 : vector<2x128xf32>
    %70 = arith.addf %68, %69 : vector<2x128xf32>
    %71 = math.tanh %70 : vector<2x128xf32>
    %72 = arith.mulf %67, %71 : vector<2x128xf32>
    %c1_i32 = arith.constant 1 : i32
    %73 = arith.index_cast %c1_i32 : i32 to index
    %c0_24 = arith.constant 0 : index
    %c0_25 = arith.constant 0 : index
    %74 = vector.load %arg1[%73, %c0_24, %c0_25] : memref<8x2x512xbf16, #tpu.memory_space<vmem>>, vector<1x2x512xbf16>
    %75 = vector.shape_cast %74 : vector<1x2x512xbf16> to vector<2x512xbf16>
    %76 = arith.extf %75 : vector<2x512xbf16> to vector<2x512xf32>
    %cst_26 = arith.constant dense<0.000000e+00> : vector<2x512xf32>
    %77 = tpu.matmul %43, %3, %cst_26 {dimension_numbers = #tpu.dot_dimension_numbers<[1], [0], [0], [1], [0, 0, 1, 1], [], []>} : vector<2x128xbf16>, vector<128x512xbf16>, vector<2x512xf32> -> vector<2x512xf32>
    %78 = arith.addf %76, %77 : vector<2x512xf32>
    %79 = vector.extract_strided_slice %78 {offsets = [0, 0], sizes = [2, 128], strides = [1, 1]} : vector<2x512xf32> to vector<2x128xf32>
    %80 = arith.negf %79 : vector<2x128xf32>
    %81 = math.exp %80 : vector<2x128xf32>
    %cst_27 = arith.constant 1.000000e+00 : f32
    %82 = vector.broadcast %cst_27 : f32 to vector<2x128xf32>
    %83 = arith.addf %82, %81 : vector<2x128xf32>
    %84 = arith.divf %82, %83 : vector<2x128xf32>
    %85 = vector.extract_strided_slice %78 {offsets = [0, 128], sizes = [2, 128], strides = [1, 1]} : vector<2x512xf32> to vector<2x128xf32>
    %86 = arith.negf %85 : vector<2x128xf32>
    %87 = math.exp %86 : vector<2x128xf32>
    %cst_28 = arith.constant 1.000000e+00 : f32
    %88 = vector.broadcast %cst_28 : f32 to vector<2x128xf32>
    %89 = arith.addf %88, %87 : vector<2x128xf32>
    %90 = arith.divf %88, %89 : vector<2x128xf32>
    %91 = vector.extract_strided_slice %78 {offsets = [0, 256], sizes = [2, 128], strides = [1, 1]} : vector<2x512xf32> to vector<2x128xf32>
    %92 = math.tanh %91 : vector<2x128xf32>
    %93 = vector.extract_strided_slice %78 {offsets = [0, 384], sizes = [2, 128], strides = [1, 1]} : vector<2x512xf32> to vector<2x128xf32>
    %94 = arith.negf %93 : vector<2x128xf32>
    %95 = math.exp %94 : vector<2x128xf32>
    %cst_29 = arith.constant 1.000000e+00 : f32
    %96 = vector.broadcast %cst_29 : f32 to vector<2x128xf32>
    %97 = arith.addf %96, %95 : vector<2x128xf32>
    %98 = arith.divf %96, %97 : vector<2x128xf32>
    %99 = arith.mulf %90, %40 : vector<2x128xf32>
    %100 = arith.mulf %84, %92 : vector<2x128xf32>
    %101 = arith.addf %99, %100 : vector<2x128xf32>
    %102 = math.tanh %101 : vector<2x128xf32>
    %103 = arith.mulf %98, %102 : vector<2x128xf32>
    %104 = arith.truncf %103 : vector<2x128xf32> to vector<2x128xbf16>
    %105 = arith.truncf %72 : vector<2x128xf32> to vector<2x128xbf16>
    %106 = tpu.concatenate %104, %105 in 1 : vector<2x128xbf16>, vector<2x128xbf16> -> vector<2x256xbf16>
    %cst_30 = arith.constant dense<0.000000e+00> : vector<2x512xf32>
    %107 = tpu.matmul %106, %4, %cst_30 {dimension_numbers = #tpu.dot_dimension_numbers<[1], [0], [0], [1], [0, 0, 1, 1], [], []>} : vector<2x256xbf16>, vector<256x512xbf16>, vector<2x512xf32> -> vector<2x512xf32>
    %108 = arith.addf %107, %7 : vector<2x512xf32>
    %109 = vector.extract_strided_slice %108 {offsets = [0, 0], sizes = [2, 128], strides = [1, 1]} : vector<2x512xf32> to vector<2x128xf32>
    %110 = arith.negf %109 : vector<2x128xf32>
    %111 = math.exp %110 : vector<2x128xf32>
    %cst_31 = arith.constant 1.000000e+00 : f32
    %112 = vector.broadcast %cst_31 : f32 to vector<2x128xf32>
    %113 = arith.addf %112, %111 : vector<2x128xf32>
    %114 = arith.divf %112, %113 : vector<2x128xf32>
    %115 = vector.extract_strided_slice %108 {offsets = [0, 128], sizes = [2, 128], strides = [1, 1]} : vector<2x512xf32> to vector<2x128xf32>
    %116 = arith.negf %115 : vector<2x128xf32>
    %117 = math.exp %116 : vector<2x128xf32>
    %cst_32 = arith.constant 1.000000e+00 : f32
    %118 = vector.broadcast %cst_32 : f32 to vector<2x128xf32>
    %119 = arith.addf %118, %117 : vector<2x128xf32>
    %120 = arith.divf %118, %119 : vector<2x128xf32>
    %121 = vector.extract_strided_slice %108 {offsets = [0, 256], sizes = [2, 128], strides = [1, 1]} : vector<2x512xf32> to vector<2x128xf32>
    %122 = math.tanh %121 : vector<2x128xf32>
    %123 = vector.extract_strided_slice %108 {offsets = [0, 384], sizes = [2, 128], strides = [1, 1]} : vector<2x512xf32> to vector<2x128xf32>
    %124 = arith.negf %123 : vector<2x128xf32>
    %125 = math.exp %124 : vector<2x128xf32>
    %cst_33 = arith.constant 1.000000e+00 : f32
    %126 = vector.broadcast %cst_33 : f32 to vector<2x128xf32>
    %127 = arith.addf %126, %125 : vector<2x128xf32>
    %128 = arith.divf %126, %127 : vector<2x128xf32>
    %129 = arith.mulf %120, %70 : vector<2x128xf32>
    %130 = arith.mulf %114, %122 : vector<2x128xf32>
    %131 = arith.addf %129, %130 : vector<2x128xf32>
    %132 = math.tanh %131 : vector<2x128xf32>
    %133 = arith.mulf %128, %132 : vector<2x128xf32>
    %c2_i32 = arith.constant 2 : i32
    %134 = arith.index_cast %c2_i32 : i32 to index
    %c0_34 = arith.constant 0 : index
    %c0_35 = arith.constant 0 : index
    %135 = vector.load %arg1[%134, %c0_34, %c0_35] : memref<8x2x512xbf16, #tpu.memory_space<vmem>>, vector<1x2x512xbf16>
    %136 = vector.shape_cast %135 : vector<1x2x512xbf16> to vector<2x512xbf16>
    %137 = arith.extf %136 : vector<2x512xbf16> to vector<2x512xf32>
    %cst_36 = arith.constant dense<0.000000e+00> : vector<2x512xf32>
    %138 = tpu.matmul %104, %3, %cst_36 {dimension_numbers = #tpu.dot_dimension_numbers<[1], [0], [0], [1], [0, 0, 1, 1], [], []>} : vector<2x128xbf16>, vector<128x512xbf16>, vector<2x512xf32> -> vector<2x512xf32>
    %139 = arith.addf %137, %138 : vector<2x512xf32>
    %140 = vector.extract_strided_slice %139 {offsets = [0, 0], sizes = [2, 128], strides = [1, 1]} : vector<2x512xf32> to vector<2x128xf32>
    %141 = arith.negf %140 : vector<2x128xf32>
    %142 = math.exp %141 : vector<2x128xf32>
    %cst_37 = arith.constant 1.000000e+00 : f32
    %143 = vector.broadcast %cst_37 : f32 to vector<2x128xf32>
    %144 = arith.addf %143, %142 : vector<2x128xf32>
    %145 = arith.divf %143, %144 : vector<2x128xf32>
    %146 = vector.extract_strided_slice %139 {offsets = [0, 128], sizes = [2, 128], strides = [1, 1]} : vector<2x512xf32> to vector<2x128xf32>
    %147 = arith.negf %146 : vector<2x128xf32>
    %148 = math.exp %147 : vector<2x128xf32>
    %cst_38 = arith.constant 1.000000e+00 : f32
    %149 = vector.broadcast %cst_38 : f32 to vector<2x128xf32>
    %150 = arith.addf %149, %148 : vector<2x128xf32>
    %151 = arith.divf %149, %150 : vector<2x128xf32>
    %152 = vector.extract_strided_slice %139 {offsets = [0, 256], sizes = [2, 128], strides = [1, 1]} : vector<2x512xf32> to vector<2x128xf32>
    %153 = math.tanh %152 : vector<2x128xf32>
    %154 = vector.extract_strided_slice %139 {offsets = [0, 384], sizes = [2, 128], strides = [1, 1]} : vector<2x512xf32> to vector<2x128xf32>
    %155 = arith.negf %154 : vector<2x128xf32>
    %156 = math.exp %155 : vector<2x128xf32>
    %cst_39 = arith.constant 1.000000e+00 : f32
    %157 = vector.broadcast %cst_39 : f32 to vector<2x128xf32>
    %158 = arith.addf %157, %156 : vector<2x128xf32>
    %159 = arith.divf %157, %158 : vector<2x128xf32>
    %160 = arith.mulf %151, %101 : vector<2x128xf32>
    %161 = arith.mulf %145, %153 : vector<2x128xf32>
    %162 = arith.addf %160, %161 : vector<2x128xf32>
    %163 = math.tanh %162 : vector<2x128xf32>
    %164 = arith.mulf %159, %163 : vector<2x128xf32>
    %165 = arith.truncf %164 : vector<2x128xf32> to vector<2x128xbf16>
    %166 = arith.truncf %133 : vector<2x128xf32> to vector<2x128xbf16>
    %167 = tpu.concatenate %165, %166 in 1 : vector<2x128xbf16>, vector<2x128xbf16> -> vector<2x256xbf16>
    %cst_40 = arith.constant dense<0.000000e+00> : vector<2x512xf32>
    %168 = tpu.matmul %167, %4, %cst_40 {dimension_numbers = #tpu.dot_dimension_numbers<[1], [0], [0], [1], [0, 0, 1, 1], [], []>} : vector<2x256xbf16>, vector<256x512xbf16>, vector<2x512xf32> -> vector<2x512xf32>
    %169 = arith.addf %168, %7 : vector<2x512xf32>
    %170 = vector.extract_strided_slice %169 {offsets = [0, 0], sizes = [2, 128], strides = [1, 1]} : vector<2x512xf32> to vector<2x128xf32>
    %171 = arith.negf %170 : vector<2x128xf32>
    %172 = math.exp %171 : vector<2x128xf32>
    %cst_41 = arith.constant 1.000000e+00 : f32
    %173 = vector.broadcast %cst_41 : f32 to vector<2x128xf32>
    %174 = arith.addf %173, %172 : vector<2x128xf32>
    %175 = arith.divf %173, %174 : vector<2x128xf32>
    %176 = vector.extract_strided_slice %169 {offsets = [0, 128], sizes = [2, 128], strides = [1, 1]} : vector<2x512xf32> to vector<2x128xf32>
    %177 = arith.negf %176 : vector<2x128xf32>
    %178 = math.exp %177 : vector<2x128xf32>
    %cst_42 = arith.constant 1.000000e+00 : f32
    %179 = vector.broadcast %cst_42 : f32 to vector<2x128xf32>
    %180 = arith.addf %179, %178 : vector<2x128xf32>
    %181 = arith.divf %179, %180 : vector<2x128xf32>
    %182 = vector.extract_strided_slice %169 {offsets = [0, 256], sizes = [2, 128], strides = [1, 1]} : vector<2x512xf32> to vector<2x128xf32>
    %183 = math.tanh %182 : vector<2x128xf32>
    %184 = vector.extract_strided_slice %169 {offsets = [0, 384], sizes = [2, 128], strides = [1, 1]} : vector<2x512xf32> to vector<2x128xf32>
    %185 = arith.negf %184 : vector<2x128xf32>
    %186 = math.exp %185 : vector<2x128xf32>
    %cst_43 = arith.constant 1.000000e+00 : f32
    %187 = vector.broadcast %cst_43 : f32 to vector<2x128xf32>
    %188 = arith.addf %187, %186 : vector<2x128xf32>
    %189 = arith.divf %187, %188 : vector<2x128xf32>
    %190 = arith.mulf %181, %131 : vector<2x128xf32>
    %191 = arith.mulf %175, %183 : vector<2x128xf32>
    %192 = arith.addf %190, %191 : vector<2x128xf32>
    %193 = math.tanh %192 : vector<2x128xf32>
    %194 = arith.mulf %189, %193 : vector<2x128xf32>
    %c3_i32 = arith.constant 3 : i32
    %195 = arith.index_cast %c3_i32 : i32 to index
    %c0_44 = arith.constant 0 : index
    %c0_45 = arith.constant 0 : index
    %196 = vector.load %arg1[%195, %c0_44, %c0_45] : memref<8x2x512xbf16, #tpu.memory_space<vmem>>, vector<1x2x512xbf16>
    %197 = vector.shape_cast %196 : vector<1x2x512xbf16> to vector<2x512xbf16>
    %198 = arith.extf %197 : vector<2x512xbf16> to vector<2x512xf32>
    %cst_46 = arith.constant dense<0.000000e+00> : vector<2x512xf32>
    %199 = tpu.matmul %165, %3, %cst_46 {dimension_numbers = #tpu.dot_dimension_numbers<[1], [0], [0], [1], [0, 0, 1, 1], [], []>} : vector<2x128xbf16>, vector<128x512xbf16>, vector<2x512xf32> -> vector<2x512xf32>
    %200 = arith.addf %198, %199 : vector<2x512xf32>
    %201 = vector.extract_strided_slice %200 {offsets = [0, 0], sizes = [2, 128], strides = [1, 1]} : vector<2x512xf32> to vector<2x128xf32>
    %202 = arith.negf %201 : vector<2x128xf32>
    %203 = math.exp %202 : vector<2x128xf32>
    %cst_47 = arith.constant 1.000000e+00 : f32
    %204 = vector.broadcast %cst_47 : f32 to vector<2x128xf32>
    %205 = arith.addf %204, %203 : vector<2x128xf32>
    %206 = arith.divf %204, %205 : vector<2x128xf32>
    %207 = vector.extract_strided_slice %200 {offsets = [0, 128], sizes = [2, 128], strides = [1, 1]} : vector<2x512xf32> to vector<2x128xf32>
    %208 = arith.negf %207 : vector<2x128xf32>
    %209 = math.exp %208 : vector<2x128xf32>
    %cst_48 = arith.constant 1.000000e+00 : f32
    %210 = vector.broadcast %cst_48 : f32 to vector<2x128xf32>
    %211 = arith.addf %210, %209 : vector<2x128xf32>
    %212 = arith.divf %210, %211 : vector<2x128xf32>
    %213 = vector.extract_strided_slice %200 {offsets = [0, 256], sizes = [2, 128], strides = [1, 1]} : vector<2x512xf32> to vector<2x128xf32>
    %214 = math.tanh %213 : vector<2x128xf32>
    %215 = vector.extract_strided_slice %200 {offsets = [0, 384], sizes = [2, 128], strides = [1, 1]} : vector<2x512xf32> to vector<2x128xf32>
    %216 = arith.negf %215 : vector<2x128xf32>
    %217 = math.exp %216 : vector<2x128xf32>
    %cst_49 = arith.constant 1.000000e+00 : f32
    %218 = vector.broadcast %cst_49 : f32 to vector<2x128xf32>
    %219 = arith.addf %218, %217 : vector<2x128xf32>
    %220 = arith.divf %218, %219 : vector<2x128xf32>
    %221 = arith.mulf %212, %162 : vector<2x128xf32>
    %222 = arith.mulf %206, %214 : vector<2x128xf32>
    %223 = arith.addf %221, %222 : vector<2x128xf32>
    %224 = math.tanh %223 : vector<2x128xf32>
    %225 = arith.mulf %220, %224 : vector<2x128xf32>
    %226 = arith.truncf %225 : vector<2x128xf32> to vector<2x128xbf16>
    %227 = arith.truncf %194 : vector<2x128xf32> to vector<2x128xbf16>
    %228 = tpu.concatenate %226, %227 in 1 : vector<2x128xbf16>, vector<2x128xbf16> -> vector<2x256xbf16>
    %cst_50 = arith.constant dense<0.000000e+00> : vector<2x512xf32>
    %229 = tpu.matmul %228, %4, %cst_50 {dimension_numbers = #tpu.dot_dimension_numbers<[1], [0], [0], [1], [0, 0, 1, 1], [], []>} : vector<2x256xbf16>, vector<256x512xbf16>, vector<2x512xf32> -> vector<2x512xf32>
    %230 = arith.addf %229, %7 : vector<2x512xf32>
    %231 = vector.extract_strided_slice %230 {offsets = [0, 0], sizes = [2, 128], strides = [1, 1]} : vector<2x512xf32> to vector<2x128xf32>
    %232 = arith.negf %231 : vector<2x128xf32>
    %233 = math.exp %232 : vector<2x128xf32>
    %cst_51 = arith.constant 1.000000e+00 : f32
    %234 = vector.broadcast %cst_51 : f32 to vector<2x128xf32>
    %235 = arith.addf %234, %233 : vector<2x128xf32>
    %236 = arith.divf %234, %235 : vector<2x128xf32>
    %237 = vector.extract_strided_slice %230 {offsets = [0, 128], sizes = [2, 128], strides = [1, 1]} : vector<2x512xf32> to vector<2x128xf32>
    %238 = arith.negf %237 : vector<2x128xf32>
    %239 = math.exp %238 : vector<2x128xf32>
    %cst_52 = arith.constant 1.000000e+00 : f32
    %240 = vector.broadcast %cst_52 : f32 to vector<2x128xf32>
    %241 = arith.addf %240, %239 : vector<2x128xf32>
    %242 = arith.divf %240, %241 : vector<2x128xf32>
    %243 = vector.extract_strided_slice %230 {offsets = [0, 256], sizes = [2, 128], strides = [1, 1]} : vector<2x512xf32> to vector<2x128xf32>
    %244 = math.tanh %243 : vector<2x128xf32>
    %245 = vector.extract_strided_slice %230 {offsets = [0, 384], sizes = [2, 128], strides = [1, 1]} : vector<2x512xf32> to vector<2x128xf32>
    %246 = arith.negf %245 : vector<2x128xf32>
    %247 = math.exp %246 : vector<2x128xf32>
    %cst_53 = arith.constant 1.000000e+00 : f32
    %248 = vector.broadcast %cst_53 : f32 to vector<2x128xf32>
    %249 = arith.addf %248, %247 : vector<2x128xf32>
    %250 = arith.divf %248, %249 : vector<2x128xf32>
    %251 = arith.mulf %242, %192 : vector<2x128xf32>
    %252 = arith.mulf %236, %244 : vector<2x128xf32>
    %253 = arith.addf %251, %252 : vector<2x128xf32>
    %254 = math.tanh %253 : vector<2x128xf32>
    %255 = arith.mulf %250, %254 : vector<2x128xf32>
    %c4_i32 = arith.constant 4 : i32
    %256 = arith.index_cast %c4_i32 : i32 to index
    %c0_54 = arith.constant 0 : index
    %c0_55 = arith.constant 0 : index
    %257 = vector.load %arg1[%256, %c0_54, %c0_55] : memref<8x2x512xbf16, #tpu.memory_space<vmem>>, vector<1x2x512xbf16>
    %258 = vector.shape_cast %257 : vector<1x2x512xbf16> to vector<2x512xbf16>
    %259 = arith.extf %258 : vector<2x512xbf16> to vector<2x512xf32>
    %cst_56 = arith.constant dense<0.000000e+00> : vector<2x512xf32>
    %260 = tpu.matmul %226, %3, %cst_56 {dimension_numbers = #tpu.dot_dimension_numbers<[1], [0], [0], [1], [0, 0, 1, 1], [], []>} : vector<2x128xbf16>, vector<128x512xbf16>, vector<2x512xf32> -> vector<2x512xf32>
    %261 = arith.addf %259, %260 : vector<2x512xf32>
    %262 = vector.extract_strided_slice %261 {offsets = [0, 0], sizes = [2, 128], strides = [1, 1]} : vector<2x512xf32> to vector<2x128xf32>
    %263 = arith.negf %262 : vector<2x128xf32>
    %264 = math.exp %263 : vector<2x128xf32>
    %cst_57 = arith.constant 1.000000e+00 : f32
    %265 = vector.broadcast %cst_57 : f32 to vector<2x128xf32>
    %266 = arith.addf %265, %264 : vector<2x128xf32>
    %267 = arith.divf %265, %266 : vector<2x128xf32>
    %268 = vector.extract_strided_slice %261 {offsets = [0, 128], sizes = [2, 128], strides = [1, 1]} : vector<2x512xf32> to vector<2x128xf32>
    %269 = arith.negf %268 : vector<2x128xf32>
    %270 = math.exp %269 : vector<2x128xf32>
    %cst_58 = arith.constant 1.000000e+00 : f32
    %271 = vector.broadcast %cst_58 : f32 to vector<2x128xf32>
    %272 = arith.addf %271, %270 : vector<2x128xf32>
    %273 = arith.divf %271, %272 : vector<2x128xf32>
    %274 = vector.extract_strided_slice %261 {offsets = [0, 256], sizes = [2, 128], strides = [1, 1]} : vector<2x512xf32> to vector<2x128xf32>
    %275 = math.tanh %274 : vector<2x128xf32>
    %276 = vector.extract_strided_slice %261 {offsets = [0, 384], sizes = [2, 128], strides = [1, 1]} : vector<2x512xf32> to vector<2x128xf32>
    %277 = arith.negf %276 : vector<2x128xf32>
    %278 = math.exp %277 : vector<2x128xf32>
    %cst_59 = arith.constant 1.000000e+00 : f32
    %279 = vector.broadcast %cst_59 : f32 to vector<2x128xf32>
    %280 = arith.addf %279, %278 : vector<2x128xf32>
    %281 = arith.divf %279, %280 : vector<2x128xf32>
    %282 = arith.mulf %273, %223 : vector<2x128xf32>
    %283 = arith.mulf %267, %275 : vector<2x128xf32>
    %284 = arith.addf %282, %283 : vector<2x128xf32>
    %285 = math.tanh %284 : vector<2x128xf32>
    %286 = arith.mulf %281, %285 : vector<2x128xf32>
    %287 = arith.truncf %286 : vector<2x128xf32> to vector<2x128xbf16>
    %288 = arith.truncf %255 : vector<2x128xf32> to vector<2x128xbf16>
    %289 = tpu.concatenate %287, %288 in 1 : vector<2x128xbf16>, vector<2x128xbf16> -> vector<2x256xbf16>
    %cst_60 = arith.constant dense<0.000000e+00> : vector<2x512xf32>
    %290 = tpu.matmul %289, %4, %cst_60 {dimension_numbers = #tpu.dot_dimension_numbers<[1], [0], [0], [1], [0, 0, 1, 1], [], []>} : vector<2x256xbf16>, vector<256x512xbf16>, vector<2x512xf32> -> vector<2x512xf32>
    %291 = arith.addf %290, %7 : vector<2x512xf32>
    %292 = vector.extract_strided_slice %291 {offsets = [0, 0], sizes = [2, 128], strides = [1, 1]} : vector<2x512xf32> to vector<2x128xf32>
    %293 = arith.negf %292 : vector<2x128xf32>
    %294 = math.exp %293 : vector<2x128xf32>
    %cst_61 = arith.constant 1.000000e+00 : f32
    %295 = vector.broadcast %cst_61 : f32 to vector<2x128xf32>
    %296 = arith.addf %295, %294 : vector<2x128xf32>
    %297 = arith.divf %295, %296 : vector<2x128xf32>
    %298 = vector.extract_strided_slice %291 {offsets = [0, 128], sizes = [2, 128], strides = [1, 1]} : vector<2x512xf32> to vector<2x128xf32>
    %299 = arith.negf %298 : vector<2x128xf32>
    %300 = math.exp %299 : vector<2x128xf32>
    %cst_62 = arith.constant 1.000000e+00 : f32
    %301 = vector.broadcast %cst_62 : f32 to vector<2x128xf32>
    %302 = arith.addf %301, %300 : vector<2x128xf32>
    %303 = arith.divf %301, %302 : vector<2x128xf32>
    %304 = vector.extract_strided_slice %291 {offsets = [0, 256], sizes = [2, 128], strides = [1, 1]} : vector<2x512xf32> to vector<2x128xf32>
    %305 = math.tanh %304 : vector<2x128xf32>
    %306 = vector.extract_strided_slice %291 {offsets = [0, 384], sizes = [2, 128], strides = [1, 1]} : vector<2x512xf32> to vector<2x128xf32>
    %307 = arith.negf %306 : vector<2x128xf32>
    %308 = math.exp %307 : vector<2x128xf32>
    %cst_63 = arith.constant 1.000000e+00 : f32
    %309 = vector.broadcast %cst_63 : f32 to vector<2x128xf32>
    %310 = arith.addf %309, %308 : vector<2x128xf32>
    %311 = arith.divf %309, %310 : vector<2x128xf32>
    %312 = arith.mulf %303, %253 : vector<2x128xf32>
    %313 = arith.mulf %297, %305 : vector<2x128xf32>
    %314 = arith.addf %312, %313 : vector<2x128xf32>
    %315 = math.tanh %314 : vector<2x128xf32>
    %316 = arith.mulf %311, %315 : vector<2x128xf32>
    %c5_i32 = arith.constant 5 : i32
    %317 = arith.index_cast %c5_i32 : i32 to index
    %c0_64 = arith.constant 0 : index
    %c0_65 = arith.constant 0 : index
    %318 = vector.load %arg1[%317, %c0_64, %c0_65] : memref<8x2x512xbf16, #tpu.memory_space<vmem>>, vector<1x2x512xbf16>
    %319 = vector.shape_cast %318 : vector<1x2x512xbf16> to vector<2x512xbf16>
    %320 = arith.extf %319 : vector<2x512xbf16> to vector<2x512xf32>
    %cst_66 = arith.constant dense<0.000000e+00> : vector<2x512xf32>
    %321 = tpu.matmul %287, %3, %cst_66 {dimension_numbers = #tpu.dot_dimension_numbers<[1], [0], [0], [1], [0, 0, 1, 1], [], []>} : vector<2x128xbf16>, vector<128x512xbf16>, vector<2x512xf32> -> vector<2x512xf32>
    %322 = arith.addf %320, %321 : vector<2x512xf32>
    %323 = vector.extract_strided_slice %322 {offsets = [0, 0], sizes = [2, 128], strides = [1, 1]} : vector<2x512xf32> to vector<2x128xf32>
    %324 = arith.negf %323 : vector<2x128xf32>
    %325 = math.exp %324 : vector<2x128xf32>
    %cst_67 = arith.constant 1.000000e+00 : f32
    %326 = vector.broadcast %cst_67 : f32 to vector<2x128xf32>
    %327 = arith.addf %326, %325 : vector<2x128xf32>
    %328 = arith.divf %326, %327 : vector<2x128xf32>
    %329 = vector.extract_strided_slice %322 {offsets = [0, 128], sizes = [2, 128], strides = [1, 1]} : vector<2x512xf32> to vector<2x128xf32>
    %330 = arith.negf %329 : vector<2x128xf32>
    %331 = math.exp %330 : vector<2x128xf32>
    %cst_68 = arith.constant 1.000000e+00 : f32
    %332 = vector.broadcast %cst_68 : f32 to vector<2x128xf32>
    %333 = arith.addf %332, %331 : vector<2x128xf32>
    %334 = arith.divf %332, %333 : vector<2x128xf32>
    %335 = vector.extract_strided_slice %322 {offsets = [0, 256], sizes = [2, 128], strides = [1, 1]} : vector<2x512xf32> to vector<2x128xf32>
    %336 = math.tanh %335 : vector<2x128xf32>
    %337 = vector.extract_strided_slice %322 {offsets = [0, 384], sizes = [2, 128], strides = [1, 1]} : vector<2x512xf32> to vector<2x128xf32>
    %338 = arith.negf %337 : vector<2x128xf32>
    %339 = math.exp %338 : vector<2x128xf32>
    %cst_69 = arith.constant 1.000000e+00 : f32
    %340 = vector.broadcast %cst_69 : f32 to vector<2x128xf32>
    %341 = arith.addf %340, %339 : vector<2x128xf32>
    %342 = arith.divf %340, %341 : vector<2x128xf32>
    %343 = arith.mulf %334, %284 : vector<2x128xf32>
    %344 = arith.mulf %328, %336 : vector<2x128xf32>
    %345 = arith.addf %343, %344 : vector<2x128xf32>
    %346 = math.tanh %345 : vector<2x128xf32>
    %347 = arith.mulf %342, %346 : vector<2x128xf32>
    %348 = arith.truncf %347 : vector<2x128xf32> to vector<2x128xbf16>
    %349 = arith.truncf %316 : vector<2x128xf32> to vector<2x128xbf16>
    %350 = tpu.concatenate %348, %349 in 1 : vector<2x128xbf16>, vector<2x128xbf16> -> vector<2x256xbf16>
    %cst_70 = arith.constant dense<0.000000e+00> : vector<2x512xf32>
    %351 = tpu.matmul %350, %4, %cst_70 {dimension_numbers = #tpu.dot_dimension_numbers<[1], [0], [0], [1], [0, 0, 1, 1], [], []>} : vector<2x256xbf16>, vector<256x512xbf16>, vector<2x512xf32> -> vector<2x512xf32>
    %352 = arith.addf %351, %7 : vector<2x512xf32>
    %353 = vector.extract_strided_slice %352 {offsets = [0, 0], sizes = [2, 128], strides = [1, 1]} : vector<2x512xf32> to vector<2x128xf32>
    %354 = arith.negf %353 : vector<2x128xf32>
    %355 = math.exp %354 : vector<2x128xf32>
    %cst_71 = arith.constant 1.000000e+00 : f32
    %356 = vector.broadcast %cst_71 : f32 to vector<2x128xf32>
    %357 = arith.addf %356, %355 : vector<2x128xf32>
    %358 = arith.divf %356, %357 : vector<2x128xf32>
    %359 = vector.extract_strided_slice %352 {offsets = [0, 128], sizes = [2, 128], strides = [1, 1]} : vector<2x512xf32> to vector<2x128xf32>
    %360 = arith.negf %359 : vector<2x128xf32>
    %361 = math.exp %360 : vector<2x128xf32>
    %cst_72 = arith.constant 1.000000e+00 : f32
    %362 = vector.broadcast %cst_72 : f32 to vector<2x128xf32>
    %363 = arith.addf %362, %361 : vector<2x128xf32>
    %364 = arith.divf %362, %363 : vector<2x128xf32>
    %365 = vector.extract_strided_slice %352 {offsets = [0, 256], sizes = [2, 128], strides = [1, 1]} : vector<2x512xf32> to vector<2x128xf32>
    %366 = math.tanh %365 : vector<2x128xf32>
    %367 = vector.extract_strided_slice %352 {offsets = [0, 384], sizes = [2, 128], strides = [1, 1]} : vector<2x512xf32> to vector<2x128xf32>
    %368 = arith.negf %367 : vector<2x128xf32>
    %369 = math.exp %368 : vector<2x128xf32>
    %cst_73 = arith.constant 1.000000e+00 : f32
    %370 = vector.broadcast %cst_73 : f32 to vector<2x128xf32>
    %371 = arith.addf %370, %369 : vector<2x128xf32>
    %372 = arith.divf %370, %371 : vector<2x128xf32>
    %373 = arith.mulf %364, %314 : vector<2x128xf32>
    %374 = arith.mulf %358, %366 : vector<2x128xf32>
    %375 = arith.addf %373, %374 : vector<2x128xf32>
    %376 = math.tanh %375 : vector<2x128xf32>
    %377 = arith.mulf %372, %376 : vector<2x128xf32>
    %c6_i32 = arith.constant 6 : i32
    %378 = arith.index_cast %c6_i32 : i32 to index
    %c0_74 = arith.constant 0 : index
    %c0_75 = arith.constant 0 : index
    %379 = vector.load %arg1[%378, %c0_74, %c0_75] : memref<8x2x512xbf16, #tpu.memory_space<vmem>>, vector<1x2x512xbf16>
    %380 = vector.shape_cast %379 : vector<1x2x512xbf16> to vector<2x512xbf16>
    %381 = arith.extf %380 : vector<2x512xbf16> to vector<2x512xf32>
    %cst_76 = arith.constant dense<0.000000e+00> : vector<2x512xf32>
    %382 = tpu.matmul %348, %3, %cst_76 {dimension_numbers = #tpu.dot_dimension_numbers<[1], [0], [0], [1], [0, 0, 1, 1], [], []>} : vector<2x128xbf16>, vector<128x512xbf16>, vector<2x512xf32> -> vector<2x512xf32>
    %383 = arith.addf %381, %382 : vector<2x512xf32>
    %384 = vector.extract_strided_slice %383 {offsets = [0, 0], sizes = [2, 128], strides = [1, 1]} : vector<2x512xf32> to vector<2x128xf32>
    %385 = arith.negf %384 : vector<2x128xf32>
    %386 = math.exp %385 : vector<2x128xf32>
    %cst_77 = arith.constant 1.000000e+00 : f32
    %387 = vector.broadcast %cst_77 : f32 to vector<2x128xf32>
    %388 = arith.addf %387, %386 : vector<2x128xf32>
    %389 = arith.divf %387, %388 : vector<2x128xf32>
    %390 = vector.extract_strided_slice %383 {offsets = [0, 128], sizes = [2, 128], strides = [1, 1]} : vector<2x512xf32> to vector<2x128xf32>
    %391 = arith.negf %390 : vector<2x128xf32>
    %392 = math.exp %391 : vector<2x128xf32>
    %cst_78 = arith.constant 1.000000e+00 : f32
    %393 = vector.broadcast %cst_78 : f32 to vector<2x128xf32>
    %394 = arith.addf %393, %392 : vector<2x128xf32>
    %395 = arith.divf %393, %394 : vector<2x128xf32>
    %396 = vector.extract_strided_slice %383 {offsets = [0, 256], sizes = [2, 128], strides = [1, 1]} : vector<2x512xf32> to vector<2x128xf32>
    %397 = math.tanh %396 : vector<2x128xf32>
    %398 = vector.extract_strided_slice %383 {offsets = [0, 384], sizes = [2, 128], strides = [1, 1]} : vector<2x512xf32> to vector<2x128xf32>
    %399 = arith.negf %398 : vector<2x128xf32>
    %400 = math.exp %399 : vector<2x128xf32>
    %cst_79 = arith.constant 1.000000e+00 : f32
    %401 = vector.broadcast %cst_79 : f32 to vector<2x128xf32>
    %402 = arith.addf %401, %400 : vector<2x128xf32>
    %403 = arith.divf %401, %402 : vector<2x128xf32>
    %404 = arith.mulf %395, %345 : vector<2x128xf32>
    %405 = arith.mulf %389, %397 : vector<2x128xf32>
    %406 = arith.addf %404, %405 : vector<2x128xf32>
    %407 = math.tanh %406 : vector<2x128xf32>
    %408 = arith.mulf %403, %407 : vector<2x128xf32>
    %409 = arith.truncf %408 : vector<2x128xf32> to vector<2x128xbf16>
    %410 = arith.truncf %377 : vector<2x128xf32> to vector<2x128xbf16>
    %411 = tpu.concatenate %409, %410 in 1 : vector<2x128xbf16>, vector<2x128xbf16> -> vector<2x256xbf16>
    %cst_80 = arith.constant dense<0.000000e+00> : vector<2x512xf32>
    %412 = tpu.matmul %411, %4, %cst_80 {dimension_numbers = #tpu.dot_dimension_numbers<[1], [0], [0], [1], [0, 0, 1, 1], [], []>} : vector<2x256xbf16>, vector<256x512xbf16>, vector<2x512xf32> -> vector<2x512xf32>
    %413 = arith.addf %412, %7 : vector<2x512xf32>
    %414 = vector.extract_strided_slice %413 {offsets = [0, 0], sizes = [2, 128], strides = [1, 1]} : vector<2x512xf32> to vector<2x128xf32>
    %415 = arith.negf %414 : vector<2x128xf32>
    %416 = math.exp %415 : vector<2x128xf32>
    %cst_81 = arith.constant 1.000000e+00 : f32
    %417 = vector.broadcast %cst_81 : f32 to vector<2x128xf32>
    %418 = arith.addf %417, %416 : vector<2x128xf32>
    %419 = arith.divf %417, %418 : vector<2x128xf32>
    %420 = vector.extract_strided_slice %413 {offsets = [0, 128], sizes = [2, 128], strides = [1, 1]} : vector<2x512xf32> to vector<2x128xf32>
    %421 = arith.negf %420 : vector<2x128xf32>
    %422 = math.exp %421 : vector<2x128xf32>
    %cst_82 = arith.constant 1.000000e+00 : f32
    %423 = vector.broadcast %cst_82 : f32 to vector<2x128xf32>
    %424 = arith.addf %423, %422 : vector<2x128xf32>
    %425 = arith.divf %423, %424 : vector<2x128xf32>
    %426 = vector.extract_strided_slice %413 {offsets = [0, 256], sizes = [2, 128], strides = [1, 1]} : vector<2x512xf32> to vector<2x128xf32>
    %427 = math.tanh %426 : vector<2x128xf32>
    %428 = vector.extract_strided_slice %413 {offsets = [0, 384], sizes = [2, 128], strides = [1, 1]} : vector<2x512xf32> to vector<2x128xf32>
    %429 = arith.negf %428 : vector<2x128xf32>
    %430 = math.exp %429 : vector<2x128xf32>
    %cst_83 = arith.constant 1.000000e+00 : f32
    %431 = vector.broadcast %cst_83 : f32 to vector<2x128xf32>
    %432 = arith.addf %431, %430 : vector<2x128xf32>
    %433 = arith.divf %431, %432 : vector<2x128xf32>
    %434 = arith.mulf %425, %375 : vector<2x128xf32>
    %435 = arith.mulf %419, %427 : vector<2x128xf32>
    %436 = arith.addf %434, %435 : vector<2x128xf32>
    %437 = math.tanh %436 : vector<2x128xf32>
    %438 = arith.mulf %433, %437 : vector<2x128xf32>
    %c7_i32 = arith.constant 7 : i32
    %439 = arith.index_cast %c7_i32 : i32 to index
    %c0_84 = arith.constant 0 : index
    %c0_85 = arith.constant 0 : index
    %440 = vector.load %arg1[%439, %c0_84, %c0_85] : memref<8x2x512xbf16, #tpu.memory_space<vmem>>, vector<1x2x512xbf16>
    %441 = vector.shape_cast %440 : vector<1x2x512xbf16> to vector<2x512xbf16>
    %442 = arith.extf %441 : vector<2x512xbf16> to vector<2x512xf32>
    %cst_86 = arith.constant dense<0.000000e+00> : vector<2x512xf32>
    %443 = tpu.matmul %409, %3, %cst_86 {dimension_numbers = #tpu.dot_dimension_numbers<[1], [0], [0], [1], [0, 0, 1, 1], [], []>} : vector<2x128xbf16>, vector<128x512xbf16>, vector<2x512xf32> -> vector<2x512xf32>
    %444 = arith.addf %442, %443 : vector<2x512xf32>
    %445 = vector.extract_strided_slice %444 {offsets = [0, 0], sizes = [2, 128], strides = [1, 1]} : vector<2x512xf32> to vector<2x128xf32>
    %446 = arith.negf %445 : vector<2x128xf32>
    %447 = math.exp %446 : vector<2x128xf32>
    %cst_87 = arith.constant 1.000000e+00 : f32
    %448 = vector.broadcast %cst_87 : f32 to vector<2x128xf32>
    %449 = arith.addf %448, %447 : vector<2x128xf32>
    %450 = arith.divf %448, %449 : vector<2x128xf32>
    %451 = vector.extract_strided_slice %444 {offsets = [0, 128], sizes = [2, 128], strides = [1, 1]} : vector<2x512xf32> to vector<2x128xf32>
    %452 = arith.negf %451 : vector<2x128xf32>
    %453 = math.exp %452 : vector<2x128xf32>
    %cst_88 = arith.constant 1.000000e+00 : f32
    %454 = vector.broadcast %cst_88 : f32 to vector<2x128xf32>
    %455 = arith.addf %454, %453 : vector<2x128xf32>
    %456 = arith.divf %454, %455 : vector<2x128xf32>
    %457 = vector.extract_strided_slice %444 {offsets = [0, 256], sizes = [2, 128], strides = [1, 1]} : vector<2x512xf32> to vector<2x128xf32>
    %458 = math.tanh %457 : vector<2x128xf32>
    %459 = vector.extract_strided_slice %444 {offsets = [0, 384], sizes = [2, 128], strides = [1, 1]} : vector<2x512xf32> to vector<2x128xf32>
    %460 = arith.negf %459 : vector<2x128xf32>
    %461 = math.exp %460 : vector<2x128xf32>
    %cst_89 = arith.constant 1.000000e+00 : f32
    %462 = vector.broadcast %cst_89 : f32 to vector<2x128xf32>
    %463 = arith.addf %462, %461 : vector<2x128xf32>
    %464 = arith.divf %462, %463 : vector<2x128xf32>
    %465 = arith.mulf %456, %406 : vector<2x128xf32>
    %466 = arith.mulf %450, %458 : vector<2x128xf32>
    %467 = arith.addf %465, %466 : vector<2x128xf32>
    %468 = math.tanh %467 : vector<2x128xf32>
    %469 = arith.mulf %464, %468 : vector<2x128xf32>
    %470 = arith.truncf %469 : vector<2x128xf32> to vector<2x128xbf16>
    %471 = arith.truncf %438 : vector<2x128xf32> to vector<2x128xbf16>
    %472 = tpu.concatenate %470, %471 in 1 : vector<2x128xbf16>, vector<2x128xbf16> -> vector<2x256xbf16>
    %cst_90 = arith.constant dense<0.000000e+00> : vector<2x512xf32>
    %473 = tpu.matmul %472, %4, %cst_90 {dimension_numbers = #tpu.dot_dimension_numbers<[1], [0], [0], [1], [0, 0, 1, 1], [], []>} : vector<2x256xbf16>, vector<256x512xbf16>, vector<2x512xf32> -> vector<2x512xf32>
    %474 = arith.addf %473, %7 : vector<2x512xf32>
    %475 = vector.extract_strided_slice %474 {offsets = [0, 0], sizes = [2, 128], strides = [1, 1]} : vector<2x512xf32> to vector<2x128xf32>
    %476 = arith.negf %475 : vector<2x128xf32>
    %477 = math.exp %476 : vector<2x128xf32>
    %cst_91 = arith.constant 1.000000e+00 : f32
    %478 = vector.broadcast %cst_91 : f32 to vector<2x128xf32>
    %479 = arith.addf %478, %477 : vector<2x128xf32>
    %480 = arith.divf %478, %479 : vector<2x128xf32>
    %481 = vector.extract_strided_slice %474 {offsets = [0, 128], sizes = [2, 128], strides = [1, 1]} : vector<2x512xf32> to vector<2x128xf32>
    %482 = arith.negf %481 : vector<2x128xf32>
    %483 = math.exp %482 : vector<2x128xf32>
    %cst_92 = arith.constant 1.000000e+00 : f32
    %484 = vector.broadcast %cst_92 : f32 to vector<2x128xf32>
    %485 = arith.addf %484, %483 : vector<2x128xf32>
    %486 = arith.divf %484, %485 : vector<2x128xf32>
    %487 = vector.extract_strided_slice %474 {offsets = [0, 256], sizes = [2, 128], strides = [1, 1]} : vector<2x512xf32> to vector<2x128xf32>
    %488 = math.tanh %487 : vector<2x128xf32>
    %489 = vector.extract_strided_slice %474 {offsets = [0, 384], sizes = [2, 128], strides = [1, 1]} : vector<2x512xf32> to vector<2x128xf32>
    %490 = arith.negf %489 : vector<2x128xf32>
    %491 = math.exp %490 : vector<2x128xf32>
    %cst_93 = arith.constant 1.000000e+00 : f32
    %492 = vector.broadcast %cst_93 : f32 to vector<2x128xf32>
    %493 = arith.addf %492, %491 : vector<2x128xf32>
    %494 = arith.divf %492, %493 : vector<2x128xf32>
    %495 = arith.mulf %486, %436 : vector<2x128xf32>
    %496 = arith.mulf %480, %488 : vector<2x128xf32>
    %497 = arith.addf %495, %496 : vector<2x128xf32>
    %498 = math.tanh %497 : vector<2x128xf32>
    %499 = arith.mulf %494, %498 : vector<2x128xf32>
    %c8_i32 = arith.constant 8 : i32
    %c0_94 = arith.constant 0 : index
    %c0_95 = arith.constant 0 : index
    %500 = vector.load %arg6[%c0_94, %c0_95] : memref<2x128xbf16, #tpu.memory_space<vmem>>, vector<2x128xbf16>
    tpu.vector_store %arg6[%c0_94, %c0_95], %470 {strides = array<i32>} : memref<2x128xbf16, #tpu.memory_space<vmem>>, vector<2x128xbf16>,
    %c0_96 = arith.constant 0 : index
    %c0_97 = arith.constant 0 : index
    %501 = vector.load %arg7[%c0_96, %c0_97] : memref<2x128xf32, #tpu.memory_space<vmem>>, vector<2x128xf32>
    tpu.vector_store %arg7[%c0_96, %c0_97], %467 {strides = array<i32>} : memref<2x128xf32, #tpu.memory_space<vmem>>, vector<2x128xf32>,
    %c0_98 = arith.constant 0 : index
    %c0_99 = arith.constant 0 : index
    %502 = vector.load %arg8[%c0_98, %c0_99] : memref<2x128xf32, #tpu.memory_space<vmem>>, vector<2x128xf32>
    tpu.vector_store %arg8[%c0_98, %c0_99], %499 {strides = array<i32>} : memref<2x128xf32, #tpu.memory_space<vmem>>, vector<2x128xf32>,
    %c0_100 = arith.constant 0 : index
    %c0_101 = arith.constant 0 : index
    %503 = vector.load %arg9[%c0_100, %c0_101] : memref<2x128xf32, #tpu.memory_space<vmem>>, vector<2x128xf32>
    tpu.vector_store %arg9[%c0_100, %c0_101], %497 {strides = array<i32>} : memref<2x128xf32, #tpu.memory_space<vmem>>, vector<2x128xf32>,
    %c0_i32_102 = arith.constant 0 : i32
    %504 = arith.cmpi eq, %arg0, %c0_i32_102 : i32
    %505 = arith.extui %504 : i1 to i32
    %c0_i32_103 = arith.constant 0 : i32
    %506 = arith.cmpi ne, %505, %c0_i32_103 : i32
    scf.if %506 {
      %c0_104 = arith.constant 0 : index
      %c0_105 = arith.constant 0 : index
      %507 = vector.load %arg5[%c0_104, %c0_105] : memref<2x128xf32, #tpu.memory_space<vmem>>, vector<2x128xf32>
      tpu.vector_store %arg5[%c0_104, %c0_105], %499 {strides = array<i32>} : memref<2x128xf32, #tpu.memory_space<vmem>>, vector<2x128xf32>,
    } else {
    }
    return
  }
  func.func @transform_0(%arg0: i32) -> (i32, i32, i32) {
    %c0_i32 = arith.constant 0 : i32
    %c0_i32_0 = arith.constant 0 : i32
    %c0_i32_1 = arith.constant 0 : i32
    return %arg0, %c0_i32, %c0_i32_0 : i32, i32, i32
  }
  func.func @transform_1(%arg0: i32) -> (i32, i32) {
    %c0_i32 = arith.constant 0 : i32
    %c0_i32_0 = arith.constant 0 : i32
    %c0_i32_1 = arith.constant 0 : i32
    return %c0_i32, %c0_i32_0 : i32, i32
  }
  func.func @transform_2(%arg0: i32) -> (i32, i32) {
    %c0_i32 = arith.constant 0 : i32
    %c0_i32_0 = arith.constant 0 : i32
    %c0_i32_1 = arith.constant 0 : i32
    return %c0_i32, %c0_i32_0 : i32, i32
  }
  func.func @transform_3(%arg0: i32) -> (i32, i32) {
    %c0_i32 = arith.constant 0 : i32
    %c0_i32_0 = arith.constant 0 : i32
    %c0_i32_1 = arith.constant 0 : i32
    return %c0_i32, %c0_i32_0 : i32, i32
  }
  func.func @transform_4(%arg0: i32) -> (i32, i32) {
    %c0_i32 = arith.constant 0 : i32
    %c0_i32_0 = arith.constant 0 : i32
    %c0_i32_1 = arith.constant 0 : i32
    return %c0_i32, %c0_i32_0 : i32, i32
  }
}

</mosaic_0001>

<llo_original>
// kernel: bert_text_lstm_net.2
$region0: #{bert_text_lstm_net.2}
  #allocation0 [shape = 'u32[]', space=smem, size = 0x4, offset = 0x4, fixed_abs, tag = 'smem constant byte address 0x4 - core index']
  #allocation1 [shape = 'u32[144,128]{1,0:T(1,128)}', space=vmem, size = 0x12000, scoped, tag = 'internal scratch']
  %s0 = inlined_call_operand.vmem [shape: f32[16,768], index: 0, kind: input, shape index: {}]
  %s1 = inlined_call_operand.vmem [shape: bf16[768,512], index: 1, kind: input, shape index: {}]
  %s2 = inlined_call_operand.vmem [shape: f32[1,512], index: 2, kind: input, shape index: {}]
  %s3 = inlined_call_operand.vmem [shape: bf16[16,512], index: 3, kind: output, shape index: {}]
  %s4 = sld [smem:[#allocation0]]
  $region22: #{bert_text_lstm_net.2} parent=0
    _
  %s6 = ssub.s32 1, %s4
  %s7 = scalar_select 0, %s6, %s4
  // Predicated region
  $region2: #{bert_text_lstm_net.2} parent=0 // pred_check
    _
  $region3: #{bert_text_lstm_net.2} parent=0 // pred_check_branch
    %9 = sbr.rel (0) target = $region5
  $region4: #{bert_text_lstm_net.2} parent=0 // pred_region
    _
  $region5: #{bert_text_lstm_net.2} parent=0 // pred_fallthru
    _
  // Predicated region
  $region6: #{bert_text_lstm_net.2} parent=0 // pred_check
    _
  $region7: #{bert_text_lstm_net.2} parent=0 // pred_check_branch
    %11 = sbr.rel (0) target = $region9
  $region8: #{bert_text_lstm_net.2} parent=0 // pred_region
    _
  $region9: #{bert_text_lstm_net.2} parent=0 // pred_fallthru
    _
  // Predicated region
  $region10: #{bert_text_lstm_net.2} parent=0 // pred_check
    _
  $region11: #{bert_text_lstm_net.2} parent=0 // pred_check_branch
    %13 = sbr.rel (0) target = $region13
  $region12: #{bert_text_lstm_net.2} parent=0 // pred_region
    _
  $region13: #{bert_text_lstm_net.2} parent=0 // pred_fallthru
    _
  %v14 = vld [vmem:[%s0] sm:$0xff]
  %v15 = vld [vmem:[%s0 + $0x8] sm:$0xff]
  %v16 = vld [vmem:[%s0 + $0x10] sm:$0xff]
  %v17 = vld [vmem:[%s0 + $0x18] sm:$0xff]
  %v18 = vld [vmem:[%s0 + $0x20] sm:$0xff]
  %v19 = vld [vmem:[%s0 + $0x28] sm:$0xff]
  %v20 = vld [vmem:[%s0 + $0x30] sm:$0xff]
  %v21 = vld [vmem:[%s0 + $0x38] sm:$0xff]
  %v22 = vld [vmem:[%s0 + $0x40] sm:$0xff]
  %v23 = vld [vmem:[%s0 + $0x48] sm:$0xff]
  %v24 = vld [vmem:[%s0 + $0x50] sm:$0xff]
  %v25 = vld [vmem:[%s0 + $0x58] sm:$0xff]
  %v26 = vpack.c.bf16 %v20, %v14
  %v27 = vpack.c.bf16 %v21, %v15
  %v28 = vpack.c.bf16 %v22, %v16
  %v29 = vpack.c.bf16 %v23, %v17
  %v30 = vpack.c.bf16 %v24, %v18
  %v31 = vpack.c.bf16 %v25, %v19
  %v32 = vld [vmem:[%s1] sm:$0xff]
  %v33 = vld [vmem:[%s1 + $0x8] sm:$0xff]
  %v34 = vld [vmem:[%s1 + $0x10] sm:$0xff]
  %v35 = vld [vmem:[%s1 + $0x18] sm:$0xff]
  %v36 = vld [vmem:[%s1 + $0x20] sm:$0xff]
  %v37 = vld [vmem:[%s1 + $0x28] sm:$0xff]
  %v38 = vld [vmem:[%s1 + $0x30] sm:$0xff]
  %v39 = vld [vmem:[%s1 + $0x38] sm:$0xff]
  %v40 = vld [vmem:[%s1 + $0x40] sm:$0xff]
  %v41 = vld [vmem:[%s1 + $0x48] sm:$0xff]
  %v42 = vld [vmem:[%s1 + $0x50] sm:$0xff]
  %v43 = vld [vmem:[%s1 + $0x58] sm:$0xff]
  %v44 = vld [vmem:[%s1 + $0x60] sm:$0xff]
  %v45 = vld [vmem:[%s1 + $0x68] sm:$0xff]
  %v46 = vld [vmem:[%s1 + $0x70] sm:$0xff]
  %v47 = vld [vmem:[%s1 + $0x78] sm:$0xff]
  %v48 = vld [vmem:[%s1 + $0x80] sm:$0xff]
  %v49 = vld [vmem:[%s1 + $0x88] sm:$0xff]
  %v50 = vld [vmem:[%s1 + $0x90] sm:$0xff]
  %v51 = vld [vmem:[%s1 + $0x98] sm:$0xff]
  %v52 = vld [vmem:[%s1 + $0xa0] sm:$0xff]
  %v53 = vld [vmem:[%s1 + $0xa8] sm:$0xff]
  %v54 = vld [vmem:[%s1 + $0xb0] sm:$0xff]
  %v55 = vld [vmem:[%s1 + $0xb8] sm:$0xff]
  %v56 = vld [vmem:[%s1 + $0xc0] sm:$0xff]
  %v57 = vld [vmem:[%s1 + $0xc8] sm:$0xff]
  %v58 = vld [vmem:[%s1 + $0xd0] sm:$0xff]
  %v59 = vld [vmem:[%s1 + $0xd8] sm:$0xff]
  %v60 = vld [vmem:[%s1 + $0xe0] sm:$0xff]
  %v61 = vld [vmem:[%s1 + $0xe8] sm:$0xff]
  %v62 = vld [vmem:[%s1 + $0xf0] sm:$0xff]
  %v63 = vld [vmem:[%s1 + $0xf8] sm:$0xff]
  %v64 = vld [vmem:[%s1 + $0x100] sm:$0xff]
  %v65 = vld [vmem:[%s1 + $0x108] sm:$0xff]
  %v66 = vld [vmem:[%s1 + $0x110] sm:$0xff]
  %v67 = vld [vmem:[%s1 + $0x118] sm:$0xff]
  %v68 = vld [vmem:[%s1 + $0x120] sm:$0xff]
  %v69 = vld [vmem:[%s1 + $0x128] sm:$0xff]
  %v70 = vld [vmem:[%s1 + $0x130] sm:$0xff]
  %v71 = vld [vmem:[%s1 + $0x138] sm:$0xff]
  %v72 = vld [vmem:[%s1 + $0x140] sm:$0xff]
  %v73 = vld [vmem:[%s1 + $0x148] sm:$0xff]
  %v74 = vld [vmem:[%s1 + $0x150] sm:$0xff]
  %v75 = vld [vmem:[%s1 + $0x158] sm:$0xff]
  %v76 = vld [vmem:[%s1 + $0x160] sm:$0xff]
  %v77 = vld [vmem:[%s1 + $0x168] sm:$0xff]
  %v78 = vld [vmem:[%s1 + $0x170] sm:$0xff]
  %v79 = vld [vmem:[%s1 + $0x178] sm:$0xff]
  %v80 = vld [vmem:[%s1 + $0x180] sm:$0xff]
  %v81 = vld [vmem:[%s1 + $0x188] sm:$0xff]
  %v82 = vld [vmem:[%s1 + $0x190] sm:$0xff]
  %v83 = vld [vmem:[%s1 + $0x198] sm:$0xff]
  %v84 = vld [vmem:[%s1 + $0x1a0] sm:$0xff]
  %v85 = vld [vmem:[%s1 + $0x1a8] sm:$0xff]
  %v86 = vld [vmem:[%s1 + $0x1b0] sm:$0xff]
  %v87 = vld [vmem:[%s1 + $0x1b8] sm:$0xff]
  %v88 = vld [vmem:[%s1 + $0x1c0] sm:$0xff]
  %v89 = vld [vmem:[%s1 + $0x1c8] sm:$0xff]
  %v90 = vld [vmem:[%s1 + $0x1d0] sm:$0xff]
  %v91 = vld [vmem:[%s1 + $0x1d8] sm:$0xff]
  %v92 = vld [vmem:[%s1 + $0x1e0] sm:$0xff]
  %v93 = vld [vmem:[%s1 + $0x1e8] sm:$0xff]
  %v94 = vld [vmem:[%s1 + $0x1f0] sm:$0xff]
  %v95 = vld [vmem:[%s1 + $0x1f8] sm:$0xff]
  %v96 = vld [vmem:[%s1 + $0x200] sm:$0xff]
  %v97 = vld [vmem:[%s1 + $0x208] sm:$0xff]
  %v98 = vld [vmem:[%s1 + $0x210] sm:$0xff]
  %v99 = vld [vmem:[%s1 + $0x218] sm:$0xff]
  %v100 = vld [vmem:[%s1 + $0x220] sm:$0xff]
  %v101 = vld [vmem:[%s1 + $0x228] sm:$0xff]
  %v102 = vld [vmem:[%s1 + $0x230] sm:$0xff]
  %v103 = vld [vmem:[%s1 + $0x238] sm:$0xff]
  %v104 = vld [vmem:[%s1 + $0x240] sm:$0xff]
  %v105 = vld [vmem:[%s1 + $0x248] sm:$0xff]
  %v106 = vld [vmem:[%s1 + $0x250] sm:$0xff]
  %v107 = vld [vmem:[%s1 + $0x258] sm:$0xff]
  %v108 = vld [vmem:[%s1 + $0x260] sm:$0xff]
  %v109 = vld [vmem:[%s1 + $0x268] sm:$0xff]
  %v110 = vld [vmem:[%s1 + $0x270] sm:$0xff]
  %v111 = vld [vmem:[%s1 + $0x278] sm:$0xff]
  %v112 = vld [vmem:[%s1 + $0x280] sm:$0xff]
  %v113 = vld [vmem:[%s1 + $0x288] sm:$0xff]
  %v114 = vld [vmem:[%s1 + $0x290] sm:$0xff]
  %v115 = vld [vmem:[%s1 + $0x298] sm:$0xff]
  %v116 = vld [vmem:[%s1 + $0x2a0] sm:$0xff]
  %v117 = vld [vmem:[%s1 + $0x2a8] sm:$0xff]
  %v118 = vld [vmem:[%s1 + $0x2b0] sm:$0xff]
  %v119 = vld [vmem:[%s1 + $0x2b8] sm:$0xff]
  %v120 = vld [vmem:[%s1 + $0x2c0] sm:$0xff]
  %v121 = vld [vmem:[%s1 + $0x2c8] sm:$0xff]
  %v122 = vld [vmem:[%s1 + $0x2d0] sm:$0xff]
  %v123 = vld [vmem:[%s1 + $0x2d8] sm:$0xff]
  %v124 = vld [vmem:[%s1 + $0x2e0] sm:$0xff]
  %v125 = vld [vmem:[%s1 + $0x2e8] sm:$0xff]
  %v126 = vld [vmem:[%s1 + $0x2f0] sm:$0xff]
  %v127 = vld [vmem:[%s1 + $0x2f8] sm:$0xff]
  %v128 = vld [vmem:[%s1 + $0x300] sm:$0xff]
  %v129 = vld [vmem:[%s1 + $0x308] sm:$0xff]
  %v130 = vld [vmem:[%s1 + $0x310] sm:$0xff]
  %v131 = vld [vmem:[%s1 + $0x318] sm:$0xff]
  %v132 = vld [vmem:[%s1 + $0x320] sm:$0xff]
  %v133 = vld [vmem:[%s1 + $0x328] sm:$0xff]
  %v134 = vld [vmem:[%s1 + $0x330] sm:$0xff]
  %v135 = vld [vmem:[%s1 + $0x338] sm:$0xff]
  %v136 = vld [vmem:[%s1 + $0x340] sm:$0xff]
  %v137 = vld [vmem:[%s1 + $0x348] sm:$0xff]
  %v138 = vld [vmem:[%s1 + $0x350] sm:$0xff]
  %v139 = vld [vmem:[%s1 + $0x358] sm:$0xff]
  %v140 = vld [vmem:[%s1 + $0x360] sm:$0xff]
  %v141 = vld [vmem:[%s1 + $0x368] sm:$0xff]
  %v142 = vld [vmem:[%s1 + $0x370] sm:$0xff]
  %v143 = vld [vmem:[%s1 + $0x378] sm:$0xff]
  %v144 = vld [vmem:[%s1 + $0x380] sm:$0xff]
  %v145 = vld [vmem:[%s1 + $0x388] sm:$0xff]
  %v146 = vld [vmem:[%s1 + $0x390] sm:$0xff]
  %v147 = vld [vmem:[%s1 + $0x398] sm:$0xff]
  %v148 = vld [vmem:[%s1 + $0x3a0] sm:$0xff]
  %v149 = vld [vmem:[%s1 + $0x3a8] sm:$0xff]
  %v150 = vld [vmem:[%s1 + $0x3b0] sm:$0xff]
  %v151 = vld [vmem:[%s1 + $0x3b8] sm:$0xff]
  %v152 = vld [vmem:[%s1 + $0x3c0] sm:$0xff]
  %v153 = vld [vmem:[%s1 + $0x3c8] sm:$0xff]
  %v154 = vld [vmem:[%s1 + $0x3d0] sm:$0xff]
  %v155 = vld [vmem:[%s1 + $0x3d8] sm:$0xff]
  %v156 = vld [vmem:[%s1 + $0x3e0] sm:$0xff]
  %v157 = vld [vmem:[%s1 + $0x3e8] sm:$0xff]
  %v158 = vld [vmem:[%s1 + $0x3f0] sm:$0xff]
  %v159 = vld [vmem:[%s1 + $0x3f8] sm:$0xff]
  %v160 = vld [vmem:[%s1 + $0x400] sm:$0xff]
  %v161 = vld [vmem:[%s1 + $0x408] sm:$0xff]
  %v162 = vld [vmem:[%s1 + $0x410] sm:$0xff]
  %v163 = vld [vmem:[%s1 + $0x418] sm:$0xff]
  %v164 = vld [vmem:[%s1 + $0x420] sm:$0xff]
  %v165 = vld [vmem:[%s1 + $0x428] sm:$0xff]
  %v166 = vld [vmem:[%s1 + $0x430] sm:$0xff]
  %v167 = vld [vmem:[%s1 + $0x438] sm:$0xff]
  %v168 = vld [vmem:[%s1 + $0x440] sm:$0xff]
  %v169 = vld [vmem:[%s1 + $0x448] sm:$0xff]
  %v170 = vld [vmem:[%s1 + $0x450] sm:$0xff]
  %v171 = vld [vmem:[%s1 + $0x458] sm:$0xff]
  %v172 = vld [vmem:[%s1 + $0x460] sm:$0xff]
  %v173 = vld [vmem:[%s1 + $0x468] sm:$0xff]
  %v174 = vld [vmem:[%s1 + $0x470] sm:$0xff]
  %v175 = vld [vmem:[%s1 + $0x478] sm:$0xff]
  %v176 = vld [vmem:[%s1 + $0x480] sm:$0xff]
  %v177 = vld [vmem:[%s1 + $0x488] sm:$0xff]
  %v178 = vld [vmem:[%s1 + $0x490] sm:$0xff]
  %v179 = vld [vmem:[%s1 + $0x498] sm:$0xff]
  %v180 = vld [vmem:[%s1 + $0x4a0] sm:$0xff]
  %v181 = vld [vmem:[%s1 + $0x4a8] sm:$0xff]
  %v182 = vld [vmem:[%s1 + $0x4b0] sm:$0xff]
  %v183 = vld [vmem:[%s1 + $0x4b8] sm:$0xff]
  %v184 = vld [vmem:[%s1 + $0x4c0] sm:$0xff]
  %v185 = vld [vmem:[%s1 + $0x4c8] sm:$0xff]
  %v186 = vld [vmem:[%s1 + $0x4d0] sm:$0xff]
  %v187 = vld [vmem:[%s1 + $0x4d8] sm:$0xff]
  %v188 = vld [vmem:[%s1 + $0x4e0] sm:$0xff]
  %v189 = vld [vmem:[%s1 + $0x4e8] sm:$0xff]
  %v190 = vld [vmem:[%s1 + $0x4f0] sm:$0xff]
  %v191 = vld [vmem:[%s1 + $0x4f8] sm:$0xff]
  %v192 = vld [vmem:[%s1 + $0x500] sm:$0xff]
  %v193 = vld [vmem:[%s1 + $0x508] sm:$0xff]
  %v194 = vld [vmem:[%s1 + $0x510] sm:$0xff]
  %v195 = vld [vmem:[%s1 + $0x518] sm:$0xff]
  %v196 = vld [vmem:[%s1 + $0x520] sm:$0xff]
  %v197 = vld [vmem:[%s1 + $0x528] sm:$0xff]
  %v198 = vld [vmem:[%s1 + $0x530] sm:$0xff]
  %v199 = vld [vmem:[%s1 + $0x538] sm:$0xff]
  %v200 = vld [vmem:[%s1 + $0x540] sm:$0xff]
  %v201 = vld [vmem:[%s1 + $0x548] sm:$0xff]
  %v202 = vld [vmem:[%s1 + $0x550] sm:$0xff]
  %v203 = vld [vmem:[%s1 + $0x558] sm:$0xff]
  %v204 = vld [vmem:[%s1 + $0x560] sm:$0xff]
  %v205 = vld [vmem:[%s1 + $0x568] sm:$0xff]
  %v206 = vld [vmem:[%s1 + $0x570] sm:$0xff]
  %v207 = vld [vmem:[%s1 + $0x578] sm:$0xff]
  %v208 = vld [vmem:[%s1 + $0x580] sm:$0xff]
  %v209 = vld [vmem:[%s1 + $0x588] sm:$0xff]
  %v210 = vld [vmem:[%s1 + $0x590] sm:$0xff]
  %v211 = vld [vmem:[%s1 + $0x598] sm:$0xff]
  %v212 = vld [vmem:[%s1 + $0x5a0] sm:$0xff]
  %v213 = vld [vmem:[%s1 + $0x5a8] sm:$0xff]
  %v214 = vld [vmem:[%s1 + $0x5b0] sm:$0xff]
  %v215 = vld [vmem:[%s1 + $0x5b8] sm:$0xff]
  %v216 = vld [vmem:[%s1 + $0x5c0] sm:$0xff]
  %v217 = vld [vmem:[%s1 + $0x5c8] sm:$0xff]
  %v218 = vld [vmem:[%s1 + $0x5d0] sm:$0xff]
  %v219 = vld [vmem:[%s1 + $0x5d8] sm:$0xff]
  %v220 = vld [vmem:[%s1 + $0x5e0] sm:$0xff]
  %v221 = vld [vmem:[%s1 + $0x5e8] sm:$0xff]
  %v222 = vld [vmem:[%s1 + $0x5f0] sm:$0xff]
  %v223 = vld [vmem:[%s1 + $0x5f8] sm:$0xff]
  %v224 = vld [vmem:[%s2] sm:$0xf]
  %v226 = vlaneseq
  %v227 = vshrl.u32 %v226, 7
  %v228 = vsub.s32 0, %v227
  %v229 = vrot.slane %v224, %v228
  %v230 = vlaneseq
  %v231 = vshrl.u32 %v230, 7
  %v232 = vsub.s32 1, %v231
  %v233 = vrot.slane %v224, %v232
  %v234 = vlaneseq
  %v235 = vshrl.u32 %v234, 7
  %v236 = vsub.s32 2, %v235
  %v237 = vrot.slane %v224, %v236
  %v238 = vlaneseq
  %v239 = vshrl.u32 %v238, 7
  %v240 = vsub.s32 3, %v239
  %v241 = vrot.slane %v224, %v240
  %v438 = vunpack.c.l.b16 %v32
  %v439 = vunpack.c.h.b16 %v32
  %v440 = vunpack.c.l.b16 %v33
  %v441 = vunpack.c.h.b16 %v33
  %v442 = vunpack.c.l.b16 %v34
  %v443 = vunpack.c.h.b16 %v34
  %v444 = vunpack.c.l.b16 %v35
  %v445 = vunpack.c.h.b16 %v35
  %v446 = vunpack.c.l.b16 %v36
  %v447 = vunpack.c.h.b16 %v36
  %v448 = vunpack.c.l.b16 %v37
  %v449 = vunpack.c.h.b16 %v37
  %v450 = vunpack.c.l.b16 %v38
  %v451 = vunpack.c.h.b16 %v38
  %v452 = vunpack.c.l.b16 %v39
  %v453 = vunpack.c.h.b16 %v39
  %v454 = vunpack.c.l.b16 %v40
  %v455 = vunpack.c.h.b16 %v40
  %v456 = vunpack.c.l.b16 %v41
  %v457 = vunpack.c.h.b16 %v41
  %v458 = vunpack.c.l.b16 %v42
  %v459 = vunpack.c.h.b16 %v42
  %v460 = vunpack.c.l.b16 %v43
  %v461 = vunpack.c.h.b16 %v43
  %v462 = vunpack.c.l.b16 %v44
  %v463 = vunpack.c.h.b16 %v44
  %v464 = vunpack.c.l.b16 %v45
  %v465 = vunpack.c.h.b16 %v45
  %v466 = vunpack.c.l.b16 %v46
  %v467 = vunpack.c.h.b16 %v46
  %v468 = vunpack.c.l.b16 %v47
  %v469 = vunpack.c.h.b16 %v47
  %v470 = vunpack.c.l.b16 %v48
  %v471 = vunpack.c.h.b16 %v48
  %v472 = vunpack.c.l.b16 %v49
  %v473 = vunpack.c.h.b16 %v49
  %v474 = vunpack.c.l.b16 %v50
  %v475 = vunpack.c.h.b16 %v50
  %v476 = vunpack.c.l.b16 %v51
  %v477 = vunpack.c.h.b16 %v51
  %v478 = vunpack.c.l.b16 %v52
  %v479 = vunpack.c.h.b16 %v52
  %v480 = vunpack.c.l.b16 %v53
  %v481 = vunpack.c.h.b16 %v53
  %v482 = vunpack.c.l.b16 %v54
  %v483 = vunpack.c.h.b16 %v54
  %v484 = vunpack.c.l.b16 %v55
  %v485 = vunpack.c.h.b16 %v55
  %v486 = vunpack.c.l.b16 %v56
  %v487 = vunpack.c.h.b16 %v56
  %v488 = vunpack.c.l.b16 %v57
  %v489 = vunpack.c.h.b16 %v57
  %v490 = vunpack.c.l.b16 %v58
  %v491 = vunpack.c.h.b16 %v58
  %v492 = vunpack.c.l.b16 %v59
  %v493 = vunpack.c.h.b16 %v59
  %v494 = vunpack.c.l.b16 %v60
  %v495 = vunpack.c.h.b16 %v60
  %v496 = vunpack.c.l.b16 %v61
  %v497 = vunpack.c.h.b16 %v61
  %v498 = vunpack.c.l.b16 %v62
  %v499 = vunpack.c.h.b16 %v62
  %v500 = vunpack.c.l.b16 %v63
  %v501 = vunpack.c.h.b16 %v63
  %v502 = vunpack.c.l.b16 %v64
  %v503 = vunpack.c.h.b16 %v64
  %v504 = vunpack.c.l.b16 %v65
  %v505 = vunpack.c.h.b16 %v65
  %v506 = vunpack.c.l.b16 %v66
  %v507 = vunpack.c.h.b16 %v66
  %v508 = vunpack.c.l.b16 %v67
  %v509 = vunpack.c.h.b16 %v67
  %v510 = vunpack.c.l.b16 %v68
  %v511 = vunpack.c.h.b16 %v68
  %v512 = vunpack.c.l.b16 %v69
  %v513 = vunpack.c.h.b16 %v69
  %v514 = vunpack.c.l.b16 %v70
  %v515 = vunpack.c.h.b16 %v70
  %v516 = vunpack.c.l.b16 %v71
  %v517 = vunpack.c.h.b16 %v71
  %v518 = vunpack.c.l.b16 %v72
  %v519 = vunpack.c.h.b16 %v72
  %v520 = vunpack.c.l.b16 %v73
  %v521 = vunpack.c.h.b16 %v73
  %v522 = vunpack.c.l.b16 %v74
  %v523 = vunpack.c.h.b16 %v74
  %v524 = vunpack.c.l.b16 %v75
  %v525 = vunpack.c.h.b16 %v75
  %v526 = vunpack.c.l.b16 %v76
  %v527 = vunpack.c.h.b16 %v76
  %v528 = vunpack.c.l.b16 %v77
  %v529 = vunpack.c.h.b16 %v77
  %v530 = vunpack.c.l.b16 %v78
  %v531 = vunpack.c.h.b16 %v78
  %v532 = vunpack.c.l.b16 %v79
  %v533 = vunpack.c.h.b16 %v79
  %v534 = vunpack.c.l.b16 %v80
  %v535 = vunpack.c.h.b16 %v80
  %v536 = vunpack.c.l.b16 %v81
  %v537 = vunpack.c.h.b16 %v81
  %v538 = vunpack.c.l.b16 %v82
  %v539 = vunpack.c.h.b16 %v82
  %v540 = vunpack.c.l.b16 %v83
  %v541 = vunpack.c.h.b16 %v83
  %v542 = vunpack.c.l.b16 %v84
  %v543 = vunpack.c.h.b16 %v84
  %v544 = vunpack.c.l.b16 %v85
  %v545 = vunpack.c.h.b16 %v85
  %v546 = vunpack.c.l.b16 %v86
  %v547 = vunpack.c.h.b16 %v86
  %v548 = vunpack.c.l.b16 %v87
  %v549 = vunpack.c.h.b16 %v87
  %v550 = vunpack.c.l.b16 %v88
  %v551 = vunpack.c.h.b16 %v88
  %v552 = vunpack.c.l.b16 %v89
  %v553 = vunpack.c.h.b16 %v89
  %v554 = vunpack.c.l.b16 %v90
  %v555 = vunpack.c.h.b16 %v90
  %v556 = vunpack.c.l.b16 %v91
  %v557 = vunpack.c.h.b16 %v91
  %v558 = vunpack.c.l.b16 %v92
  %v559 = vunpack.c.h.b16 %v92
  %v560 = vunpack.c.l.b16 %v93
  %v561 = vunpack.c.h.b16 %v93
  %v562 = vunpack.c.l.b16 %v94
  %v563 = vunpack.c.h.b16 %v94
  %v564 = vunpack.c.l.b16 %v95
  %v565 = vunpack.c.h.b16 %v95
  %v566 = vunpack.c.l.b16 %v96
  %v567 = vunpack.c.h.b16 %v96
  %v568 = vunpack.c.l.b16 %v97
  %v569 = vunpack.c.h.b16 %v97
  %v570 = vunpack.c.l.b16 %v98
  %v571 = vunpack.c.h.b16 %v98
  %v572 = vunpack.c.l.b16 %v99
  %v573 = vunpack.c.h.b16 %v99
  %v574 = vunpack.c.l.b16 %v100
  %v575 = vunpack.c.h.b16 %v100
  %v576 = vunpack.c.l.b16 %v101
  %v577 = vunpack.c.h.b16 %v101
  %v578 = vunpack.c.l.b16 %v102
  %v579 = vunpack.c.h.b16 %v102
  %v580 = vunpack.c.l.b16 %v103
  %v581 = vunpack.c.h.b16 %v103
  %v582 = vunpack.c.l.b16 %v104
  %v583 = vunpack.c.h.b16 %v104
  %v584 = vunpack.c.l.b16 %v105
  %v585 = vunpack.c.h.b16 %v105
  %v586 = vunpack.c.l.b16 %v106
  %v587 = vunpack.c.h.b16 %v106
  %v588 = vunpack.c.l.b16 %v107
  %v589 = vunpack.c.h.b16 %v107
  %v590 = vunpack.c.l.b16 %v108
  %v591 = vunpack.c.h.b16 %v108
  %v592 = vunpack.c.l.b16 %v109
  %v593 = vunpack.c.h.b16 %v109
  %v594 = vunpack.c.l.b16 %v110
  %v595 = vunpack.c.h.b16 %v110
  %v596 = vunpack.c.l.b16 %v111
  %v597 = vunpack.c.h.b16 %v111
  %v598 = vunpack.c.l.b16 %v112
  %v599 = vunpack.c.h.b16 %v112
  %v600 = vunpack.c.l.b16 %v113
  %v601 = vunpack.c.h.b16 %v113
  %v602 = vunpack.c.l.b16 %v114
  %v603 = vunpack.c.h.b16 %v114
  %v604 = vunpack.c.l.b16 %v115
  %v605 = vunpack.c.h.b16 %v115
  %v606 = vunpack.c.l.b16 %v116
  %v607 = vunpack.c.h.b16 %v116
  %v608 = vunpack.c.l.b16 %v117
  %v609 = vunpack.c.h.b16 %v117
  %v610 = vunpack.c.l.b16 %v118
  %v611 = vunpack.c.h.b16 %v118
  %v612 = vunpack.c.l.b16 %v119
  %v613 = vunpack.c.h.b16 %v119
  %v614 = vunpack.c.l.b16 %v120
  %v615 = vunpack.c.h.b16 %v120
  %v616 = vunpack.c.l.b16 %v121
  %v617 = vunpack.c.h.b16 %v121
  %v618 = vunpack.c.l.b16 %v122
  %v619 = vunpack.c.h.b16 %v122
  %v620 = vunpack.c.l.b16 %v123
  %v621 = vunpack.c.h.b16 %v123
  %v622 = vunpack.c.l.b16 %v124
  %v623 = vunpack.c.h.b16 %v124
  %v624 = vunpack.c.l.b16 %v125
  %v625 = vunpack.c.h.b16 %v125
  %v626 = vunpack.c.l.b16 %v126
  %v627 = vunpack.c.h.b16 %v126
  %v628 = vunpack.c.l.b16 %v127
  %v629 = vunpack.c.h.b16 %v127
  %v630 = vunpack.c.l.b16 %v128
  %v631 = vunpack.c.h.b16 %v128
  %v632 = vunpack.c.l.b16 %v129
  %v633 = vunpack.c.h.b16 %v129
  %v634 = vunpack.c.l.b16 %v130
  %v635 = vunpack.c.h.b16 %v130
  %v636 = vunpack.c.l.b16 %v131
  %v637 = vunpack.c.h.b16 %v131
  %v638 = vunpack.c.l.b16 %v132
  %v639 = vunpack.c.h.b16 %v132
  %v640 = vunpack.c.l.b16 %v133
  %v641 = vunpack.c.h.b16 %v133
  %v642 = vunpack.c.l.b16 %v134
  %v643 = vunpack.c.h.b16 %v134
  %v644 = vunpack.c.l.b16 %v135
  %v645 = vunpack.c.h.b16 %v135
  %v646 = vunpack.c.l.b16 %v136
  %v647 = vunpack.c.h.b16 %v136
  %v648 = vunpack.c.l.b16 %v137
  %v649 = vunpack.c.h.b16 %v137
  %v650 = vunpack.c.l.b16 %v138
  %v651 = vunpack.c.h.b16 %v138
  %v652 = vunpack.c.l.b16 %v139
  %v653 = vunpack.c.h.b16 %v139
  %v654 = vunpack.c.l.b16 %v140
  %v655 = vunpack.c.h.b16 %v140
  %v656 = vunpack.c.l.b16 %v141
  %v657 = vunpack.c.h.b16 %v141
  %v658 = vunpack.c.l.b16 %v142
  %v659 = vunpack.c.h.b16 %v142
  %v660 = vunpack.c.l.b16 %v143
  %v661 = vunpack.c.h.b16 %v143
  %v662 = vunpack.c.l.b16 %v144
  %v663 = vunpack.c.h.b16 %v144
  %v664 = vunpack.c.l.b16 %v145
  %v665 = vunpack.c.h.b16 %v145
  %v666 = vunpack.c.l.b16 %v146
  %v667 = vunpack.c.h.b16 %v146
  %v668 = vunpack.c.l.b16 %v147
  %v669 = vunpack.c.h.b16 %v147
  %v670 = vunpack.c.l.b16 %v148
  %v671 = vunpack.c.h.b16 %v148
  %v672 = vunpack.c.l.b16 %v149
  %v673 = vunpack.c.h.b16 %v149
  %v674 = vunpack.c.l.b16 %v150
  %v675 = vunpack.c.h.b16 %v150
  %v676 = vunpack.c.l.b16 %v151
  %v677 = vunpack.c.h.b16 %v151
  %v678 = vunpack.c.l.b16 %v152
  %v679 = vunpack.c.h.b16 %v152
  %v680 = vunpack.c.l.b16 %v153
  %v681 = vunpack.c.h.b16 %v153
  %v682 = vunpack.c.l.b16 %v154
  %v683 = vunpack.c.h.b16 %v154
  %v684 = vunpack.c.l.b16 %v155
  %v685 = vunpack.c.h.b16 %v155
  %v686 = vunpack.c.l.b16 %v156
  %v687 = vunpack.c.h.b16 %v156
  %v688 = vunpack.c.l.b16 %v157
  %v689 = vunpack.c.h.b16 %v157
  %v690 = vunpack.c.l.b16 %v158
  %v691 = vunpack.c.h.b16 %v158
  %v692 = vunpack.c.l.b16 %v159
  %v693 = vunpack.c.h.b16 %v159
  %v694 = vunpack.c.l.b16 %v160
  %v695 = vunpack.c.h.b16 %v160
  %v696 = vunpack.c.l.b16 %v161
  %v697 = vunpack.c.h.b16 %v161
  %v698 = vunpack.c.l.b16 %v162
  %v699 = vunpack.c.h.b16 %v162
  %v700 = vunpack.c.l.b16 %v163
  %v701 = vunpack.c.h.b16 %v163
  %v702 = vunpack.c.l.b16 %v164
  %v703 = vunpack.c.h.b16 %v164
  %v704 = vunpack.c.l.b16 %v165
  %v705 = vunpack.c.h.b16 %v165
  %v706 = vunpack.c.l.b16 %v166
  %v707 = vunpack.c.h.b16 %v166
  %v708 = vunpack.c.l.b16 %v167
  %v709 = vunpack.c.h.b16 %v167
  %v710 = vunpack.c.l.b16 %v168
  %v711 = vunpack.c.h.b16 %v168
  %v712 = vunpack.c.l.b16 %v169
  %v713 = vunpack.c.h.b16 %v169
  %v714 = vunpack.c.l.b16 %v170
  %v715 = vunpack.c.h.b16 %v170
  %v716 = vunpack.c.l.b16 %v171
  %v717 = vunpack.c.h.b16 %v171
  %v718 = vunpack.c.l.b16 %v172
  %v719 = vunpack.c.h.b16 %v172
  %v720 = vunpack.c.l.b16 %v173
  %v721 = vunpack.c.h.b16 %v173
  %v722 = vunpack.c.l.b16 %v174
  %v723 = vunpack.c.h.b16 %v174
  %v724 = vunpack.c.l.b16 %v175
  %v725 = vunpack.c.h.b16 %v175
  %v726 = vunpack.c.l.b16 %v176
  %v727 = vunpack.c.h.b16 %v176
  %v728 = vunpack.c.l.b16 %v177
  %v729 = vunpack.c.h.b16 %v177
  %v730 = vunpack.c.l.b16 %v178
  %v731 = vunpack.c.h.b16 %v178
  %v732 = vunpack.c.l.b16 %v179
  %v733 = vunpack.c.h.b16 %v179
  %v734 = vunpack.c.l.b16 %v180
  %v735 = vunpack.c.h.b16 %v180
  %v736 = vunpack.c.l.b16 %v181
  %v737 = vunpack.c.h.b16 %v181
  %v738 = vunpack.c.l.b16 %v182
  %v739 = vunpack.c.h.b16 %v182
  %v740 = vunpack.c.l.b16 %v183
  %v741 = vunpack.c.h.b16 %v183
  %v742 = vunpack.c.l.b16 %v184
  %v743 = vunpack.c.h.b16 %v184
  %v744 = vunpack.c.l.b16 %v185
  %v745 = vunpack.c.h.b16 %v185
  %v746 = vunpack.c.l.b16 %v186
  %v747 = vunpack.c.h.b16 %v186
  %v748 = vunpack.c.l.b16 %v187
  %v749 = vunpack.c.h.b16 %v187
  %v750 = vunpack.c.l.b16 %v188
  %v751 = vunpack.c.h.b16 %v188
  %v752 = vunpack.c.l.b16 %v189
  %v753 = vunpack.c.h.b16 %v189
  %v754 = vunpack.c.l.b16 %v190
  %v755 = vunpack.c.h.b16 %v190
  %v756 = vunpack.c.l.b16 %v191
  %v757 = vunpack.c.h.b16 %v191
  %v758 = vunpack.c.l.b16 %v192
  %v759 = vunpack.c.h.b16 %v192
  %v760 = vunpack.c.l.b16 %v193
  %v761 = vunpack.c.h.b16 %v193
  %v762 = vunpack.c.l.b16 %v194
  %v763 = vunpack.c.h.b16 %v194
  %v764 = vunpack.c.l.b16 %v195
  %v765 = vunpack.c.h.b16 %v195
  %v766 = vunpack.c.l.b16 %v196
  %v767 = vunpack.c.h.b16 %v196
  %v768 = vunpack.c.l.b16 %v197
  %v769 = vunpack.c.h.b16 %v197
  %v770 = vunpack.c.l.b16 %v198
  %v771 = vunpack.c.h.b16 %v198
  %v772 = vunpack.c.l.b16 %v199
  %v773 = vunpack.c.h.b16 %v199
  %v774 = vunpack.c.l.b16 %v200
  %v775 = vunpack.c.h.b16 %v200
  %v776 = vunpack.c.l.b16 %v201
  %v777 = vunpack.c.h.b16 %v201
  %v778 = vunpack.c.l.b16 %v202
  %v779 = vunpack.c.h.b16 %v202
  %v780 = vunpack.c.l.b16 %v203
  %v781 = vunpack.c.h.b16 %v203
  %v782 = vunpack.c.l.b16 %v204
  %v783 = vunpack.c.h.b16 %v204
  %v784 = vunpack.c.l.b16 %v205
  %v785 = vunpack.c.h.b16 %v205
  %v786 = vunpack.c.l.b16 %v206
  %v787 = vunpack.c.h.b16 %v206
  %v788 = vunpack.c.l.b16 %v207
  %v789 = vunpack.c.h.b16 %v207
  %v790 = vunpack.c.l.b16 %v208
  %v791 = vunpack.c.h.b16 %v208
  %v792 = vunpack.c.l.b16 %v209
  %v793 = vunpack.c.h.b16 %v209
  %v794 = vunpack.c.l.b16 %v210
  %v795 = vunpack.c.h.b16 %v210
  %v796 = vunpack.c.l.b16 %v211
  %v797 = vunpack.c.h.b16 %v211
  %v798 = vunpack.c.l.b16 %v212
  %v799 = vunpack.c.h.b16 %v212
  %v800 = vunpack.c.l.b16 %v213
  %v801 = vunpack.c.h.b16 %v213
  %v802 = vunpack.c.l.b16 %v214
  %v803 = vunpack.c.h.b16 %v214
  %v804 = vunpack.c.l.b16 %v215
  %v805 = vunpack.c.h.b16 %v215
  %v806 = vunpack.c.l.b16 %v216
  %v807 = vunpack.c.h.b16 %v216
  %v808 = vunpack.c.l.b16 %v217
  %v809 = vunpack.c.h.b16 %v217
  %v810 = vunpack.c.l.b16 %v218
  %v811 = vunpack.c.h.b16 %v218
  %v812 = vunpack.c.l.b16 %v219
  %v813 = vunpack.c.h.b16 %v219
  %v814 = vunpack.c.l.b16 %v220
  %v815 = vunpack.c.h.b16 %v220
  %v816 = vunpack.c.l.b16 %v221
  %v817 = vunpack.c.h.b16 %v221
  %v818 = vunpack.c.l.b16 %v222
  %v819 = vunpack.c.h.b16 %v222
  %v820 = vunpack.c.l.b16 %v223
  %v821 = vunpack.c.h.b16 %v223
  %v822 = vpack.c.b16 %v442, %v438
  %v823 = vpack.c.b16 %v443, %v439
  %v824 = vpack.c.b16 %v444, %v440
  %v825 = vpack.c.b16 %v445, %v441
  %v826 = vpack.c.b16 %v450, %v446
  %v827 = vpack.c.b16 %v451, %v447
  %v828 = vpack.c.b16 %v452, %v448
  %v829 = vpack.c.b16 %v453, %v449
  %v830 = vpack.c.b16 %v458, %v454
  %v831 = vpack.c.b16 %v459, %v455
  %v832 = vpack.c.b16 %v460, %v456
  %v833 = vpack.c.b16 %v461, %v457
  %v834 = vpack.c.b16 %v466, %v462
  %v835 = vpack.c.b16 %v467, %v463
  %v836 = vpack.c.b16 %v468, %v464
  %v837 = vpack.c.b16 %v469, %v465
  %v838 = vpack.c.b16 %v474, %v470
  %v839 = vpack.c.b16 %v475, %v471
  %v840 = vpack.c.b16 %v476, %v472
  %v841 = vpack.c.b16 %v477, %v473
  %v842 = vpack.c.b16 %v482, %v478
  %v843 = vpack.c.b16 %v483, %v479
  %v844 = vpack.c.b16 %v484, %v480
  %v845 = vpack.c.b16 %v485, %v481
  %v846 = vpack.c.b16 %v490, %v486
  %v847 = vpack.c.b16 %v491, %v487
  %v848 = vpack.c.b16 %v492, %v488
  %v849 = vpack.c.b16 %v493, %v489
  %v850 = vpack.c.b16 %v498, %v494
  %v851 = vpack.c.b16 %v499, %v495
  %v852 = vpack.c.b16 %v500, %v496
  %v853 = vpack.c.b16 %v501, %v497
  %v854 = vpack.c.b16 %v506, %v502
  %v855 = vpack.c.b16 %v507, %v503
  %v856 = vpack.c.b16 %v508, %v504
  %v857 = vpack.c.b16 %v509, %v505
  %v858 = vpack.c.b16 %v514, %v510
  %v859 = vpack.c.b16 %v515, %v511
  %v860 = vpack.c.b16 %v516, %v512
  %v861 = vpack.c.b16 %v517, %v513
  %v862 = vpack.c.b16 %v522, %v518
  %v863 = vpack.c.b16 %v523, %v519
  %v864 = vpack.c.b16 %v524, %v520
  %v865 = vpack.c.b16 %v525, %v521
  %v866 = vpack.c.b16 %v530, %v526
  %v867 = vpack.c.b16 %v531, %v527
  %v868 = vpack.c.b16 %v532, %v528
  %v869 = vpack.c.b16 %v533, %v529
  %v870 = vpack.c.b16 %v538, %v534
  %v871 = vpack.c.b16 %v539, %v535
  %v872 = vpack.c.b16 %v540, %v536
  %v873 = vpack.c.b16 %v541, %v537
  %v874 = vpack.c.b16 %v546, %v542
  %v875 = vpack.c.b16 %v547, %v543
  %v876 = vpack.c.b16 %v548, %v544
  %v877 = vpack.c.b16 %v549, %v545
  %v878 = vpack.c.b16 %v554, %v550
  %v879 = vpack.c.b16 %v555, %v551
  %v880 = vpack.c.b16 %v556, %v552
  %v881 = vpack.c.b16 %v557, %v553
  %v882 = vpack.c.b16 %v562, %v558
  %v883 = vpack.c.b16 %v563, %v559
  %v884 = vpack.c.b16 %v564, %v560
  %v885 = vpack.c.b16 %v565, %v561
  %v886 = vpack.c.b16 %v570, %v566
  %v887 = vpack.c.b16 %v571, %v567
  %v888 = vpack.c.b16 %v572, %v568
  %v889 = vpack.c.b16 %v573, %v569
  %v890 = vpack.c.b16 %v578, %v574
  %v891 = vpack.c.b16 %v579, %v575
  %v892 = vpack.c.b16 %v580, %v576
  %v893 = vpack.c.b16 %v581, %v577
  %v894 = vpack.c.b16 %v586, %v582
  %v895 = vpack.c.b16 %v587, %v583
  %v896 = vpack.c.b16 %v588, %v584
  %v897 = vpack.c.b16 %v589, %v585
  %v898 = vpack.c.b16 %v594, %v590
  %v899 = vpack.c.b16 %v595, %v591
  %v900 = vpack.c.b16 %v596, %v592
  %v901 = vpack.c.b16 %v597, %v593
  %v902 = vpack.c.b16 %v602, %v598
  %v903 = vpack.c.b16 %v603, %v599
  %v904 = vpack.c.b16 %v604, %v600
  %v905 = vpack.c.b16 %v605, %v601
  %v906 = vpack.c.b16 %v610, %v606
  %v907 = vpack.c.b16 %v611, %v607
  %v908 = vpack.c.b16 %v612, %v608
  %v909 = vpack.c.b16 %v613, %v609
  %v910 = vpack.c.b16 %v618, %v614
  %v911 = vpack.c.b16 %v619, %v615
  %v912 = vpack.c.b16 %v620, %v616
  %v913 = vpack.c.b16 %v621, %v617
  %v914 = vpack.c.b16 %v626, %v622
  %v915 = vpack.c.b16 %v627, %v623
  %v916 = vpack.c.b16 %v628, %v624
  %v917 = vpack.c.b16 %v629, %v625
  %v918 = vpack.c.b16 %v634, %v630
  %v919 = vpack.c.b16 %v635, %v631
  %v920 = vpack.c.b16 %v636, %v632
  %v921 = vpack.c.b16 %v637, %v633
  %v922 = vpack.c.b16 %v642, %v638
  %v923 = vpack.c.b16 %v643, %v639
  %v924 = vpack.c.b16 %v644, %v640
  %v925 = vpack.c.b16 %v645, %v641
  %v926 = vpack.c.b16 %v650, %v646
  %v927 = vpack.c.b16 %v651, %v647
  %v928 = vpack.c.b16 %v652, %v648
  %v929 = vpack.c.b16 %v653, %v649
  %v930 = vpack.c.b16 %v658, %v654
  %v931 = vpack.c.b16 %v659, %v655
  %v932 = vpack.c.b16 %v660, %v656
  %v933 = vpack.c.b16 %v661, %v657
  %v934 = vpack.c.b16 %v666, %v662
  %v935 = vpack.c.b16 %v667, %v663
  %v936 = vpack.c.b16 %v668, %v664
  %v937 = vpack.c.b16 %v669, %v665
  %v938 = vpack.c.b16 %v674, %v670
  %v939 = vpack.c.b16 %v675, %v671
  %v940 = vpack.c.b16 %v676, %v672
  %v941 = vpack.c.b16 %v677, %v673
  %v942 = vpack.c.b16 %v682, %v678
  %v943 = vpack.c.b16 %v683, %v679
  %v944 = vpack.c.b16 %v684, %v680
  %v945 = vpack.c.b16 %v685, %v681
  %v946 = vpack.c.b16 %v690, %v686
  %v947 = vpack.c.b16 %v691, %v687
  %v948 = vpack.c.b16 %v692, %v688
  %v949 = vpack.c.b16 %v693, %v689
  %v950 = vpack.c.b16 %v698, %v694
  %v951 = vpack.c.b16 %v699, %v695
  %v952 = vpack.c.b16 %v700, %v696
  %v953 = vpack.c.b16 %v701, %v697
  %v954 = vpack.c.b16 %v706, %v702
  %v955 = vpack.c.b16 %v707, %v703
  %v956 = vpack.c.b16 %v708, %v704
  %v957 = vpack.c.b16 %v709, %v705
  %v958 = vpack.c.b16 %v714, %v710
  %v959 = vpack.c.b16 %v715, %v711
  %v960 = vpack.c.b16 %v716, %v712
  %v961 = vpack.c.b16 %v717, %v713
  %v962 = vpack.c.b16 %v722, %v718
  %v963 = vpack.c.b16 %v723, %v719
  %v964 = vpack.c.b16 %v724, %v720
  %v965 = vpack.c.b16 %v725, %v721
  %v966 = vpack.c.b16 %v730, %v726
  %v967 = vpack.c.b16 %v731, %v727
  %v968 = vpack.c.b16 %v732, %v728
  %v969 = vpack.c.b16 %v733, %v729
  %v970 = vpack.c.b16 %v738, %v734
  %v971 = vpack.c.b16 %v739, %v735
  %v972 = vpack.c.b16 %v740, %v736
  %v973 = vpack.c.b16 %v741, %v737
  %v974 = vpack.c.b16 %v746, %v742
  %v975 = vpack.c.b16 %v747, %v743
  %v976 = vpack.c.b16 %v748, %v744
  %v977 = vpack.c.b16 %v749, %v745
  %v978 = vpack.c.b16 %v754, %v750
  %v979 = vpack.c.b16 %v755, %v751
  %v980 = vpack.c.b16 %v756, %v752
  %v981 = vpack.c.b16 %v757, %v753
  %v982 = vpack.c.b16 %v762, %v758
  %v983 = vpack.c.b16 %v763, %v759
  %v984 = vpack.c.b16 %v764, %v760
  %v985 = vpack.c.b16 %v765, %v761
  %v986 = vpack.c.b16 %v770, %v766
  %v987 = vpack.c.b16 %v771, %v767
  %v988 = vpack.c.b16 %v772, %v768
  %v989 = vpack.c.b16 %v773, %v769
  %v990 = vpack.c.b16 %v778, %v774
  %v991 = vpack.c.b16 %v779, %v775
  %v992 = vpack.c.b16 %v780, %v776
  %v993 = vpack.c.b16 %v781, %v777
  %v994 = vpack.c.b16 %v786, %v782
  %v995 = vpack.c.b16 %v787, %v783
  %v996 = vpack.c.b16 %v788, %v784
  %v997 = vpack.c.b16 %v789, %v785
  %v998 = vpack.c.b16 %v794, %v790
  %v999 = vpack.c.b16 %v795, %v791
  %v1000 = vpack.c.b16 %v796, %v792
  %v1001 = vpack.c.b16 %v797, %v793
  %v1002 = vpack.c.b16 %v802, %v798
  %v1003 = vpack.c.b16 %v803, %v799
  %v1004 = vpack.c.b16 %v804, %v800
  %v1005 = vpack.c.b16 %v805, %v801
  %v1006 = vpack.c.b16 %v810, %v806
  %v1007 = vpack.c.b16 %v811, %v807
  %v1008 = vpack.c.b16 %v812, %v808
  %v1009 = vpack.c.b16 %v813, %v809
  %v1010 = vpack.c.b16 %v818, %v814
  %v1011 = vpack.c.b16 %v819, %v815
  %v1012 = vpack.c.b16 %v820, %v816
  %v1013 = vpack.c.b16 %v821, %v817
  %1206 = vmatprep.subr.bf16.mxu0 %v823
  %1207 = vmatpush1.bf16.msra.mxu0 %v822
  %1208 = vmatprep.subr.bf16.mxu0 %v827
  %1209 = vmatpush1.bf16.msra.mxu0 %v826
  %1210 = vmatprep.subr.bf16.mxu0 %v831
  %1211 = vmatpush1.bf16.msra.mxu0 %v830
  %1212 = vmatprep.subr.bf16.mxu0 %v835
  %1213 = vmatpush1.bf16.msra.mxu0 %v834
  %1214 = vmatprep.subr.bf16.mxu0 %v839
  %1215 = vmatpush1.bf16.msra.mxu0 %v838
  %1216 = vmatprep.subr.bf16.mxu0 %v843
  %1217 = vmatpush1.bf16.msra.mxu0 %v842
  %1218 = vmatprep.subr.bf16.mxu0 %v847
  %1219 = vmatpush1.bf16.msra.mxu0 %v846
  %1220 = vmatprep.subr.bf16.mxu0 %v851
  %1221 = vmatpush1.bf16.msra.mxu0 %v850
  %1222 = vmatprep.subr.bf16.mxu0 %v855
  %1223 = vmatpush1.bf16.msra.mxu0 %v854
  %1224 = vmatprep.subr.bf16.mxu0 %v859
  %1225 = vmatpush1.bf16.msra.mxu0 %v858
  %1226 = vmatprep.subr.bf16.mxu0 %v863
  %1227 = vmatpush1.bf16.msra.mxu0 %v862
  %1228 = vmatprep.subr.bf16.mxu0 %v867
  %1229 = vmatpush1.bf16.msra.mxu0 %v866
  %1230 = vmatprep.subr.bf16.mxu0 %v871
  %1231 = vmatpush1.bf16.msra.mxu0 %v870
  %1232 = vmatprep.subr.bf16.mxu0 %v875
  %1233 = vmatpush1.bf16.msra.mxu0 %v874
  %1234 = vmatprep.subr.bf16.mxu0 %v879
  %1235 = vmatpush1.bf16.msra.mxu0 %v878
  %1236 = vmatprep.subr.bf16.mxu0 %v883
  %1237 = vmatpush1.bf16.msra.mxu0 %v882
  %1238 = vmatprep.mubr.bf16.mxu0 %v27
  %1239 = vmatmul.mubr.bf16.gmra.mrb[0].mxu0 %v26
  %v1240 = vpop.f32.mrb[0].mxu0
  %v1241 = vadd.f32 %v229, %v1240
  %v1242 = vpop.f32.mrb[0].mxu0
  %v1243 = vadd.f32 %v233, %v1242
  %v1244 = vpop.f32.mrb[0].mxu0
  %v1245 = vadd.f32 %v229, %v1244
  %v1246 = vpop.f32.mrb[0].mxu0
  %v1247 = vadd.f32 %v233, %v1246
  %1248 = vdwg.mxu0
  %1249 = vmatprep.subr.bf16.mxu0 %v887
  %1250 = vmatpush1.bf16.msra.mxu0 %v886
  %1251 = vmatprep.subr.bf16.mxu0 %v891
  %1252 = vmatpush1.bf16.msra.mxu0 %v890
  %1253 = vmatprep.subr.bf16.mxu0 %v895
  %1254 = vmatpush1.bf16.msra.mxu0 %v894
  %1255 = vmatprep.subr.bf16.mxu0 %v899
  %1256 = vmatpush1.bf16.msra.mxu0 %v898
  %1257 = vmatprep.subr.bf16.mxu0 %v903
  %1258 = vmatpush1.bf16.msra.mxu0 %v902
  %1259 = vmatprep.subr.bf16.mxu0 %v907
  %1260 = vmatpush1.bf16.msra.mxu0 %v906
  %1261 = vmatprep.subr.bf16.mxu0 %v911
  %1262 = vmatpush1.bf16.msra.mxu0 %v910
  %1263 = vmatprep.subr.bf16.mxu0 %v915
  %1264 = vmatpush1.bf16.msra.mxu0 %v914
  %1265 = vmatprep.subr.bf16.mxu0 %v919
  %1266 = vmatpush1.bf16.msra.mxu0 %v918
  %1267 = vmatprep.subr.bf16.mxu0 %v923
  %1268 = vmatpush1.bf16.msra.mxu0 %v922
  %1269 = vmatprep.subr.bf16.mxu0 %v927
  %1270 = vmatpush1.bf16.msra.mxu0 %v926
  %1271 = vmatprep.subr.bf16.mxu0 %v931
  %1272 = vmatpush1.bf16.msra.mxu0 %v930
  %1273 = vmatprep.subr.bf16.mxu0 %v935
  %1274 = vmatpush1.bf16.msra.mxu0 %v934
  %1275 = vmatprep.subr.bf16.mxu0 %v939
  %1276 = vmatpush1.bf16.msra.mxu0 %v938
  %1277 = vmatprep.subr.bf16.mxu0 %v943
  %1278 = vmatpush1.bf16.msra.mxu0 %v942
  %1279 = vmatprep.subr.bf16.mxu0 %v947
  %1280 = vmatpush1.bf16.msra.mxu0 %v946
  %1281 = vmatprep.mubr.bf16.mxu0 %v29
  %1282 = vmatmul.mubr.bf16.gmra.mrb[0].mxu0 %v28
  %v1283 = vpop.f32.mrb[0].mxu0
  %v1284 = vadd.f32 %v1241, %v1283
  %v1285 = vpop.f32.mrb[0].mxu0
  %v1286 = vadd.f32 %v1243, %v1285
  %v1287 = vpop.f32.mrb[0].mxu0
  %v1288 = vadd.f32 %v1245, %v1287
  %v1289 = vpop.f32.mrb[0].mxu0
  %v1290 = vadd.f32 %v1247, %v1289
  %1291 = vdwg.mxu0
  %1292 = vmatprep.subr.bf16.mxu0 %v951
  %1293 = vmatpush1.bf16.msra.mxu0 %v950
  %1294 = vmatprep.subr.bf16.mxu0 %v955
  %1295 = vmatpush1.bf16.msra.mxu0 %v954
  %1296 = vmatprep.subr.bf16.mxu0 %v959
  %1297 = vmatpush1.bf16.msra.mxu0 %v958
  %1298 = vmatprep.subr.bf16.mxu0 %v963
  %1299 = vmatpush1.bf16.msra.mxu0 %v962
  %1300 = vmatprep.subr.bf16.mxu0 %v967
  %1301 = vmatpush1.bf16.msra.mxu0 %v966
  %1302 = vmatprep.subr.bf16.mxu0 %v971
  %1303 = vmatpush1.bf16.msra.mxu0 %v970
  %1304 = vmatprep.subr.bf16.mxu0 %v975
  %1305 = vmatpush1.bf16.msra.mxu0 %v974
  %1306 = vmatprep.subr.bf16.mxu0 %v979
  %1307 = vmatpush1.bf16.msra.mxu0 %v978
  %1308 = vmatprep.subr.bf16.mxu0 %v983
  %1309 = vmatpush1.bf16.msra.mxu0 %v982
  %1310 = vmatprep.subr.bf16.mxu0 %v987
  %1311 = vmatpush1.bf16.msra.mxu0 %v986
  %1312 = vmatprep.subr.bf16.mxu0 %v991
  %1313 = vmatpush1.bf16.msra.mxu0 %v990
  %1314 = vmatprep.subr.bf16.mxu0 %v995
  %1315 = vmatpush1.bf16.msra.mxu0 %v994
  %1316 = vmatprep.subr.bf16.mxu0 %v999
  %1317 = vmatpush1.bf16.msra.mxu0 %v998
  %1318 = vmatprep.subr.bf16.mxu0 %v1003
  %1319 = vmatpush1.bf16.msra.mxu0 %v1002
  %1320 = vmatprep.subr.bf16.mxu0 %v1007
  %1321 = vmatpush1.bf16.msra.mxu0 %v1006
  %1322 = vmatprep.subr.bf16.mxu0 %v1011
  %1323 = vmatpush1.bf16.msra.mxu0 %v1010
  %1324 = vmatprep.mubr.bf16.mxu0 %v31
  %1325 = vmatmul.mubr.bf16.gmra.mrb[0].mxu0 %v30
  %v1326 = vpop.f32.mrb[0].mxu0
  %v1327 = vadd.f32 %v1284, %v1326
  %v1328 = vpop.f32.mrb[0].mxu0
  %v1329 = vadd.f32 %v1286, %v1328
  %v1330 = vpop.f32.mrb[0].mxu0
  %v1331 = vadd.f32 %v1288, %v1330
  %v1332 = vpop.f32.mrb[0].mxu0
  %v1333 = vadd.f32 %v1290, %v1332
  %1334 = vdwg.mxu0
  %1335 = vmatprep.subr.bf16.mxu0 %v825
  %1336 = vmatpush1.bf16.msra.mxu0 %v824
  %1337 = vmatprep.subr.bf16.mxu0 %v829
  %1338 = vmatpush1.bf16.msra.mxu0 %v828
  %1339 = vmatprep.subr.bf16.mxu0 %v833
  %1340 = vmatpush1.bf16.msra.mxu0 %v832
  %1341 = vmatprep.subr.bf16.mxu0 %v837
  %1342 = vmatpush1.bf16.msra.mxu0 %v836
  %1343 = vmatprep.subr.bf16.mxu0 %v841
  %1344 = vmatpush1.bf16.msra.mxu0 %v840
  %1345 = vmatprep.subr.bf16.mxu0 %v845
  %1346 = vmatpush1.bf16.msra.mxu0 %v844
  %1347 = vmatprep.subr.bf16.mxu0 %v849
  %1348 = vmatpush1.bf16.msra.mxu0 %v848
  %1349 = vmatprep.subr.bf16.mxu0 %v853
  %1350 = vmatpush1.bf16.msra.mxu0 %v852
  %1351 = vmatprep.subr.bf16.mxu0 %v857
  %1352 = vmatpush1.bf16.msra.mxu0 %v856
  %1353 = vmatprep.subr.bf16.mxu0 %v861
  %1354 = vmatpush1.bf16.msra.mxu0 %v860
  %1355 = vmatprep.subr.bf16.mxu0 %v865
  %1356 = vmatpush1.bf16.msra.mxu0 %v864
  %1357 = vmatprep.subr.bf16.mxu0 %v869
  %1358 = vmatpush1.bf16.msra.mxu0 %v868
  %1359 = vmatprep.subr.bf16.mxu0 %v873
  %1360 = vmatpush1.bf16.msra.mxu0 %v872
  %1361 = vmatprep.subr.bf16.mxu0 %v877
  %1362 = vmatpush1.bf16.msra.mxu0 %v876
  %1363 = vmatprep.subr.bf16.mxu0 %v881
  %1364 = vmatpush1.bf16.msra.mxu0 %v880
  %1365 = vmatprep.subr.bf16.mxu0 %v885
  %1366 = vmatpush1.bf16.msra.mxu0 %v884
  %1367 = vmatprep.mubr.bf16.mxu0 %v27
  %1368 = vmatmul.mubr.bf16.gmra.mrb[0].mxu0 %v26
  %v1369 = vpop.f32.mrb[0].mxu0
  %v1370 = vadd.f32 %v237, %v1369
  %v1371 = vpop.f32.mrb[0].mxu0
  %v1372 = vadd.f32 %v241, %v1371
  %v1373 = vpop.f32.mrb[0].mxu0
  %v1374 = vadd.f32 %v237, %v1373
  %v1375 = vpop.f32.mrb[0].mxu0
  %v1376 = vadd.f32 %v241, %v1375
  %1377 = vdwg.mxu0
  %1378 = vmatprep.subr.bf16.mxu0 %v889
  %1379 = vmatpush1.bf16.msra.mxu0 %v888
  %1380 = vmatprep.subr.bf16.mxu0 %v893
  %1381 = vmatpush1.bf16.msra.mxu0 %v892
  %1382 = vmatprep.subr.bf16.mxu0 %v897
  %1383 = vmatpush1.bf16.msra.mxu0 %v896
  %1384 = vmatprep.subr.bf16.mxu0 %v901
  %1385 = vmatpush1.bf16.msra.mxu0 %v900
  %1386 = vmatprep.subr.bf16.mxu0 %v905
  %1387 = vmatpush1.bf16.msra.mxu0 %v904
  %1388 = vmatprep.subr.bf16.mxu0 %v909
  %1389 = vmatpush1.bf16.msra.mxu0 %v908
  %1390 = vmatprep.subr.bf16.mxu0 %v913
  %1391 = vmatpush1.bf16.msra.mxu0 %v912
  %1392 = vmatprep.subr.bf16.mxu0 %v917
  %1393 = vmatpush1.bf16.msra.mxu0 %v916
  %1394 = vmatprep.subr.bf16.mxu0 %v921
  %1395 = vmatpush1.bf16.msra.mxu0 %v920
  %1396 = vmatprep.subr.bf16.mxu0 %v925
  %1397 = vmatpush1.bf16.msra.mxu0 %v924
  %1398 = vmatprep.subr.bf16.mxu0 %v929
  %1399 = vmatpush1.bf16.msra.mxu0 %v928
  %1400 = vmatprep.subr.bf16.mxu0 %v933
  %1401 = vmatpush1.bf16.msra.mxu0 %v932
  %1402 = vmatprep.subr.bf16.mxu0 %v937
  %1403 = vmatpush1.bf16.msra.mxu0 %v936
  %1404 = vmatprep.subr.bf16.mxu0 %v941
  %1405 = vmatpush1.bf16.msra.mxu0 %v940
  %1406 = vmatprep.subr.bf16.mxu0 %v945
  %1407 = vmatpush1.bf16.msra.mxu0 %v944
  %1408 = vmatprep.subr.bf16.mxu0 %v949
  %1409 = vmatpush1.bf16.msra.mxu0 %v948
  %1410 = vmatprep.mubr.bf16.mxu0 %v29
  %1411 = vmatmul.mubr.bf16.gmra.mrb[0].mxu0 %v28
  %v1412 = vpop.f32.mrb[0].mxu0
  %v1413 = vadd.f32 %v1370, %v1412
  %v1414 = vpop.f32.mrb[0].mxu0
  %v1415 = vadd.f32 %v1372, %v1414
  %v1416 = vpop.f32.mrb[0].mxu0
  %v1417 = vadd.f32 %v1374, %v1416
  %v1418 = vpop.f32.mrb[0].mxu0
  %v1419 = vadd.f32 %v1376, %v1418
  %1420 = vdwg.mxu0
  %1421 = vmatprep.subr.bf16.mxu0 %v953
  %1422 = vmatpush1.bf16.msra.mxu0 %v952
  %1423 = vmatprep.subr.bf16.mxu0 %v957
  %1424 = vmatpush1.bf16.msra.mxu0 %v956
  %1425 = vmatprep.subr.bf16.mxu0 %v961
  %1426 = vmatpush1.bf16.msra.mxu0 %v960
  %1427 = vmatprep.subr.bf16.mxu0 %v965
  %1428 = vmatpush1.bf16.msra.mxu0 %v964
  %1429 = vmatprep.subr.bf16.mxu0 %v969
  %1430 = vmatpush1.bf16.msra.mxu0 %v968
  %1431 = vmatprep.subr.bf16.mxu0 %v973
  %1432 = vmatpush1.bf16.msra.mxu0 %v972
  %1433 = vmatprep.subr.bf16.mxu0 %v977
  %1434 = vmatpush1.bf16.msra.mxu0 %v976
  %1435 = vmatprep.subr.bf16.mxu0 %v981
  %1436 = vmatpush1.bf16.msra.mxu0 %v980
  %1437 = vmatprep.subr.bf16.mxu0 %v985
  %1438 = vmatpush1.bf16.msra.mxu0 %v984
  %1439 = vmatprep.subr.bf16.mxu0 %v989
  %1440 = vmatpush1.bf16.msra.mxu0 %v988
  %1441 = vmatprep.subr.bf16.mxu0 %v993
  %1442 = vmatpush1.bf16.msra.mxu0 %v992
  %1443 = vmatprep.subr.bf16.mxu0 %v997
  %1444 = vmatpush1.bf16.msra.mxu0 %v996
  %1445 = vmatprep.subr.bf16.mxu0 %v1001
  %1446 = vmatpush1.bf16.msra.mxu0 %v1000
  %1447 = vmatprep.subr.bf16.mxu0 %v1005
  %1448 = vmatpush1.bf16.msra.mxu0 %v1004
  %1449 = vmatprep.subr.bf16.mxu0 %v1009
  %1450 = vmatpush1.bf16.msra.mxu0 %v1008
  %1451 = vmatprep.subr.bf16.mxu0 %v1013
  %1452 = vmatpush1.bf16.msra.mxu0 %v1012
  %1453 = vmatprep.mubr.bf16.mxu0 %v31
  %1454 = vmatmul.mubr.bf16.gmra.mrb[0].mxu0 %v30
  %v1455 = vpop.f32.mrb[0].mxu0
  %v1456 = vadd.f32 %v1413, %v1455
  %v1457 = vpop.f32.mrb[0].mxu0
  %v1458 = vadd.f32 %v1415, %v1457
  %v1459 = vpop.f32.mrb[0].mxu0
  %v1460 = vadd.f32 %v1417, %v1459
  %v1461 = vpop.f32.mrb[0].mxu0
  %v1462 = vadd.f32 %v1419, %v1461
  %1463 = vdwg.mxu0
  %v1464 = vpack.c.bf16 %v1331, %v1327
  %v1465 = vpack.c.bf16 %v1333, %v1329
  %v1466 = vpack.c.bf16 %v1460, %v1456
  %v1467 = vpack.c.bf16 %v1462, %v1458
  %v1472 = vunpack.c.l.b16 %v1464
  %v1473 = vunpack.c.l.b16 %v1465
  %v1474 = vunpack.c.l.b16 %v1466
  %v1475 = vunpack.c.l.b16 %v1467
  %v1476 = vunpack.c.h.b16 %v1464
  %v1477 = vunpack.c.h.b16 %v1465
  %v1478 = vunpack.c.h.b16 %v1466
  %v1479 = vunpack.c.h.b16 %v1467
  %v1480 = vpack.c.b16 %v1473, %v1472
  %v1481 = vpack.c.b16 %v1475, %v1474
  %v1482 = vpack.c.b16 %v1477, %v1476
  %v1483 = vpack.c.b16 %v1479, %v1478
  %1488 = vst [vmem:[%s3] sm:$0xff] %v1480
  %1489 = vst [vmem:[%s3 + $0x8] sm:$0xff] %v1481
  %1490 = vst [vmem:[%s3 + $0x10] sm:$0xff] %v1482
  %1491 = vst [vmem:[%s3 + $0x18] sm:$0xff] %v1483
  // Predicated region
  $region14: #{bert_text_lstm_net.2} parent=0 // pred_check
    _
  $region15: #{bert_text_lstm_net.2} parent=0 // pred_check_branch
    %1493 = sbr.rel (0) target = $region17
  $region16: #{bert_text_lstm_net.2} parent=0 // pred_region
    _
  $region17: #{bert_text_lstm_net.2} parent=0 // pred_fallthru
    _
  // Predicated region
  $region18: #{bert_text_lstm_net.2} parent=0 // pred_check
    _
  $region19: #{bert_text_lstm_net.2} parent=0 // pred_check_branch
    %1495 = sbr.rel (0) target = $region21
  $region20: #{bert_text_lstm_net.2} parent=0 // pred_region
    _
  $region21: #{bert_text_lstm_net.2} parent=0 // pred_fallthru
    _

// kernel: bert_text_lstm_net.3
$region0: #{bert_text_lstm_net.3}
  #allocation0 [shape = 'u32[]', space=smem, size = 0x4, offset = 0x4, fixed_abs, tag = 'smem constant byte address 0x4 - core index']
  #allocation1 [shape = 'u32[144,128]{1,0:T(1,128)}', space=vmem, size = 0x12000, scoped, tag = 'internal scratch']
  #allocation2 [shape = 'bf16[2,128]{1,0:T(2,128)(2,1)}', space=vmem, size = 0x200, scoped, tag = 'scratch operand']
  #allocation3 [shape = 'f32[2,128]{1,0:T(2,128)}', space=vmem, size = 0x400, scoped, tag = 'scratch operand']
  #allocation4 [shape = 'f32[2,128]{1,0:T(2,128)}', space=vmem, size = 0x400, scoped, tag = 'scratch operand']
  #allocation5 [shape = 'f32[2,128]{1,0:T(2,128)}', space=vmem, size = 0x400, scoped, tag = 'scratch operand']
  %s0 = inlined_call_operand.vmem [shape: bf16[8,2,512], index: 0, kind: input, shape index: {}]
  %s1 = inlined_call_operand.vmem [shape: bf16[128,512], index: 1, kind: input, shape index: {}]
  %s2 = inlined_call_operand.vmem [shape: bf16[256,512], index: 2, kind: input, shape index: {}]
  %s3 = inlined_call_operand.vmem [shape: f32[1,512], index: 3, kind: input, shape index: {}]
  %s4 = inlined_call_operand.vmem [shape: f32[2,128], index: 4, kind: output, shape index: {}]
  %s5 = sld [smem:[#allocation0]]
  $region34: #{bert_text_lstm_net.3} parent=0
    _
  %s7 = ssub.s32 1, %s5
  %s8 = scalar_select 0, %s7, %s5
  // Predicated region
  $region2: #{bert_text_lstm_net.3} parent=0 // pred_check
    _
  $region3: #{bert_text_lstm_net.3} parent=0 // pred_check_branch
    %10 = sbr.rel (0) target = $region5
  $region4: #{bert_text_lstm_net.3} parent=0 // pred_region
    _
  $region5: #{bert_text_lstm_net.3} parent=0 // pred_fallthru
    _
  // Predicated region
  $region6: #{bert_text_lstm_net.3} parent=0 // pred_check
    _
  $region7: #{bert_text_lstm_net.3} parent=0 // pred_check_branch
    %12 = sbr.rel (0) target = $region9
  $region8: #{bert_text_lstm_net.3} parent=0 // pred_region
    _
  $region9: #{bert_text_lstm_net.3} parent=0 // pred_fallthru
    _
  // Predicated region
  $region10: #{bert_text_lstm_net.3} parent=0 // pred_check
    _
  $region11: #{bert_text_lstm_net.3} parent=0 // pred_check_branch
    %14 = sbr.rel (0) target = $region13
  $region12: #{bert_text_lstm_net.3} parent=0 // pred_region
    _
  $region13: #{bert_text_lstm_net.3} parent=0 // pred_fallthru
    _
  // Predicated region
  $region14: #{bert_text_lstm_net.3} parent=0 // pred_check
    _
  $region15: #{bert_text_lstm_net.3} parent=0 // pred_check_branch
    %16 = sbr.rel (0) target = $region17
  $region16: #{bert_text_lstm_net.3} parent=0 // pred_region
    _
  $region17: #{bert_text_lstm_net.3} parent=0 // pred_fallthru
    _
  %p18 = scmp.eq.s32.totalorder 0, 0
  // Predicated region
  $region18: #{bert_text_lstm_net.3} parent=0 // pred_check
    %p19 = pneg %p18
  $region19: #{bert_text_lstm_net.3} parent=0 // pred_check_branch
    %21 = sbr.rel (%p19) target = $region21
  $region20: #{bert_text_lstm_net.3} parent=0 // pred_region
    %22 = vst [vmem:[#allocation2] sm:$0x1] 0
    %23 = vst [vmem:[#allocation3] sm:$0x3] 0.0
    %24 = vst [vmem:[#allocation4] sm:$0x3] 0.0
    %25 = vst [vmem:[#allocation5] sm:$0x3] 0.0
  $region21: #{bert_text_lstm_net.3} parent=0 // pred_fallthru
    _
  %v26 = vld [vmem:[%s1] sm:$0xff]
  %v27 = vld [vmem:[%s1 + $0x8] sm:$0xff]
  %v28 = vld [vmem:[%s1 + $0x10] sm:$0xff]
  %v29 = vld [vmem:[%s1 + $0x18] sm:$0xff]
  %v30 = vld [vmem:[%s1 + $0x20] sm:$0xff]
  %v31 = vld [vmem:[%s1 + $0x28] sm:$0xff]
  %v32 = vld [vmem:[%s1 + $0x30] sm:$0xff]
  %v33 = vld [vmem:[%s1 + $0x38] sm:$0xff]
  %v34 = vld [vmem:[%s1 + $0x40] sm:$0xff]
  %v35 = vld [vmem:[%s1 + $0x48] sm:$0xff]
  %v36 = vld [vmem:[%s1 + $0x50] sm:$0xff]
  %v37 = vld [vmem:[%s1 + $0x58] sm:$0xff]
  %v38 = vld [vmem:[%s1 + $0x60] sm:$0xff]
  %v39 = vld [vmem:[%s1 + $0x68] sm:$0xff]
  %v40 = vld [vmem:[%s1 + $0x70] sm:$0xff]
  %v41 = vld [vmem:[%s1 + $0x78] sm:$0xff]
  %v42 = vld [vmem:[%s1 + $0x80] sm:$0xff]
  %v43 = vld [vmem:[%s1 + $0x88] sm:$0xff]
  %v44 = vld [vmem:[%s1 + $0x90] sm:$0xff]
  %v45 = vld [vmem:[%s1 + $0x98] sm:$0xff]
  %v46 = vld [vmem:[%s1 + $0xa0] sm:$0xff]
  %v47 = vld [vmem:[%s1 + $0xa8] sm:$0xff]
  %v48 = vld [vmem:[%s1 + $0xb0] sm:$0xff]
  %v49 = vld [vmem:[%s1 + $0xb8] sm:$0xff]
  %v50 = vld [vmem:[%s1 + $0xc0] sm:$0xff]
  %v51 = vld [vmem:[%s1 + $0xc8] sm:$0xff]
  %v52 = vld [vmem:[%s1 + $0xd0] sm:$0xff]
  %v53 = vld [vmem:[%s1 + $0xd8] sm:$0xff]
  %v54 = vld [vmem:[%s1 + $0xe0] sm:$0xff]
  %v55 = vld [vmem:[%s1 + $0xe8] sm:$0xff]
  %v56 = vld [vmem:[%s1 + $0xf0] sm:$0xff]
  %v57 = vld [vmem:[%s1 + $0xf8] sm:$0xff]
  %v58 = vld [vmem:[%s2] sm:$0xff]
  %v59 = vld [vmem:[%s2 + $0x8] sm:$0xff]
  %v60 = vld [vmem:[%s2 + $0x10] sm:$0xff]
  %v61 = vld [vmem:[%s2 + $0x18] sm:$0xff]
  %v62 = vld [vmem:[%s2 + $0x20] sm:$0xff]
  %v63 = vld [vmem:[%s2 + $0x28] sm:$0xff]
  %v64 = vld [vmem:[%s2 + $0x30] sm:$0xff]
  %v65 = vld [vmem:[%s2 + $0x38] sm:$0xff]
  %v66 = vld [vmem:[%s2 + $0x40] sm:$0xff]
  %v67 = vld [vmem:[%s2 + $0x48] sm:$0xff]
  %v68 = vld [vmem:[%s2 + $0x50] sm:$0xff]
  %v69 = vld [vmem:[%s2 + $0x58] sm:$0xff]
  %v70 = vld [vmem:[%s2 + $0x60] sm:$0xff]
  %v71 = vld [vmem:[%s2 + $0x68] sm:$0xff]
  %v72 = vld [vmem:[%s2 + $0x70] sm:$0xff]
  %v73 = vld [vmem:[%s2 + $0x78] sm:$0xff]
  %v74 = vld [vmem:[%s2 + $0x80] sm:$0xff]
  %v75 = vld [vmem:[%s2 + $0x88] sm:$0xff]
  %v76 = vld [vmem:[%s2 + $0x90] sm:$0xff]
  %v77 = vld [vmem:[%s2 + $0x98] sm:$0xff]
  %v78 = vld [vmem:[%s2 + $0xa0] sm:$0xff]
  %v79 = vld [vmem:[%s2 + $0xa8] sm:$0xff]
  %v80 = vld [vmem:[%s2 + $0xb0] sm:$0xff]
  %v81 = vld [vmem:[%s2 + $0xb8] sm:$0xff]
  %v82 = vld [vmem:[%s2 + $0xc0] sm:$0xff]
  %v83 = vld [vmem:[%s2 + $0xc8] sm:$0xff]
  %v84 = vld [vmem:[%s2 + $0xd0] sm:$0xff]
  %v85 = vld [vmem:[%s2 + $0xd8] sm:$0xff]
  %v86 = vld [vmem:[%s2 + $0xe0] sm:$0xff]
  %v87 = vld [vmem:[%s2 + $0xe8] sm:$0xff]
  %v88 = vld [vmem:[%s2 + $0xf0] sm:$0xff]
  %v89 = vld [vmem:[%s2 + $0xf8] sm:$0xff]
  %v90 = vld [vmem:[%s2 + $0x100] sm:$0xff]
  %v91 = vld [vmem:[%s2 + $0x108] sm:$0xff]
  %v92 = vld [vmem:[%s2 + $0x110] sm:$0xff]
  %v93 = vld [vmem:[%s2 + $0x118] sm:$0xff]
  %v94 = vld [vmem:[%s2 + $0x120] sm:$0xff]
  %v95 = vld [vmem:[%s2 + $0x128] sm:$0xff]
  %v96 = vld [vmem:[%s2 + $0x130] sm:$0xff]
  %v97 = vld [vmem:[%s2 + $0x138] sm:$0xff]
  %v98 = vld [vmem:[%s2 + $0x140] sm:$0xff]
  %v99 = vld [vmem:[%s2 + $0x148] sm:$0xff]
  %v100 = vld [vmem:[%s2 + $0x150] sm:$0xff]
  %v101 = vld [vmem:[%s2 + $0x158] sm:$0xff]
  %v102 = vld [vmem:[%s2 + $0x160] sm:$0xff]
  %v103 = vld [vmem:[%s2 + $0x168] sm:$0xff]
  %v104 = vld [vmem:[%s2 + $0x170] sm:$0xff]
  %v105 = vld [vmem:[%s2 + $0x178] sm:$0xff]
  %v106 = vld [vmem:[%s2 + $0x180] sm:$0xff]
  %v107 = vld [vmem:[%s2 + $0x188] sm:$0xff]
  %v108 = vld [vmem:[%s2 + $0x190] sm:$0xff]
  %v109 = vld [vmem:[%s2 + $0x198] sm:$0xff]
  %v110 = vld [vmem:[%s2 + $0x1a0] sm:$0xff]
  %v111 = vld [vmem:[%s2 + $0x1a8] sm:$0xff]
  %v112 = vld [vmem:[%s2 + $0x1b0] sm:$0xff]
  %v113 = vld [vmem:[%s2 + $0x1b8] sm:$0xff]
  %v114 = vld [vmem:[%s2 + $0x1c0] sm:$0xff]
  %v115 = vld [vmem:[%s2 + $0x1c8] sm:$0xff]
  %v116 = vld [vmem:[%s2 + $0x1d0] sm:$0xff]
  %v117 = vld [vmem:[%s2 + $0x1d8] sm:$0xff]
  %v118 = vld [vmem:[%s2 + $0x1e0] sm:$0xff]
  %v119 = vld [vmem:[%s2 + $0x1e8] sm:$0xff]
  %v120 = vld [vmem:[%s2 + $0x1f0] sm:$0xff]
  %v121 = vld [vmem:[%s2 + $0x1f8] sm:$0xff]
  %v122 = vld [vmem:[%s3] sm:$0xf]
  %v124 = vlaneseq
  %v125 = vshrl.u32 %v124, 7
  %v126 = vsub.s32 0, %v125
  %v127 = vrot.slane %v122, %v126
  %v128 = vlaneseq
  %v129 = vshrl.u32 %v128, 7
  %v130 = vsub.s32 1, %v129
  %v131 = vrot.slane %v122, %v130
  %v132 = vlaneseq
  %v133 = vshrl.u32 %v132, 7
  %v134 = vsub.s32 2, %v133
  %v135 = vrot.slane %v122, %v134
  %v136 = vlaneseq
  %v137 = vshrl.u32 %v136, 7
  %v138 = vsub.s32 3, %v137
  %v139 = vrot.slane %v122, %v138
  %v144 = vld [vmem:[#allocation2] sm:$0x1]
  %v145 = vld [vmem:[#allocation3] sm:$0x3]
  %v146 = vld [vmem:[#allocation4] sm:$0x3]
  %v147 = vld [vmem:[#allocation5] sm:$0x3]
  %v148 = vld [vmem:[%s0] sm:$0xf]
  %v149 = vunpack.c.l.bf16 %v148
  %v182 = vunpack.c.l.b16 %v26
  %v183 = vunpack.c.h.b16 %v26
  %v184 = vunpack.c.l.b16 %v27
  %v185 = vunpack.c.h.b16 %v27
  %v186 = vunpack.c.l.b16 %v28
  %v187 = vunpack.c.h.b16 %v28
  %v188 = vunpack.c.l.b16 %v29
  %v189 = vunpack.c.h.b16 %v29
  %v190 = vunpack.c.l.b16 %v30
  %v191 = vunpack.c.h.b16 %v30
  %v192 = vunpack.c.l.b16 %v31
  %v193 = vunpack.c.h.b16 %v31
  %v194 = vunpack.c.l.b16 %v32
  %v195 = vunpack.c.h.b16 %v32
  %v196 = vunpack.c.l.b16 %v33
  %v197 = vunpack.c.h.b16 %v33
  %v198 = vunpack.c.l.b16 %v34
  %v199 = vunpack.c.h.b16 %v34
  %v200 = vunpack.c.l.b16 %v35
  %v201 = vunpack.c.h.b16 %v35
  %v202 = vunpack.c.l.b16 %v36
  %v203 = vunpack.c.h.b16 %v36
  %v204 = vunpack.c.l.b16 %v37
  %v205 = vunpack.c.h.b16 %v37
  %v206 = vunpack.c.l.b16 %v38
  %v207 = vunpack.c.h.b16 %v38
  %v208 = vunpack.c.l.b16 %v39
  %v209 = vunpack.c.h.b16 %v39
  %v210 = vunpack.c.l.b16 %v40
  %v211 = vunpack.c.h.b16 %v40
  %v212 = vunpack.c.l.b16 %v41
  %v213 = vunpack.c.h.b16 %v41
  %v214 = vunpack.c.l.b16 %v42
  %v215 = vunpack.c.h.b16 %v42
  %v216 = vunpack.c.l.b16 %v43
  %v217 = vunpack.c.h.b16 %v43
  %v218 = vunpack.c.l.b16 %v44
  %v219 = vunpack.c.h.b16 %v44
  %v220 = vunpack.c.l.b16 %v45
  %v221 = vunpack.c.h.b16 %v45
  %v222 = vunpack.c.l.b16 %v46
  %v223 = vunpack.c.h.b16 %v46
  %v224 = vunpack.c.l.b16 %v47
  %v225 = vunpack.c.h.b16 %v47
  %v226 = vunpack.c.l.b16 %v48
  %v227 = vunpack.c.h.b16 %v48
  %v228 = vunpack.c.l.b16 %v49
  %v229 = vunpack.c.h.b16 %v49
  %v230 = vunpack.c.l.b16 %v50
  %v231 = vunpack.c.h.b16 %v50
  %v232 = vunpack.c.l.b16 %v51
  %v233 = vunpack.c.h.b16 %v51
  %v234 = vunpack.c.l.b16 %v52
  %v235 = vunpack.c.h.b16 %v52
  %v236 = vunpack.c.l.b16 %v53
  %v237 = vunpack.c.h.b16 %v53
  %v238 = vunpack.c.l.b16 %v54
  %v239 = vunpack.c.h.b16 %v54
  %v240 = vunpack.c.l.b16 %v55
  %v241 = vunpack.c.h.b16 %v55
  %v242 = vunpack.c.l.b16 %v56
  %v243 = vunpack.c.h.b16 %v56
  %v244 = vunpack.c.l.b16 %v57
  %v245 = vunpack.c.h.b16 %v57
  %v246 = vpack.c.b16 %v186, %v182
  %v247 = vpack.c.b16 %v187, %v183
  %v248 = vpack.c.b16 %v188, %v184
  %v249 = vpack.c.b16 %v189, %v185
  %v250 = vpack.c.b16 %v194, %v190
  %v251 = vpack.c.b16 %v195, %v191
  %v252 = vpack.c.b16 %v196, %v192
  %v253 = vpack.c.b16 %v197, %v193
  %v254 = vpack.c.b16 %v202, %v198
  %v255 = vpack.c.b16 %v203, %v199
  %v256 = vpack.c.b16 %v204, %v200
  %v257 = vpack.c.b16 %v205, %v201
  %v258 = vpack.c.b16 %v210, %v206
  %v259 = vpack.c.b16 %v211, %v207
  %v260 = vpack.c.b16 %v212, %v208
  %v261 = vpack.c.b16 %v213, %v209
  %v262 = vpack.c.b16 %v218, %v214
  %v263 = vpack.c.b16 %v219, %v215
  %v264 = vpack.c.b16 %v220, %v216
  %v265 = vpack.c.b16 %v221, %v217
  %v266 = vpack.c.b16 %v226, %v222
  %v267 = vpack.c.b16 %v227, %v223
  %v268 = vpack.c.b16 %v228, %v224
  %v269 = vpack.c.b16 %v229, %v225
  %v270 = vpack.c.b16 %v234, %v230
  %v271 = vpack.c.b16 %v235, %v231
  %v272 = vpack.c.b16 %v236, %v232
  %v273 = vpack.c.b16 %v237, %v233
  %v274 = vpack.c.b16 %v242, %v238
  %v275 = vpack.c.b16 %v243, %v239
  %v276 = vpack.c.b16 %v244, %v240
  %v277 = vpack.c.b16 %v245, %v241
  %310 = vmatprep.subr.bf16.mxu0 %v247
  %311 = vmatpush1.bf16.msra.mxu0 %v246
  %312 = vmatprep.subr.bf16.mxu0 %v251
  %313 = vmatpush1.bf16.msra.mxu0 %v250
  %314 = vmatprep.subr.bf16.mxu0 %v255
  %315 = vmatpush1.bf16.msra.mxu0 %v254
  %316 = vmatprep.subr.bf16.mxu0 %v259
  %317 = vmatpush1.bf16.msra.mxu0 %v258
  %318 = vmatprep.subr.bf16.mxu0 %v263
  %319 = vmatpush1.bf16.msra.mxu0 %v262
  %320 = vmatprep.subr.bf16.mxu0 %v267
  %321 = vmatpush1.bf16.msra.mxu0 %v266
  %322 = vmatprep.subr.bf16.mxu0 %v271
  %323 = vmatpush1.bf16.msra.mxu0 %v270
  %324 = vmatprep.subr.bf16.mxu0 %v275
  %325 = vmatpush1.bf16.msra.mxu0 %v274
  %326 = vmatprep.subr.bf16.mxu0 0
  %327 = vmatpush1.bf16.msra.mxu0 0
  %328 = vmatprep.subr.bf16.mxu0 0
  %329 = vmatpush1.bf16.msra.mxu0 0
  %330 = vmatprep.subr.bf16.mxu0 0
  %331 = vmatpush1.bf16.msra.mxu0 0
  %332 = vmatprep.subr.bf16.mxu0 0
  %333 = vmatpush1.bf16.msra.mxu0 0
  %334 = vmatprep.subr.bf16.mxu0 0
  %335 = vmatpush1.bf16.msra.mxu0 0
  %336 = vmatprep.subr.bf16.mxu0 0
  %337 = vmatpush1.bf16.msra.mxu0 0
  %338 = vmatprep.subr.bf16.mxu0 0
  %339 = vmatpush1.bf16.msra.mxu0 0
  %340 = vmatprep.subr.bf16.mxu0 0
  %341 = vmatpush1.bf16.msra.mxu0 0
  %342 = vmatprep.mubr.bf16.mxu0 0
  %343 = vmatmul.mubr.bf16.gmra.mrb[0].mxu0 %v144
  %v344 = vpop.f32.mrb[0].mxu0
  %v345 = vadd.f32 0.0, %v344
  %v346 = vpop.f32.mrb[0].mxu0
  %v347 = vadd.f32 0.0, %v346
  %v348 = vpop.f32.mrb[0].mxu0
  %v349 = vpop.f32.mrb[0].mxu0
  %350 = vdwg.mxu0
  %351 = vmatprep.subr.bf16.mxu0 %v249
  %352 = vmatpush1.bf16.msra.mxu0 %v248
  %353 = vmatprep.subr.bf16.mxu0 %v253
  %354 = vmatpush1.bf16.msra.mxu0 %v252
  %355 = vmatprep.subr.bf16.mxu0 %v257
  %356 = vmatpush1.bf16.msra.mxu0 %v256
  %357 = vmatprep.subr.bf16.mxu0 %v261
  %358 = vmatpush1.bf16.msra.mxu0 %v260
  %359 = vmatprep.subr.bf16.mxu0 %v265
  %360 = vmatpush1.bf16.msra.mxu0 %v264
  %361 = vmatprep.subr.bf16.mxu0 %v269
  %362 = vmatpush1.bf16.msra.mxu0 %v268
  %363 = vmatprep.subr.bf16.mxu0 %v273
  %364 = vmatpush1.bf16.msra.mxu0 %v272
  %365 = vmatprep.subr.bf16.mxu0 %v277
  %366 = vmatpush1.bf16.msra.mxu0 %v276
  %367 = vmatprep.subr.bf16.mxu0 0
  %368 = vmatpush1.bf16.msra.mxu0 0
  %369 = vmatprep.subr.bf16.mxu0 0
  %370 = vmatpush1.bf16.msra.mxu0 0
  %371 = vmatprep.subr.bf16.mxu0 0
  %372 = vmatpush1.bf16.msra.mxu0 0
  %373 = vmatprep.subr.bf16.mxu0 0
  %374 = vmatpush1.bf16.msra.mxu0 0
  %375 = vmatprep.subr.bf16.mxu0 0
  %376 = vmatpush1.bf16.msra.mxu0 0
  %377 = vmatprep.subr.bf16.mxu0 0
  %378 = vmatpush1.bf16.msra.mxu0 0
  %379 = vmatprep.subr.bf16.mxu0 0
  %380 = vmatpush1.bf16.msra.mxu0 0
  %381 = vmatprep.subr.bf16.mxu0 0
  %382 = vmatpush1.bf16.msra.mxu0 0
  %383 = vmatprep.mubr.bf16.mxu0 0
  %384 = vmatmul.mubr.bf16.gmra.mrb[0].mxu0 %v144
  %v385 = vpop.f32.mrb[0].mxu0
  %v386 = vadd.f32 0.0, %v385
  %v387 = vpop.f32.mrb[0].mxu0
  %v388 = vadd.f32 0.0, %v387
  %v389 = vpop.f32.mrb[0].mxu0
  %v390 = vpop.f32.mrb[0].mxu0
  %391 = vdwg.mxu0
  %v396 = vcombine.low %v345, %v347
  %v397 = vcombine.low %v386, %v388
  %v399 = vunpack.c.l.s4 1983009808
  %v400 = vunpack.c.0.s8 %v399
  %v401 = vlaneseq
  %v402 = vshrl.u32 %v401, 7
  %v403 = vsub.s32 %v400, %v402
  %v404 = vrot.slane %v396, %v403
  %v406 = vunpack.c.l.s4 1983009808
  %v407 = vunpack.c.0.s8 %v406
  %v408 = vlaneseq
  %v409 = vshrl.u32 %v408, 7
  %v410 = vsub.s32 %v407, %v409
  %v411 = vrot.slane %v397, %v410
  %v412 = vcombine.low %v404, %v411
  %v414 = vadd.f32 %v149, %v412
  %v415 = vxor.u32 %v414, 2147483648
  %v416 = vmul.f32 %v415, 1.442695
  %v417 = vpow.pop %v416
  %v418 = vadd.f32 %v417, 1.0
  %v419 = vrcp.pop %v418
  %v420 = vmul.f32 1.0, %v419
  %v422 = vrot.slane %v414, 2
  %v424 = vxor.u32 %v422, 2147483648
  %v425 = vmul.f32 %v424, 1.442695
  %v426 = vpow.pop %v425
  %v427 = vadd.f32 %v426, 1.0
  %v428 = vrcp.pop %v427
  %v429 = vmul.f32 1.0, %v428
  %v430 = vrot.slane %v414, 4
  %v432 = vtanh.pop %v430
  %v433 = vrot.slane %v414, 6
  %v435 = vxor.u32 %v433, 2147483648
  %v436 = vmul.f32 %v435, 1.442695
  %v437 = vpow.pop %v436
  %v438 = vadd.f32 %v437, 1.0
  %v439 = vrcp.pop %v438
  %v440 = vmul.f32 1.0, %v439
  %v441 = vmul.f32 %v429, %v145
  %v442 = vmul.f32 %v420, %v432
  %v443 = vadd.f32 %v441, %v442
  %v444 = vtanh.pop %v443
  %v445 = vmul.f32 %v440, %v444
  %v446 = vpack.c.bf16 %v445, %v445
  %v447 = vpack.c.bf16 %v146, %v146
  %v512 = vunpack.c.l.b16 %v58
  %v513 = vunpack.c.h.b16 %v58
  %v514 = vunpack.c.l.b16 %v59
  %v515 = vunpack.c.h.b16 %v59
  %v516 = vunpack.c.l.b16 %v60
  %v517 = vunpack.c.h.b16 %v60
  %v518 = vunpack.c.l.b16 %v61
  %v519 = vunpack.c.h.b16 %v61
  %v520 = vunpack.c.l.b16 %v62
  %v521 = vunpack.c.h.b16 %v62
  %v522 = vunpack.c.l.b16 %v63
  %v523 = vunpack.c.h.b16 %v63
  %v524 = vunpack.c.l.b16 %v64
  %v525 = vunpack.c.h.b16 %v64
  %v526 = vunpack.c.l.b16 %v65
  %v527 = vunpack.c.h.b16 %v65
  %v528 = vunpack.c.l.b16 %v66
  %v529 = vunpack.c.h.b16 %v66
  %v530 = vunpack.c.l.b16 %v67
  %v531 = vunpack.c.h.b16 %v67
  %v532 = vunpack.c.l.b16 %v68
  %v533 = vunpack.c.h.b16 %v68
  %v534 = vunpack.c.l.b16 %v69
  %v535 = vunpack.c.h.b16 %v69
  %v536 = vunpack.c.l.b16 %v70
  %v537 = vunpack.c.h.b16 %v70
  %v538 = vunpack.c.l.b16 %v71
  %v539 = vunpack.c.h.b16 %v71
  %v540 = vunpack.c.l.b16 %v72
  %v541 = vunpack.c.h.b16 %v72
  %v542 = vunpack.c.l.b16 %v73
  %v543 = vunpack.c.h.b16 %v73
  %v544 = vunpack.c.l.b16 %v74
  %v545 = vunpack.c.h.b16 %v74
  %v546 = vunpack.c.l.b16 %v75
  %v547 = vunpack.c.h.b16 %v75
  %v548 = vunpack.c.l.b16 %v76
  %v549 = vunpack.c.h.b16 %v76
  %v550 = vunpack.c.l.b16 %v77
  %v551 = vunpack.c.h.b16 %v77
  %v552 = vunpack.c.l.b16 %v78
  %v553 = vunpack.c.h.b16 %v78
  %v554 = vunpack.c.l.b16 %v79
  %v555 = vunpack.c.h.b16 %v79
  %v556 = vunpack.c.l.b16 %v80
  %v557 = vunpack.c.h.b16 %v80
  %v558 = vunpack.c.l.b16 %v81
  %v559 = vunpack.c.h.b16 %v81
  %v560 = vunpack.c.l.b16 %v82
  %v561 = vunpack.c.h.b16 %v82
  %v562 = vunpack.c.l.b16 %v83
  %v563 = vunpack.c.h.b16 %v83
  %v564 = vunpack.c.l.b16 %v84
  %v565 = vunpack.c.h.b16 %v84
  %v566 = vunpack.c.l.b16 %v85
  %v567 = vunpack.c.h.b16 %v85
  %v568 = vunpack.c.l.b16 %v86
  %v569 = vunpack.c.h.b16 %v86
  %v570 = vunpack.c.l.b16 %v87
  %v571 = vunpack.c.h.b16 %v87
  %v572 = vunpack.c.l.b16 %v88
  %v573 = vunpack.c.h.b16 %v88
  %v574 = vunpack.c.l.b16 %v89
  %v575 = vunpack.c.h.b16 %v89
  %v576 = vunpack.c.l.b16 %v90
  %v577 = vunpack.c.h.b16 %v90
  %v578 = vunpack.c.l.b16 %v91
  %v579 = vunpack.c.h.b16 %v91
  %v580 = vunpack.c.l.b16 %v92
  %v581 = vunpack.c.h.b16 %v92
  %v582 = vunpack.c.l.b16 %v93
  %v583 = vunpack.c.h.b16 %v93
  %v584 = vunpack.c.l.b16 %v94
  %v585 = vunpack.c.h.b16 %v94
  %v586 = vunpack.c.l.b16 %v95
  %v587 = vunpack.c.h.b16 %v95
  %v588 = vunpack.c.l.b16 %v96
  %v589 = vunpack.c.h.b16 %v96
  %v590 = vunpack.c.l.b16 %v97
  %v591 = vunpack.c.h.b16 %v97
  %v592 = vunpack.c.l.b16 %v98
  %v593 = vunpack.c.h.b16 %v98
  %v594 = vunpack.c.l.b16 %v99
  %v595 = vunpack.c.h.b16 %v99
  %v596 = vunpack.c.l.b16 %v100
  %v597 = vunpack.c.h.b16 %v100
  %v598 = vunpack.c.l.b16 %v101
  %v599 = vunpack.c.h.b16 %v101
  %v600 = vunpack.c.l.b16 %v102
  %v601 = vunpack.c.h.b16 %v102
  %v602 = vunpack.c.l.b16 %v103
  %v603 = vunpack.c.h.b16 %v103
  %v604 = vunpack.c.l.b16 %v104
  %v605 = vunpack.c.h.b16 %v104
  %v606 = vunpack.c.l.b16 %v105
  %v607 = vunpack.c.h.b16 %v105
  %v608 = vunpack.c.l.b16 %v106
  %v609 = vunpack.c.h.b16 %v106
  %v610 = vunpack.c.l.b16 %v107
  %v611 = vunpack.c.h.b16 %v107
  %v612 = vunpack.c.l.b16 %v108
  %v613 = vunpack.c.h.b16 %v108
  %v614 = vunpack.c.l.b16 %v109
  %v615 = vunpack.c.h.b16 %v109
  %v616 = vunpack.c.l.b16 %v110
  %v617 = vunpack.c.h.b16 %v110
  %v618 = vunpack.c.l.b16 %v111
  %v619 = vunpack.c.h.b16 %v111
  %v620 = vunpack.c.l.b16 %v112
  %v621 = vunpack.c.h.b16 %v112
  %v622 = vunpack.c.l.b16 %v113
  %v623 = vunpack.c.h.b16 %v113
  %v624 = vunpack.c.l.b16 %v114
  %v625 = vunpack.c.h.b16 %v114
  %v626 = vunpack.c.l.b16 %v115
  %v627 = vunpack.c.h.b16 %v115
  %v628 = vunpack.c.l.b16 %v116
  %v629 = vunpack.c.h.b16 %v116
  %v630 = vunpack.c.l.b16 %v117
  %v631 = vunpack.c.h.b16 %v117
  %v632 = vunpack.c.l.b16 %v118
  %v633 = vunpack.c.h.b16 %v118
  %v634 = vunpack.c.l.b16 %v119
  %v635 = vunpack.c.h.b16 %v119
  %v636 = vunpack.c.l.b16 %v120
  %v637 = vunpack.c.h.b16 %v120
  %v638 = vunpack.c.l.b16 %v121
  %v639 = vunpack.c.h.b16 %v121
  %v640 = vpack.c.b16 %v516, %v512
  %v641 = vpack.c.b16 %v517, %v513
  %v642 = vpack.c.b16 %v518, %v514
  %v643 = vpack.c.b16 %v519, %v515
  %v644 = vpack.c.b16 %v524, %v520
  %v645 = vpack.c.b16 %v525, %v521
  %v646 = vpack.c.b16 %v526, %v522
  %v647 = vpack.c.b16 %v527, %v523
  %v648 = vpack.c.b16 %v532, %v528
  %v649 = vpack.c.b16 %v533, %v529
  %v650 = vpack.c.b16 %v534, %v530
  %v651 = vpack.c.b16 %v535, %v531
  %v652 = vpack.c.b16 %v540, %v536
  %v653 = vpack.c.b16 %v541, %v537
  %v654 = vpack.c.b16 %v542, %v538
  %v655 = vpack.c.b16 %v543, %v539
  %v656 = vpack.c.b16 %v548, %v544
  %v657 = vpack.c.b16 %v549, %v545
  %v658 = vpack.c.b16 %v550, %v546
  %v659 = vpack.c.b16 %v551, %v547
  %v660 = vpack.c.b16 %v556, %v552
  %v661 = vpack.c.b16 %v557, %v553
  %v662 = vpack.c.b16 %v558, %v554
  %v663 = vpack.c.b16 %v559, %v555
  %v664 = vpack.c.b16 %v564, %v560
  %v665 = vpack.c.b16 %v565, %v561
  %v666 = vpack.c.b16 %v566, %v562
  %v667 = vpack.c.b16 %v567, %v563
  %v668 = vpack.c.b16 %v572, %v568
  %v669 = vpack.c.b16 %v573, %v569
  %v670 = vpack.c.b16 %v574, %v570
  %v671 = vpack.c.b16 %v575, %v571
  %v672 = vpack.c.b16 %v580, %v576
  %v673 = vpack.c.b16 %v581, %v577
  %v674 = vpack.c.b16 %v582, %v578
  %v675 = vpack.c.b16 %v583, %v579
  %v676 = vpack.c.b16 %v588, %v584
  %v677 = vpack.c.b16 %v589, %v585
  %v678 = vpack.c.b16 %v590, %v586
  %v679 = vpack.c.b16 %v591, %v587
  %v680 = vpack.c.b16 %v596, %v592
  %v681 = vpack.c.b16 %v597, %v593
  %v682 = vpack.c.b16 %v598, %v594
  %v683 = vpack.c.b16 %v599, %v595
  %v684 = vpack.c.b16 %v604, %v600
  %v685 = vpack.c.b16 %v605, %v601
  %v686 = vpack.c.b16 %v606, %v602
  %v687 = vpack.c.b16 %v607, %v603
  %v688 = vpack.c.b16 %v612, %v608
  %v689 = vpack.c.b16 %v613, %v609
  %v690 = vpack.c.b16 %v614, %v610
  %v691 = vpack.c.b16 %v615, %v611
  %v692 = vpack.c.b16 %v620, %v616
  %v693 = vpack.c.b16 %v621, %v617
  %v694 = vpack.c.b16 %v622, %v618
  %v695 = vpack.c.b16 %v623, %v619
  %v696 = vpack.c.b16 %v628, %v624
  %v697 = vpack.c.b16 %v629, %v625
  %v698 = vpack.c.b16 %v630, %v626
  %v699 = vpack.c.b16 %v631, %v627
  %v700 = vpack.c.b16 %v636, %v632
  %v701 = vpack.c.b16 %v637, %v633
  %v702 = vpack.c.b16 %v638, %v634
  %v703 = vpack.c.b16 %v639, %v635
  %768 = vmatprep.subr.bf16.mxu0 %v641
  %769 = vmatpush1.bf16.msra.mxu0 %v640
  %770 = vmatprep.subr.bf16.mxu0 %v645
  %771 = vmatpush1.bf16.msra.mxu0 %v644
  %772 = vmatprep.subr.bf16.mxu0 %v649
  %773 = vmatpush1.bf16.msra.mxu0 %v648
  %774 = vmatprep.subr.bf16.mxu0 %v653
  %775 = vmatpush1.bf16.msra.mxu0 %v652
  %776 = vmatprep.subr.bf16.mxu0 %v657
  %777 = vmatpush1.bf16.msra.mxu0 %v656
  %778 = vmatprep.subr.bf16.mxu0 %v661
  %779 = vmatpush1.bf16.msra.mxu0 %v660
  %780 = vmatprep.subr.bf16.mxu0 %v665
  %781 = vmatpush1.bf16.msra.mxu0 %v664
  %782 = vmatprep.subr.bf16.mxu0 %v669
  %783 = vmatpush1.bf16.msra.mxu0 %v668
  %784 = vmatprep.subr.bf16.mxu0 %v673
  %785 = vmatpush1.bf16.msra.mxu0 %v672
  %786 = vmatprep.subr.bf16.mxu0 %v677
  %787 = vmatpush1.bf16.msra.mxu0 %v676
  %788 = vmatprep.subr.bf16.mxu0 %v681
  %789 = vmatpush1.bf16.msra.mxu0 %v680
  %790 = vmatprep.subr.bf16.mxu0 %v685
  %791 = vmatpush1.bf16.msra.mxu0 %v684
  %792 = vmatprep.subr.bf16.mxu0 %v689
  %793 = vmatpush1.bf16.msra.mxu0 %v688
  %794 = vmatprep.subr.bf16.mxu0 %v693
  %795 = vmatpush1.bf16.msra.mxu0 %v692
  %796 = vmatprep.subr.bf16.mxu0 %v697
  %797 = vmatpush1.bf16.msra.mxu0 %v696
  %798 = vmatprep.subr.bf16.mxu0 %v701
  %799 = vmatpush1.bf16.msra.mxu0 %v700
  %800 = vmatprep.mubr.bf16.mxu0 %v447
  %801 = vmatmul.mubr.bf16.gmra.mrb[0].mxu0 %v446
  %v802 = vpop.f32.mrb[0].mxu0
  %v803 = vadd.f32 %v127, %v802
  %v804 = vpop.f32.mrb[0].mxu0
  %v805 = vadd.f32 %v131, %v804
  %v806 = vpop.f32.mrb[0].mxu0
  %v807 = vpop.f32.mrb[0].mxu0
  %808 = vdwg.mxu0
  %809 = vmatprep.subr.bf16.mxu0 %v643
  %810 = vmatpush1.bf16.msra.mxu0 %v642
  %811 = vmatprep.subr.bf16.mxu0 %v647
  %812 = vmatpush1.bf16.msra.mxu0 %v646
  %813 = vmatprep.subr.bf16.mxu0 %v651
  %814 = vmatpush1.bf16.msra.mxu0 %v650
  %815 = vmatprep.subr.bf16.mxu0 %v655
  %816 = vmatpush1.bf16.msra.mxu0 %v654
  %817 = vmatprep.subr.bf16.mxu0 %v659
  %818 = vmatpush1.bf16.msra.mxu0 %v658
  %819 = vmatprep.subr.bf16.mxu0 %v663
  %820 = vmatpush1.bf16.msra.mxu0 %v662
  %821 = vmatprep.subr.bf16.mxu0 %v667
  %822 = vmatpush1.bf16.msra.mxu0 %v666
  %823 = vmatprep.subr.bf16.mxu0 %v671
  %824 = vmatpush1.bf16.msra.mxu0 %v670
  %825 = vmatprep.subr.bf16.mxu0 %v675
  %826 = vmatpush1.bf16.msra.mxu0 %v674
  %827 = vmatprep.subr.bf16.mxu0 %v679
  %828 = vmatpush1.bf16.msra.mxu0 %v678
  %829 = vmatprep.subr.bf16.mxu0 %v683
  %830 = vmatpush1.bf16.msra.mxu0 %v682
  %831 = vmatprep.subr.bf16.mxu0 %v687
  %832 = vmatpush1.bf16.msra.mxu0 %v686
  %833 = vmatprep.subr.bf16.mxu0 %v691
  %834 = vmatpush1.bf16.msra.mxu0 %v690
  %835 = vmatprep.subr.bf16.mxu0 %v695
  %836 = vmatpush1.bf16.msra.mxu0 %v694
  %837 = vmatprep.subr.bf16.mxu0 %v699
  %838 = vmatpush1.bf16.msra.mxu0 %v698
  %839 = vmatprep.subr.bf16.mxu0 %v703
  %840 = vmatpush1.bf16.msra.mxu0 %v702
  %841 = vmatprep.mubr.bf16.mxu0 %v447
  %842 = vmatmul.mubr.bf16.gmra.mrb[0].mxu0 %v446
  %v843 = vpop.f32.mrb[0].mxu0
  %v844 = vadd.f32 %v135, %v843
  %v845 = vpop.f32.mrb[0].mxu0
  %v846 = vadd.f32 %v139, %v845
  %v847 = vpop.f32.mrb[0].mxu0
  %v848 = vpop.f32.mrb[0].mxu0
  %849 = vdwg.mxu0
  %v850 = vxor.u32 %v803, 2147483648
  %v851 = vmul.f32 %v850, 1.442695
  %v852 = vpow.pop %v851
  %v853 = vadd.f32 %v852, 1.0
  %v854 = vrcp.pop %v853
  %v855 = vmul.f32 1.0, %v854
  %v856 = vxor.u32 %v805, 2147483648
  %v857 = vmul.f32 %v856, 1.442695
  %v858 = vpow.pop %v857
  %v859 = vadd.f32 %v858, 1.0
  %v860 = vrcp.pop %v859
  %v861 = vmul.f32 1.0, %v860
  %v862 = vtanh.pop %v844
  %v863 = vxor.u32 %v846, 2147483648
  %v864 = vmul.f32 %v863, 1.442695
  %v865 = vpow.pop %v864
  %v866 = vadd.f32 %v865, 1.0
  %v867 = vrcp.pop %v866
  %v868 = vmul.f32 1.0, %v867
  %v869 = vmul.f32 %v861, %v147
  %v870 = vmul.f32 %v855, %v862
  %v871 = vadd.f32 %v869, %v870
  %v872 = vtanh.pop %v871
  %v873 = vmul.f32 %v868, %v872
  %s874 = scalar_lea.vmem %s0, 4
  %v875 = vld [vmem:[%s874] sm:$0xf]
  %v876 = vunpack.c.l.bf16 %v875
  %877 = vmatprep.subr.bf16.mxu0 %v247
  %878 = vmatpush1.bf16.msra.mxu0 %v246
  %879 = vmatprep.subr.bf16.mxu0 %v251
  %880 = vmatpush1.bf16.msra.mxu0 %v250
  %881 = vmatprep.subr.bf16.mxu0 %v255
  %882 = vmatpush1.bf16.msra.mxu0 %v254
  %883 = vmatprep.subr.bf16.mxu0 %v259
  %884 = vmatpush1.bf16.msra.mxu0 %v258
  %885 = vmatprep.subr.bf16.mxu0 %v263
  %886 = vmatpush1.bf16.msra.mxu0 %v262
  %887 = vmatprep.subr.bf16.mxu0 %v267
  %888 = vmatpush1.bf16.msra.mxu0 %v266
  %889 = vmatprep.subr.bf16.mxu0 %v271
  %890 = vmatpush1.bf16.msra.mxu0 %v270
  %891 = vmatprep.subr.bf16.mxu0 %v275
  %892 = vmatpush1.bf16.msra.mxu0 %v274
  %893 = vmatprep.subr.bf16.mxu0 0
  %894 = vmatpush1.bf16.msra.mxu0 0
  %895 = vmatprep.subr.bf16.mxu0 0
  %896 = vmatpush1.bf16.msra.mxu0 0
  %897 = vmatprep.subr.bf16.mxu0 0
  %898 = vmatpush1.bf16.msra.mxu0 0
  %899 = vmatprep.subr.bf16.mxu0 0
  %900 = vmatpush1.bf16.msra.mxu0 0
  %901 = vmatprep.subr.bf16.mxu0 0
  %902 = vmatpush1.bf16.msra.mxu0 0
  %903 = vmatprep.subr.bf16.mxu0 0
  %904 = vmatpush1.bf16.msra.mxu0 0
  %905 = vmatprep.subr.bf16.mxu0 0
  %906 = vmatpush1.bf16.msra.mxu0 0
  %907 = vmatprep.subr.bf16.mxu0 0
  %908 = vmatpush1.bf16.msra.mxu0 0
  %909 = vmatprep.mubr.bf16.mxu0 0
  %910 = vmatmul.mubr.bf16.gmra.mrb[0].mxu0 %v446
  %v911 = vpop.f32.mrb[0].mxu0
  %v912 = vadd.f32 0.0, %v911
  %v913 = vpop.f32.mrb[0].mxu0
  %v914 = vadd.f32 0.0, %v913
  %v915 = vpop.f32.mrb[0].mxu0
  %v916 = vpop.f32.mrb[0].mxu0
  %917 = vdwg.mxu0
  %918 = vmatprep.subr.bf16.mxu0 %v249
  %919 = vmatpush1.bf16.msra.mxu0 %v248
  %920 = vmatprep.subr.bf16.mxu0 %v253
  %921 = vmatpush1.bf16.msra.mxu0 %v252
  %922 = vmatprep.subr.bf16.mxu0 %v257
  %923 = vmatpush1.bf16.msra.mxu0 %v256
  %924 = vmatprep.subr.bf16.mxu0 %v261
  %925 = vmatpush1.bf16.msra.mxu0 %v260
  %926 = vmatprep.subr.bf16.mxu0 %v265
  %927 = vmatpush1.bf16.msra.mxu0 %v264
  %928 = vmatprep.subr.bf16.mxu0 %v269
  %929 = vmatpush1.bf16.msra.mxu0 %v268
  %930 = vmatprep.subr.bf16.mxu0 %v273
  %931 = vmatpush1.bf16.msra.mxu0 %v272
  %932 = vmatprep.subr.bf16.mxu0 %v277
  %933 = vmatpush1.bf16.msra.mxu0 %v276
  %934 = vmatprep.subr.bf16.mxu0 0
  %935 = vmatpush1.bf16.msra.mxu0 0
  %936 = vmatprep.subr.bf16.mxu0 0
  %937 = vmatpush1.bf16.msra.mxu0 0
  %938 = vmatprep.subr.bf16.mxu0 0
  %939 = vmatpush1.bf16.msra.mxu0 0
  %940 = vmatprep.subr.bf16.mxu0 0
  %941 = vmatpush1.bf16.msra.mxu0 0
  %942 = vmatprep.subr.bf16.mxu0 0
  %943 = vmatpush1.bf16.msra.mxu0 0
  %944 = vmatprep.subr.bf16.mxu0 0
  %945 = vmatpush1.bf16.msra.mxu0 0
  %946 = vmatprep.subr.bf16.mxu0 0
  %947 = vmatpush1.bf16.msra.mxu0 0
  %948 = vmatprep.subr.bf16.mxu0 0
  %949 = vmatpush1.bf16.msra.mxu0 0
  %950 = vmatprep.mubr.bf16.mxu0 0
  %951 = vmatmul.mubr.bf16.gmra.mrb[0].mxu0 %v446
  %v952 = vpop.f32.mrb[0].mxu0
  %v953 = vadd.f32 0.0, %v952
  %v954 = vpop.f32.mrb[0].mxu0
  %v955 = vadd.f32 0.0, %v954
  %v956 = vpop.f32.mrb[0].mxu0
  %v957 = vpop.f32.mrb[0].mxu0
  %958 = vdwg.mxu0
  %v963 = vcombine.low %v912, %v914
  %v964 = vcombine.low %v953, %v955
  %v966 = vunpack.c.l.s4 1983009808
  %v967 = vunpack.c.0.s8 %v966
  %v968 = vlaneseq
  %v969 = vshrl.u32 %v968, 7
  %v970 = vsub.s32 %v967, %v969
  %v971 = vrot.slane %v963, %v970
  %v973 = vunpack.c.l.s4 1983009808
  %v974 = vunpack.c.0.s8 %v973
  %v975 = vlaneseq
  %v976 = vshrl.u32 %v975, 7
  %v977 = vsub.s32 %v974, %v976
  %v978 = vrot.slane %v964, %v977
  %v979 = vcombine.low %v971, %v978
  %v981 = vadd.f32 %v876, %v979
  %v982 = vxor.u32 %v981, 2147483648
  %v983 = vmul.f32 %v982, 1.442695
  %v984 = vpow.pop %v983
  %v985 = vadd.f32 %v984, 1.0
  %v986 = vrcp.pop %v985
  %v987 = vmul.f32 1.0, %v986
  %v989 = vrot.slane %v981, 2
  %v991 = vxor.u32 %v989, 2147483648
  %v992 = vmul.f32 %v991, 1.442695
  %v993 = vpow.pop %v992
  %v994 = vadd.f32 %v993, 1.0
  %v995 = vrcp.pop %v994
  %v996 = vmul.f32 1.0, %v995
  %v997 = vrot.slane %v981, 4
  %v999 = vtanh.pop %v997
  %v1000 = vrot.slane %v981, 6
  %v1002 = vxor.u32 %v1000, 2147483648
  %v1003 = vmul.f32 %v1002, 1.442695
  %v1004 = vpow.pop %v1003
  %v1005 = vadd.f32 %v1004, 1.0
  %v1006 = vrcp.pop %v1005
  %v1007 = vmul.f32 1.0, %v1006
  %v1008 = vmul.f32 %v996, %v443
  %v1009 = vmul.f32 %v987, %v999
  %v1010 = vadd.f32 %v1008, %v1009
  %v1011 = vtanh.pop %v1010
  %v1012 = vmul.f32 %v1007, %v1011
  %v1013 = vpack.c.bf16 %v1012, %v1012
  %v1014 = vpack.c.bf16 %v873, %v873
  %1015 = vmatprep.subr.bf16.mxu0 %v641
  %1016 = vmatpush1.bf16.msra.mxu0 %v640
  %1017 = vmatprep.subr.bf16.mxu0 %v645
  %1018 = vmatpush1.bf16.msra.mxu0 %v644
  %1019 = vmatprep.subr.bf16.mxu0 %v649
  %1020 = vmatpush1.bf16.msra.mxu0 %v648
  %1021 = vmatprep.subr.bf16.mxu0 %v653
  %1022 = vmatpush1.bf16.msra.mxu0 %v652
  %1023 = vmatprep.subr.bf16.mxu0 %v657
  %1024 = vmatpush1.bf16.msra.mxu0 %v656
  %1025 = vmatprep.subr.bf16.mxu0 %v661
  %1026 = vmatpush1.bf16.msra.mxu0 %v660
  %1027 = vmatprep.subr.bf16.mxu0 %v665
  %1028 = vmatpush1.bf16.msra.mxu0 %v664
  %1029 = vmatprep.subr.bf16.mxu0 %v669
  %1030 = vmatpush1.bf16.msra.mxu0 %v668
  %1031 = vmatprep.subr.bf16.mxu0 %v673
  %1032 = vmatpush1.bf16.msra.mxu0 %v672
  %1033 = vmatprep.subr.bf16.mxu0 %v677
  %1034 = vmatpush1.bf16.msra.mxu0 %v676
  %1035 = vmatprep.subr.bf16.mxu0 %v681
  %1036 = vmatpush1.bf16.msra.mxu0 %v680
  %1037 = vmatprep.subr.bf16.mxu0 %v685
  %1038 = vmatpush1.bf16.msra.mxu0 %v684
  %1039 = vmatprep.subr.bf16.mxu0 %v689
  %1040 = vmatpush1.bf16.msra.mxu0 %v688
  %1041 = vmatprep.subr.bf16.mxu0 %v693
  %1042 = vmatpush1.bf16.msra.mxu0 %v692
  %1043 = vmatprep.subr.bf16.mxu0 %v697
  %1044 = vmatpush1.bf16.msra.mxu0 %v696
  %1045 = vmatprep.subr.bf16.mxu0 %v701
  %1046 = vmatpush1.bf16.msra.mxu0 %v700
  %1047 = vmatprep.mubr.bf16.mxu0 %v1014
  %1048 = vmatmul.mubr.bf16.gmra.mrb[0].mxu0 %v1013
  %v1049 = vpop.f32.mrb[0].mxu0
  %v1050 = vadd.f32 %v127, %v1049
  %v1051 = vpop.f32.mrb[0].mxu0
  %v1052 = vadd.f32 %v131, %v1051
  %v1053 = vpop.f32.mrb[0].mxu0
  %v1054 = vpop.f32.mrb[0].mxu0
  %1055 = vdwg.mxu0
  %1056 = vmatprep.subr.bf16.mxu0 %v643
  %1057 = vmatpush1.bf16.msra.mxu0 %v642
  %1058 = vmatprep.subr.bf16.mxu0 %v647
  %1059 = vmatpush1.bf16.msra.mxu0 %v646
  %1060 = vmatprep.subr.bf16.mxu0 %v651
  %1061 = vmatpush1.bf16.msra.mxu0 %v650
  %1062 = vmatprep.subr.bf16.mxu0 %v655
  %1063 = vmatpush1.bf16.msra.mxu0 %v654
  %1064 = vmatprep.subr.bf16.mxu0 %v659
  %1065 = vmatpush1.bf16.msra.mxu0 %v658
  %1066 = vmatprep.subr.bf16.mxu0 %v663
  %1067 = vmatpush1.bf16.msra.mxu0 %v662
  %1068 = vmatprep.subr.bf16.mxu0 %v667
  %1069 = vmatpush1.bf16.msra.mxu0 %v666
  %1070 = vmatprep.subr.bf16.mxu0 %v671
  %1071 = vmatpush1.bf16.msra.mxu0 %v670
  %1072 = vmatprep.subr.bf16.mxu0 %v675
  %1073 = vmatpush1.bf16.msra.mxu0 %v674
  %1074 = vmatprep.subr.bf16.mxu0 %v679
  %1075 = vmatpush1.bf16.msra.mxu0 %v678
  %1076 = vmatprep.subr.bf16.mxu0 %v683
  %1077 = vmatpush1.bf16.msra.mxu0 %v682
  %1078 = vmatprep.subr.bf16.mxu0 %v687
  %1079 = vmatpush1.bf16.msra.mxu0 %v686
  %1080 = vmatprep.subr.bf16.mxu0 %v691
  %1081 = vmatpush1.bf16.msra.mxu0 %v690
  %1082 = vmatprep.subr.bf16.mxu0 %v695
  %1083 = vmatpush1.bf16.msra.mxu0 %v694
  %1084 = vmatprep.subr.bf16.mxu0 %v699
  %1085 = vmatpush1.bf16.msra.mxu0 %v698
  %1086 = vmatprep.subr.bf16.mxu0 %v703
  %1087 = vmatpush1.bf16.msra.mxu0 %v702
  %1088 = vmatprep.mubr.bf16.mxu0 %v1014
  %1089 = vmatmul.mubr.bf16.gmra.mrb[0].mxu0 %v1013
  %v1090 = vpop.f32.mrb[0].mxu0
  %v1091 = vadd.f32 %v135, %v1090
  %v1092 = vpop.f32.mrb[0].mxu0
  %v1093 = vadd.f32 %v139, %v1092
  %v1094 = vpop.f32.mrb[0].mxu0
  %v1095 = vpop.f32.mrb[0].mxu0
  %1096 = vdwg.mxu0
  %v1097 = vxor.u32 %v1050, 2147483648
  %v1098 = vmul.f32 %v1097, 1.442695
  %v1099 = vpow.pop %v1098
  %v1100 = vadd.f32 %v1099, 1.0
  %v1101 = vrcp.pop %v1100
  %v1102 = vmul.f32 1.0, %v1101
  %v1103 = vxor.u32 %v1052, 2147483648
  %v1104 = vmul.f32 %v1103, 1.442695
  %v1105 = vpow.pop %v1104
  %v1106 = vadd.f32 %v1105, 1.0
  %v1107 = vrcp.pop %v1106
  %v1108 = vmul.f32 1.0, %v1107
  %v1109 = vtanh.pop %v1091
  %v1110 = vxor.u32 %v1093, 2147483648
  %v1111 = vmul.f32 %v1110, 1.442695
  %v1112 = vpow.pop %v1111
  %v1113 = vadd.f32 %v1112, 1.0
  %v1114 = vrcp.pop %v1113
  %v1115 = vmul.f32 1.0, %v1114
  %v1116 = vmul.f32 %v1108, %v871
  %v1117 = vmul.f32 %v1102, %v1109
  %v1118 = vadd.f32 %v1116, %v1117
  %v1119 = vtanh.pop %v1118
  %v1120 = vmul.f32 %v1115, %v1119
  %s1121 = scalar_lea.vmem %s0, 8
  %v1122 = vld [vmem:[%s1121] sm:$0xf]
  %v1123 = vunpack.c.l.bf16 %v1122
  %1124 = vmatprep.subr.bf16.mxu0 %v247
  %1125 = vmatpush1.bf16.msra.mxu0 %v246
  %1126 = vmatprep.subr.bf16.mxu0 %v251
  %1127 = vmatpush1.bf16.msra.mxu0 %v250
  %1128 = vmatprep.subr.bf16.mxu0 %v255
  %1129 = vmatpush1.bf16.msra.mxu0 %v254
  %1130 = vmatprep.subr.bf16.mxu0 %v259
  %1131 = vmatpush1.bf16.msra.mxu0 %v258
  %1132 = vmatprep.subr.bf16.mxu0 %v263
  %1133 = vmatpush1.bf16.msra.mxu0 %v262
  %1134 = vmatprep.subr.bf16.mxu0 %v267
  %1135 = vmatpush1.bf16.msra.mxu0 %v266
  %1136 = vmatprep.subr.bf16.mxu0 %v271
  %1137 = vmatpush1.bf16.msra.mxu0 %v270
  %1138 = vmatprep.subr.bf16.mxu0 %v275
  %1139 = vmatpush1.bf16.msra.mxu0 %v274
  %1140 = vmatprep.subr.bf16.mxu0 0
  %1141 = vmatpush1.bf16.msra.mxu0 0
  %1142 = vmatprep.subr.bf16.mxu0 0
  %1143 = vmatpush1.bf16.msra.mxu0 0
  %1144 = vmatprep.subr.bf16.mxu0 0
  %1145 = vmatpush1.bf16.msra.mxu0 0
  %1146 = vmatprep.subr.bf16.mxu0 0
  %1147 = vmatpush1.bf16.msra.mxu0 0
  %1148 = vmatprep.subr.bf16.mxu0 0
  %1149 = vmatpush1.bf16.msra.mxu0 0
  %1150 = vmatprep.subr.bf16.mxu0 0
  %1151 = vmatpush1.bf16.msra.mxu0 0
  %1152 = vmatprep.subr.bf16.mxu0 0
  %1153 = vmatpush1.bf16.msra.mxu0 0
  %1154 = vmatprep.subr.bf16.mxu0 0
  %1155 = vmatpush1.bf16.msra.mxu0 0
  %1156 = vmatprep.mubr.bf16.mxu0 0
  %1157 = vmatmul.mubr.bf16.gmra.mrb[0].mxu0 %v1013
  %v1158 = vpop.f32.mrb[0].mxu0
  %v1159 = vadd.f32 0.0, %v1158
  %v1160 = vpop.f32.mrb[0].mxu0
  %v1161 = vadd.f32 0.0, %v1160
  %v1162 = vpop.f32.mrb[0].mxu0
  %v1163 = vpop.f32.mrb[0].mxu0
  %1164 = vdwg.mxu0
  %1165 = vmatprep.subr.bf16.mxu0 %v249
  %1166 = vmatpush1.bf16.msra.mxu0 %v248
  %1167 = vmatprep.subr.bf16.mxu0 %v253
  %1168 = vmatpush1.bf16.msra.mxu0 %v252
  %1169 = vmatprep.subr.bf16.mxu0 %v257
  %1170 = vmatpush1.bf16.msra.mxu0 %v256
  %1171 = vmatprep.subr.bf16.mxu0 %v261
  %1172 = vmatpush1.bf16.msra.mxu0 %v260
  %1173 = vmatprep.subr.bf16.mxu0 %v265
  %1174 = vmatpush1.bf16.msra.mxu0 %v264
  %1175 = vmatprep.subr.bf16.mxu0 %v269
  %1176 = vmatpush1.bf16.msra.mxu0 %v268
  %1177 = vmatprep.subr.bf16.mxu0 %v273
  %1178 = vmatpush1.bf16.msra.mxu0 %v272
  %1179 = vmatprep.subr.bf16.mxu0 %v277
  %1180 = vmatpush1.bf16.msra.mxu0 %v276
  %1181 = vmatprep.subr.bf16.mxu0 0
  %1182 = vmatpush1.bf16.msra.mxu0 0
  %1183 = vmatprep.subr.bf16.mxu0 0
  %1184 = vmatpush1.bf16.msra.mxu0 0
  %1185 = vmatprep.subr.bf16.mxu0 0
  %1186 = vmatpush1.bf16.msra.mxu0 0
  %1187 = vmatprep.subr.bf16.mxu0 0
  %1188 = vmatpush1.bf16.msra.mxu0 0
  %1189 = vmatprep.subr.bf16.mxu0 0
  %1190 = vmatpush1.bf16.msra.mxu0 0
  %1191 = vmatprep.subr.bf16.mxu0 0
  %1192 = vmatpush1.bf16.msra.mxu0 0
  %1193 = vmatprep.subr.bf16.mxu0 0
  %1194 = vmatpush1.bf16.msra.mxu0 0
  %1195 = vmatprep.subr.bf16.mxu0 0
  %1196 = vmatpush1.bf16.msra.mxu0 0
  %1197 = vmatprep.mubr.bf16.mxu0 0
  %1198 = vmatmul.mubr.bf16.gmra.mrb[0].mxu0 %v1013
  %v1199 = vpop.f32.mrb[0].mxu0
  %v1200 = vadd.f32 0.0, %v1199
  %v1201 = vpop.f32.mrb[0].mxu0
  %v1202 = vadd.f32 0.0, %v1201
  %v1203 = vpop.f32.mrb[0].mxu0
  %v1204 = vpop.f32.mrb[0].mxu0
  %1205 = vdwg.mxu0
  %v1210 = vcombine.low %v1159, %v1161
  %v1211 = vcombine.low %v1200, %v1202
  %v1213 = vunpack.c.l.s4 1983009808
  %v1214 = vunpack.c.0.s8 %v1213
  %v1215 = vlaneseq
  %v1216 = vshrl.u32 %v1215, 7
  %v1217 = vsub.s32 %v1214, %v1216
  %v1218 = vrot.slane %v1210, %v1217
  %v1220 = vunpack.c.l.s4 1983009808
  %v1221 = vunpack.c.0.s8 %v1220
  %v1222 = vlaneseq
  %v1223 = vshrl.u32 %v1222, 7
  %v1224 = vsub.s32 %v1221, %v1223
  %v1225 = vrot.slane %v1211, %v1224
  %v1226 = vcombine.low %v1218, %v1225
  %v1228 = vadd.f32 %v1123, %v1226
  %v1229 = vxor.u32 %v1228, 2147483648
  %v1230 = vmul.f32 %v1229, 1.442695
  %v1231 = vpow.pop %v1230
  %v1232 = vadd.f32 %v1231, 1.0
  %v1233 = vrcp.pop %v1232
  %v1234 = vmul.f32 1.0, %v1233
  %v1236 = vrot.slane %v1228, 2
  %v1238 = vxor.u32 %v1236, 2147483648
  %v1239 = vmul.f32 %v1238, 1.442695
  %v1240 = vpow.pop %v1239
  %v1241 = vadd.f32 %v1240, 1.0
  %v1242 = vrcp.pop %v1241
  %v1243 = vmul.f32 1.0, %v1242
  %v1244 = vrot.slane %v1228, 4
  %v1246 = vtanh.pop %v1244
  %v1247 = vrot.slane %v1228, 6
  %v1249 = vxor.u32 %v1247, 2147483648
  %v1250 = vmul.f32 %v1249, 1.442695
  %v1251 = vpow.pop %v1250
  %v1252 = vadd.f32 %v1251, 1.0
  %v1253 = vrcp.pop %v1252
  %v1254 = vmul.f32 1.0, %v1253
  %v1255 = vmul.f32 %v1243, %v1010
  %v1256 = vmul.f32 %v1234, %v1246
  %v1257 = vadd.f32 %v1255, %v1256
  %v1258 = vtanh.pop %v1257
  %v1259 = vmul.f32 %v1254, %v1258
  %v1260 = vpack.c.bf16 %v1259, %v1259
  %v1261 = vpack.c.bf16 %v1120, %v1120
  %1262 = vmatprep.subr.bf16.mxu0 %v641
  %1263 = vmatpush1.bf16.msra.mxu0 %v640
  %1264 = vmatprep.subr.bf16.mxu0 %v645
  %1265 = vmatpush1.bf16.msra.mxu0 %v644
  %1266 = vmatprep.subr.bf16.mxu0 %v649
  %1267 = vmatpush1.bf16.msra.mxu0 %v648
  %1268 = vmatprep.subr.bf16.mxu0 %v653
  %1269 = vmatpush1.bf16.msra.mxu0 %v652
  %1270 = vmatprep.subr.bf16.mxu0 %v657
  %1271 = vmatpush1.bf16.msra.mxu0 %v656
  %1272 = vmatprep.subr.bf16.mxu0 %v661
  %1273 = vmatpush1.bf16.msra.mxu0 %v660
  %1274 = vmatprep.subr.bf16.mxu0 %v665
  %1275 = vmatpush1.bf16.msra.mxu0 %v664
  %1276 = vmatprep.subr.bf16.mxu0 %v669
  %1277 = vmatpush1.bf16.msra.mxu0 %v668
  %1278 = vmatprep.subr.bf16.mxu0 %v673
  %1279 = vmatpush1.bf16.msra.mxu0 %v672
  %1280 = vmatprep.subr.bf16.mxu0 %v677
  %1281 = vmatpush1.bf16.msra.mxu0 %v676
  %1282 = vmatprep.subr.bf16.mxu0 %v681
  %1283 = vmatpush1.bf16.msra.mxu0 %v680
  %1284 = vmatprep.subr.bf16.mxu0 %v685
  %1285 = vmatpush1.bf16.msra.mxu0 %v684
  %1286 = vmatprep.subr.bf16.mxu0 %v689
  %1287 = vmatpush1.bf16.msra.mxu0 %v688
  %1288 = vmatprep.subr.bf16.mxu0 %v693
  %1289 = vmatpush1.bf16.msra.mxu0 %v692
  %1290 = vmatprep.subr.bf16.mxu0 %v697
  %1291 = vmatpush1.bf16.msra.mxu0 %v696
  %1292 = vmatprep.subr.bf16.mxu0 %v701
  %1293 = vmatpush1.bf16.msra.mxu0 %v700
  %1294 = vmatprep.mubr.bf16.mxu0 %v1261
  %1295 = vmatmul.mubr.bf16.gmra.mrb[0].mxu0 %v1260
  %v1296 = vpop.f32.mrb[0].mxu0
  %v1297 = vadd.f32 %v127, %v1296
  %v1298 = vpop.f32.mrb[0].mxu0
  %v1299 = vadd.f32 %v131, %v1298
  %v1300 = vpop.f32.mrb[0].mxu0
  %v1301 = vpop.f32.mrb[0].mxu0
  %1302 = vdwg.mxu0
  %1303 = vmatprep.subr.bf16.mxu0 %v643
  %1304 = vmatpush1.bf16.msra.mxu0 %v642
  %1305 = vmatprep.subr.bf16.mxu0 %v647
  %1306 = vmatpush1.bf16.msra.mxu0 %v646
  %1307 = vmatprep.subr.bf16.mxu0 %v651
  %1308 = vmatpush1.bf16.msra.mxu0 %v650
  %1309 = vmatprep.subr.bf16.mxu0 %v655
  %1310 = vmatpush1.bf16.msra.mxu0 %v654
  %1311 = vmatprep.subr.bf16.mxu0 %v659
  %1312 = vmatpush1.bf16.msra.mxu0 %v658
  %1313 = vmatprep.subr.bf16.mxu0 %v663
  %1314 = vmatpush1.bf16.msra.mxu0 %v662
  %1315 = vmatprep.subr.bf16.mxu0 %v667
  %1316 = vmatpush1.bf16.msra.mxu0 %v666
  %1317 = vmatprep.subr.bf16.mxu0 %v671
  %1318 = vmatpush1.bf16.msra.mxu0 %v670
  %1319 = vmatprep.subr.bf16.mxu0 %v675
  %1320 = vmatpush1.bf16.msra.mxu0 %v674
  %1321 = vmatprep.subr.bf16.mxu0 %v679
  %1322 = vmatpush1.bf16.msra.mxu0 %v678
  %1323 = vmatprep.subr.bf16.mxu0 %v683
  %1324 = vmatpush1.bf16.msra.mxu0 %v682
  %1325 = vmatprep.subr.bf16.mxu0 %v687
  %1326 = vmatpush1.bf16.msra.mxu0 %v686
  %1327 = vmatprep.subr.bf16.mxu0 %v691
  %1328 = vmatpush1.bf16.msra.mxu0 %v690
  %1329 = vmatprep.subr.bf16.mxu0 %v695
  %1330 = vmatpush1.bf16.msra.mxu0 %v694
  %1331 = vmatprep.subr.bf16.mxu0 %v699
  %1332 = vmatpush1.bf16.msra.mxu0 %v698
  %1333 = vmatprep.subr.bf16.mxu0 %v703
  %1334 = vmatpush1.bf16.msra.mxu0 %v702
  %1335 = vmatprep.mubr.bf16.mxu0 %v1261
  %1336 = vmatmul.mubr.bf16.gmra.mrb[0].mxu0 %v1260
  %v1337 = vpop.f32.mrb[0].mxu0
  %v1338 = vadd.f32 %v135, %v1337
  %v1339 = vpop.f32.mrb[0].mxu0
  %v1340 = vadd.f32 %v139, %v1339
  %v1341 = vpop.f32.mrb[0].mxu0
  %v1342 = vpop.f32.mrb[0].mxu0
  %1343 = vdwg.mxu0
  %v1344 = vxor.u32 %v1297, 2147483648
  %v1345 = vmul.f32 %v1344, 1.442695
  %v1346 = vpow.pop %v1345
  %v1347 = vadd.f32 %v1346, 1.0
  %v1348 = vrcp.pop %v1347
  %v1349 = vmul.f32 1.0, %v1348
  %v1350 = vxor.u32 %v1299, 2147483648
  %v1351 = vmul.f32 %v1350, 1.442695
  %v1352 = vpow.pop %v1351
  %v1353 = vadd.f32 %v1352, 1.0
  %v1354 = vrcp.pop %v1353
  %v1355 = vmul.f32 1.0, %v1354
  %v1356 = vtanh.pop %v1338
  %v1357 = vxor.u32 %v1340, 2147483648
  %v1358 = vmul.f32 %v1357, 1.442695
  %v1359 = vpow.pop %v1358
  %v1360 = vadd.f32 %v1359, 1.0
  %v1361 = vrcp.pop %v1360
  %v1362 = vmul.f32 1.0, %v1361
  %v1363 = vmul.f32 %v1355, %v1118
  %v1364 = vmul.f32 %v1349, %v1356
  %v1365 = vadd.f32 %v1363, %v1364
  %v1366 = vtanh.pop %v1365
  %v1367 = vmul.f32 %v1362, %v1366
  %s1368 = scalar_lea.vmem %s0, 12
  %v1369 = vld [vmem:[%s1368] sm:$0xf]
  %v1370 = vunpack.c.l.bf16 %v1369
  %1371 = vmatprep.subr.bf16.mxu0 %v247
  %1372 = vmatpush1.bf16.msra.mxu0 %v246
  %1373 = vmatprep.subr.bf16.mxu0 %v251
  %1374 = vmatpush1.bf16.msra.mxu0 %v250
  %1375 = vmatprep.subr.bf16.mxu0 %v255
  %1376 = vmatpush1.bf16.msra.mxu0 %v254
  %1377 = vmatprep.subr.bf16.mxu0 %v259
  %1378 = vmatpush1.bf16.msra.mxu0 %v258
  %1379 = vmatprep.subr.bf16.mxu0 %v263
  %1380 = vmatpush1.bf16.msra.mxu0 %v262
  %1381 = vmatprep.subr.bf16.mxu0 %v267
  %1382 = vmatpush1.bf16.msra.mxu0 %v266
  %1383 = vmatprep.subr.bf16.mxu0 %v271
  %1384 = vmatpush1.bf16.msra.mxu0 %v270
  %1385 = vmatprep.subr.bf16.mxu0 %v275
  %1386 = vmatpush1.bf16.msra.mxu0 %v274
  %1387 = vmatprep.subr.bf16.mxu0 0
  %1388 = vmatpush1.bf16.msra.mxu0 0
  %1389 = vmatprep.subr.bf16.mxu0 0
  %1390 = vmatpush1.bf16.msra.mxu0 0
  %1391 = vmatprep.subr.bf16.mxu0 0
  %1392 = vmatpush1.bf16.msra.mxu0 0
  %1393 = vmatprep.subr.bf16.mxu0 0
  %1394 = vmatpush1.bf16.msra.mxu0 0
  %1395 = vmatprep.subr.bf16.mxu0 0
  %1396 = vmatpush1.bf16.msra.mxu0 0
  %1397 = vmatprep.subr.bf16.mxu0 0
  %1398 = vmatpush1.bf16.msra.mxu0 0
  %1399 = vmatprep.subr.bf16.mxu0 0
  %1400 = vmatpush1.bf16.msra.mxu0 0
  %1401 = vmatprep.subr.bf16.mxu0 0
  %1402 = vmatpush1.bf16.msra.mxu0 0
  %1403 = vmatprep.mubr.bf16.mxu0 0
  %1404 = vmatmul.mubr.bf16.gmra.mrb[0].mxu0 %v1260
  %v1405 = vpop.f32.mrb[0].mxu0
  %v1406 = vadd.f32 0.0, %v1405
  %v1407 = vpop.f32.mrb[0].mxu0
  %v1408 = vadd.f32 0.0, %v1407
  %v1409 = vpop.f32.mrb[0].mxu0
  %v1410 = vpop.f32.mrb[0].mxu0
  %1411 = vdwg.mxu0
  %1412 = vmatprep.subr.bf16.mxu0 %v249
  %1413 = vmatpush1.bf16.msra.mxu0 %v248
  %1414 = vmatprep.subr.bf16.mxu0 %v253
  %1415 = vmatpush1.bf16.msra.mxu0 %v252
  %1416 = vmatprep.subr.bf16.mxu0 %v257
  %1417 = vmatpush1.bf16.msra.mxu0 %v256
  %1418 = vmatprep.subr.bf16.mxu0 %v261
  %1419 = vmatpush1.bf16.msra.mxu0 %v260
  %1420 = vmatprep.subr.bf16.mxu0 %v265
  %1421 = vmatpush1.bf16.msra.mxu0 %v264
  %1422 = vmatprep.subr.bf16.mxu0 %v269
  %1423 = vmatpush1.bf16.msra.mxu0 %v268
  %1424 = vmatprep.subr.bf16.mxu0 %v273
  %1425 = vmatpush1.bf16.msra.mxu0 %v272
  %1426 = vmatprep.subr.bf16.mxu0 %v277
  %1427 = vmatpush1.bf16.msra.mxu0 %v276
  %1428 = vmatprep.subr.bf16.mxu0 0
  %1429 = vmatpush1.bf16.msra.mxu0 0
  %1430 = vmatprep.subr.bf16.mxu0 0
  %1431 = vmatpush1.bf16.msra.mxu0 0
  %1432 = vmatprep.subr.bf16.mxu0 0
  %1433 = vmatpush1.bf16.msra.mxu0 0
  %1434 = vmatprep.subr.bf16.mxu0 0
  %1435 = vmatpush1.bf16.msra.mxu0 0
  %1436 = vmatprep.subr.bf16.mxu0 0
  %1437 = vmatpush1.bf16.msra.mxu0 0
  %1438 = vmatprep.subr.bf16.mxu0 0
  %1439 = vmatpush1.bf16.msra.mxu0 0
  %1440 = vmatprep.subr.bf16.mxu0 0
  %1441 = vmatpush1.bf16.msra.mxu0 0
  %1442 = vmatprep.subr.bf16.mxu0 0
  %1443 = vmatpush1.bf16.msra.mxu0 0
  %1444 = vmatprep.mubr.bf16.mxu0 0
  %1445 = vmatmul.mubr.bf16.gmra.mrb[0].mxu0 %v1260
  %v1446 = vpop.f32.mrb[0].mxu0
  %v1447 = vadd.f32 0.0, %v1446
  %v1448 = vpop.f32.mrb[0].mxu0
  %v1449 = vadd.f32 0.0, %v1448
  %v1450 = vpop.f32.mrb[0].mxu0
  %v1451 = vpop.f32.mrb[0].mxu0
  %1452 = vdwg.mxu0
  %v1457 = vcombine.low %v1406, %v1408
  %v1458 = vcombine.low %v1447, %v1449
  %v1460 = vunpack.c.l.s4 1983009808
  %v1461 = vunpack.c.0.s8 %v1460
  %v1462 = vlaneseq
  %v1463 = vshrl.u32 %v1462, 7
  %v1464 = vsub.s32 %v1461, %v1463
  %v1465 = vrot.slane %v1457, %v1464
  %v1467 = vunpack.c.l.s4 1983009808
  %v1468 = vunpack.c.0.s8 %v1467
  %v1469 = vlaneseq
  %v1470 = vshrl.u32 %v1469, 7
  %v1471 = vsub.s32 %v1468, %v1470
  %v1472 = vrot.slane %v1458, %v1471
  %v1473 = vcombine.low %v1465, %v1472
  %v1475 = vadd.f32 %v1370, %v1473
  %v1476 = vxor.u32 %v1475, 2147483648
  %v1477 = vmul.f32 %v1476, 1.442695
  %v1478 = vpow.pop %v1477
  %v1479 = vadd.f32 %v1478, 1.0
  %v1480 = vrcp.pop %v1479
  %v1481 = vmul.f32 1.0, %v1480
  %v1483 = vrot.slane %v1475, 2
  %v1485 = vxor.u32 %v1483, 2147483648
  %v1486 = vmul.f32 %v1485, 1.442695
  %v1487 = vpow.pop %v1486
  %v1488 = vadd.f32 %v1487, 1.0
  %v1489 = vrcp.pop %v1488
  %v1490 = vmul.f32 1.0, %v1489
  %v1491 = vrot.slane %v1475, 4
  %v1493 = vtanh.pop %v1491
  %v1494 = vrot.slane %v1475, 6
  %v1496 = vxor.u32 %v1494, 2147483648
  %v1497 = vmul.f32 %v1496, 1.442695
  %v1498 = vpow.pop %v1497
  %v1499 = vadd.f32 %v1498, 1.0
  %v1500 = vrcp.pop %v1499
  %v1501 = vmul.f32 1.0, %v1500
  %v1502 = vmul.f32 %v1490, %v1257
  %v1503 = vmul.f32 %v1481, %v1493
  %v1504 = vadd.f32 %v1502, %v1503
  %v1505 = vtanh.pop %v1504
  %v1506 = vmul.f32 %v1501, %v1505
  %v1507 = vpack.c.bf16 %v1506, %v1506
  %v1508 = vpack.c.bf16 %v1367, %v1367
  %1509 = vmatprep.subr.bf16.mxu0 %v641
  %1510 = vmatpush1.bf16.msra.mxu0 %v640
  %1511 = vmatprep.subr.bf16.mxu0 %v645
  %1512 = vmatpush1.bf16.msra.mxu0 %v644
  %1513 = vmatprep.subr.bf16.mxu0 %v649
  %1514 = vmatpush1.bf16.msra.mxu0 %v648
  %1515 = vmatprep.subr.bf16.mxu0 %v653
  %1516 = vmatpush1.bf16.msra.mxu0 %v652
  %1517 = vmatprep.subr.bf16.mxu0 %v657
  %1518 = vmatpush1.bf16.msra.mxu0 %v656
  %1519 = vmatprep.subr.bf16.mxu0 %v661
  %1520 = vmatpush1.bf16.msra.mxu0 %v660
  %1521 = vmatprep.subr.bf16.mxu0 %v665
  %1522 = vmatpush1.bf16.msra.mxu0 %v664
  %1523 = vmatprep.subr.bf16.mxu0 %v669
  %1524 = vmatpush1.bf16.msra.mxu0 %v668
  %1525 = vmatprep.subr.bf16.mxu0 %v673
  %1526 = vmatpush1.bf16.msra.mxu0 %v672
  %1527 = vmatprep.subr.bf16.mxu0 %v677
  %1528 = vmatpush1.bf16.msra.mxu0 %v676
  %1529 = vmatprep.subr.bf16.mxu0 %v681
  %1530 = vmatpush1.bf16.msra.mxu0 %v680
  %1531 = vmatprep.subr.bf16.mxu0 %v685
  %1532 = vmatpush1.bf16.msra.mxu0 %v684
  %1533 = vmatprep.subr.bf16.mxu0 %v689
  %1534 = vmatpush1.bf16.msra.mxu0 %v688
  %1535 = vmatprep.subr.bf16.mxu0 %v693
  %1536 = vmatpush1.bf16.msra.mxu0 %v692
  %1537 = vmatprep.subr.bf16.mxu0 %v697
  %1538 = vmatpush1.bf16.msra.mxu0 %v696
  %1539 = vmatprep.subr.bf16.mxu0 %v701
  %1540 = vmatpush1.bf16.msra.mxu0 %v700
  %1541 = vmatprep.mubr.bf16.mxu0 %v1508
  %1542 = vmatmul.mubr.bf16.gmra.mrb[0].mxu0 %v1507
  %v1543 = vpop.f32.mrb[0].mxu0
  %v1544 = vadd.f32 %v127, %v1543
  %v1545 = vpop.f32.mrb[0].mxu0
  %v1546 = vadd.f32 %v131, %v1545
  %v1547 = vpop.f32.mrb[0].mxu0
  %v1548 = vpop.f32.mrb[0].mxu0
  %1549 = vdwg.mxu0
  %1550 = vmatprep.subr.bf16.mxu0 %v643
  %1551 = vmatpush1.bf16.msra.mxu0 %v642
  %1552 = vmatprep.subr.bf16.mxu0 %v647
  %1553 = vmatpush1.bf16.msra.mxu0 %v646
  %1554 = vmatprep.subr.bf16.mxu0 %v651
  %1555 = vmatpush1.bf16.msra.mxu0 %v650
  %1556 = vmatprep.subr.bf16.mxu0 %v655
  %1557 = vmatpush1.bf16.msra.mxu0 %v654
  %1558 = vmatprep.subr.bf16.mxu0 %v659
  %1559 = vmatpush1.bf16.msra.mxu0 %v658
  %1560 = vmatprep.subr.bf16.mxu0 %v663
  %1561 = vmatpush1.bf16.msra.mxu0 %v662
  %1562 = vmatprep.subr.bf16.mxu0 %v667
  %1563 = vmatpush1.bf16.msra.mxu0 %v666
  %1564 = vmatprep.subr.bf16.mxu0 %v671
  %1565 = vmatpush1.bf16.msra.mxu0 %v670
  %1566 = vmatprep.subr.bf16.mxu0 %v675
  %1567 = vmatpush1.bf16.msra.mxu0 %v674
  %1568 = vmatprep.subr.bf16.mxu0 %v679
  %1569 = vmatpush1.bf16.msra.mxu0 %v678
  %1570 = vmatprep.subr.bf16.mxu0 %v683
  %1571 = vmatpush1.bf16.msra.mxu0 %v682
  %1572 = vmatprep.subr.bf16.mxu0 %v687
  %1573 = vmatpush1.bf16.msra.mxu0 %v686
  %1574 = vmatprep.subr.bf16.mxu0 %v691
  %1575 = vmatpush1.bf16.msra.mxu0 %v690
  %1576 = vmatprep.subr.bf16.mxu0 %v695
  %1577 = vmatpush1.bf16.msra.mxu0 %v694
  %1578 = vmatprep.subr.bf16.mxu0 %v699
  %1579 = vmatpush1.bf16.msra.mxu0 %v698
  %1580 = vmatprep.subr.bf16.mxu0 %v703
  %1581 = vmatpush1.bf16.msra.mxu0 %v702
  %1582 = vmatprep.mubr.bf16.mxu0 %v1508
  %1583 = vmatmul.mubr.bf16.gmra.mrb[0].mxu0 %v1507
  %v1584 = vpop.f32.mrb[0].mxu0
  %v1585 = vadd.f32 %v135, %v1584
  %v1586 = vpop.f32.mrb[0].mxu0
  %v1587 = vadd.f32 %v139, %v1586
  %v1588 = vpop.f32.mrb[0].mxu0
  %v1589 = vpop.f32.mrb[0].mxu0
  %1590 = vdwg.mxu0
  %v1591 = vxor.u32 %v1544, 2147483648
  %v1592 = vmul.f32 %v1591, 1.442695
  %v1593 = vpow.pop %v1592
  %v1594 = vadd.f32 %v1593, 1.0
  %v1595 = vrcp.pop %v1594
  %v1596 = vmul.f32 1.0, %v1595
  %v1597 = vxor.u32 %v1546, 2147483648
  %v1598 = vmul.f32 %v1597, 1.442695
  %v1599 = vpow.pop %v1598
  %v1600 = vadd.f32 %v1599, 1.0
  %v1601 = vrcp.pop %v1600
  %v1602 = vmul.f32 1.0, %v1601
  %v1603 = vtanh.pop %v1585
  %v1604 = vxor.u32 %v1587, 2147483648
  %v1605 = vmul.f32 %v1604, 1.442695
  %v1606 = vpow.pop %v1605
  %v1607 = vadd.f32 %v1606, 1.0
  %v1608 = vrcp.pop %v1607
  %v1609 = vmul.f32 1.0, %v1608
  %v1610 = vmul.f32 %v1602, %v1365
  %v1611 = vmul.f32 %v1596, %v1603
  %v1612 = vadd.f32 %v1610, %v1611
  %v1613 = vtanh.pop %v1612
  %v1614 = vmul.f32 %v1609, %v1613
  %s1615 = scalar_lea.vmem %s0, 16
  %v1616 = vld [vmem:[%s1615] sm:$0xf]
  %v1617 = vunpack.c.l.bf16 %v1616
  %1618 = vmatprep.subr.bf16.mxu0 %v247
  %1619 = vmatpush1.bf16.msra.mxu0 %v246
  %1620 = vmatprep.subr.bf16.mxu0 %v251
  %1621 = vmatpush1.bf16.msra.mxu0 %v250
  %1622 = vmatprep.subr.bf16.mxu0 %v255
  %1623 = vmatpush1.bf16.msra.mxu0 %v254
  %1624 = vmatprep.subr.bf16.mxu0 %v259
  %1625 = vmatpush1.bf16.msra.mxu0 %v258
  %1626 = vmatprep.subr.bf16.mxu0 %v263
  %1627 = vmatpush1.bf16.msra.mxu0 %v262
  %1628 = vmatprep.subr.bf16.mxu0 %v267
  %1629 = vmatpush1.bf16.msra.mxu0 %v266
  %1630 = vmatprep.subr.bf16.mxu0 %v271
  %1631 = vmatpush1.bf16.msra.mxu0 %v270
  %1632 = vmatprep.subr.bf16.mxu0 %v275
  %1633 = vmatpush1.bf16.msra.mxu0 %v274
  %1634 = vmatprep.subr.bf16.mxu0 0
  %1635 = vmatpush1.bf16.msra.mxu0 0
  %1636 = vmatprep.subr.bf16.mxu0 0
  %1637 = vmatpush1.bf16.msra.mxu0 0
  %1638 = vmatprep.subr.bf16.mxu0 0
  %1639 = vmatpush1.bf16.msra.mxu0 0
  %1640 = vmatprep.subr.bf16.mxu0 0
  %1641 = vmatpush1.bf16.msra.mxu0 0
  %1642 = vmatprep.subr.bf16.mxu0 0
  %1643 = vmatpush1.bf16.msra.mxu0 0
  %1644 = vmatprep.subr.bf16.mxu0 0
  %1645 = vmatpush1.bf16.msra.mxu0 0
  %1646 = vmatprep.subr.bf16.mxu0 0
  %1647 = vmatpush1.bf16.msra.mxu0 0
  %1648 = vmatprep.subr.bf16.mxu0 0
  %1649 = vmatpush1.bf16.msra.mxu0 0
  %1650 = vmatprep.mubr.bf16.mxu0 0
  %1651 = vmatmul.mubr.bf16.gmra.mrb[0].mxu0 %v1507
  %v1652 = vpop.f32.mrb[0].mxu0
  %v1653 = vadd.f32 0.0, %v1652
  %v1654 = vpop.f32.mrb[0].mxu0
  %v1655 = vadd.f32 0.0, %v1654
  %v1656 = vpop.f32.mrb[0].mxu0
  %v1657 = vpop.f32.mrb[0].mxu0
  %1658 = vdwg.mxu0
  %1659 = vmatprep.subr.bf16.mxu0 %v249
  %1660 = vmatpush1.bf16.msra.mxu0 %v248
  %1661 = vmatprep.subr.bf16.mxu0 %v253
  %1662 = vmatpush1.bf16.msra.mxu0 %v252
  %1663 = vmatprep.subr.bf16.mxu0 %v257
  %1664 = vmatpush1.bf16.msra.mxu0 %v256
  %1665 = vmatprep.subr.bf16.mxu0 %v261
  %1666 = vmatpush1.bf16.msra.mxu0 %v260
  %1667 = vmatprep.subr.bf16.mxu0 %v265
  %1668 = vmatpush1.bf16.msra.mxu0 %v264
  %1669 = vmatprep.subr.bf16.mxu0 %v269
  %1670 = vmatpush1.bf16.msra.mxu0 %v268
  %1671 = vmatprep.subr.bf16.mxu0 %v273
  %1672 = vmatpush1.bf16.msra.mxu0 %v272
  %1673 = vmatprep.subr.bf16.mxu0 %v277
  %1674 = vmatpush1.bf16.msra.mxu0 %v276
  %1675 = vmatprep.subr.bf16.mxu0 0
  %1676 = vmatpush1.bf16.msra.mxu0 0
  %1677 = vmatprep.subr.bf16.mxu0 0
  %1678 = vmatpush1.bf16.msra.mxu0 0
  %1679 = vmatprep.subr.bf16.mxu0 0
  %1680 = vmatpush1.bf16.msra.mxu0 0
  %1681 = vmatprep.subr.bf16.mxu0 0
  %1682 = vmatpush1.bf16.msra.mxu0 0
  %1683 = vmatprep.subr.bf16.mxu0 0
  %1684 = vmatpush1.bf16.msra.mxu0 0
  %1685 = vmatprep.subr.bf16.mxu0 0
  %1686 = vmatpush1.bf16.msra.mxu0 0
  %1687 = vmatprep.subr.bf16.mxu0 0
  %1688 = vmatpush1.bf16.msra.mxu0 0
  %1689 = vmatprep.subr.bf16.mxu0 0
  %1690 = vmatpush1.bf16.msra.mxu0 0
  %1691 = vmatprep.mubr.bf16.mxu0 0
  %1692 = vmatmul.mubr.bf16.gmra.mrb[0].mxu0 %v1507
  %v1693 = vpop.f32.mrb[0].mxu0
  %v1694 = vadd.f32 0.0, %v1693
  %v1695 = vpop.f32.mrb[0].mxu0
  %v1696 = vadd.f32 0.0, %v1695
  %v1697 = vpop.f32.mrb[0].mxu0
  %v1698 = vpop.f32.mrb[0].mxu0
  %1699 = vdwg.mxu0
  %v1704 = vcombine.low %v1653, %v1655
  %v1705 = vcombine.low %v1694, %v1696
  %v1707 = vunpack.c.l.s4 1983009808
  %v1708 = vunpack.c.0.s8 %v1707
  %v1709 = vlaneseq
  %v1710 = vshrl.u32 %v1709, 7
  %v1711 = vsub.s32 %v1708, %v1710
  %v1712 = vrot.slane %v1704, %v1711
  %v1714 = vunpack.c.l.s4 1983009808
  %v1715 = vunpack.c.0.s8 %v1714
  %v1716 = vlaneseq
  %v1717 = vshrl.u32 %v1716, 7
  %v1718 = vsub.s32 %v1715, %v1717
  %v1719 = vrot.slane %v1705, %v1718
  %v1720 = vcombine.low %v1712, %v1719
  %v1722 = vadd.f32 %v1617, %v1720
  %v1723 = vxor.u32 %v1722, 2147483648
  %v1724 = vmul.f32 %v1723, 1.442695
  %v1725 = vpow.pop %v1724
  %v1726 = vadd.f32 %v1725, 1.0
  %v1727 = vrcp.pop %v1726
  %v1728 = vmul.f32 1.0, %v1727
  %v1730 = vrot.slane %v1722, 2
  %v1732 = vxor.u32 %v1730, 2147483648
  %v1733 = vmul.f32 %v1732, 1.442695
  %v1734 = vpow.pop %v1733
  %v1735 = vadd.f32 %v1734, 1.0
  %v1736 = vrcp.pop %v1735
  %v1737 = vmul.f32 1.0, %v1736
  %v1738 = vrot.slane %v1722, 4
  %v1740 = vtanh.pop %v1738
  %v1741 = vrot.slane %v1722, 6
  %v1743 = vxor.u32 %v1741, 2147483648
  %v1744 = vmul.f32 %v1743, 1.442695
  %v1745 = vpow.pop %v1744
  %v1746 = vadd.f32 %v1745, 1.0
  %v1747 = vrcp.pop %v1746
  %v1748 = vmul.f32 1.0, %v1747
  %v1749 = vmul.f32 %v1737, %v1504
  %v1750 = vmul.f32 %v1728, %v1740
  %v1751 = vadd.f32 %v1749, %v1750
  %v1752 = vtanh.pop %v1751
  %v1753 = vmul.f32 %v1748, %v1752
  %v1754 = vpack.c.bf16 %v1753, %v1753
  %v1755 = vpack.c.bf16 %v1614, %v1614
  %1756 = vmatprep.subr.bf16.mxu0 %v641
  %1757 = vmatpush1.bf16.msra.mxu0 %v640
  %1758 = vmatprep.subr.bf16.mxu0 %v645
  %1759 = vmatpush1.bf16.msra.mxu0 %v644
  %1760 = vmatprep.subr.bf16.mxu0 %v649
  %1761 = vmatpush1.bf16.msra.mxu0 %v648
  %1762 = vmatprep.subr.bf16.mxu0 %v653
  %1763 = vmatpush1.bf16.msra.mxu0 %v652
  %1764 = vmatprep.subr.bf16.mxu0 %v657
  %1765 = vmatpush1.bf16.msra.mxu0 %v656
  %1766 = vmatprep.subr.bf16.mxu0 %v661
  %1767 = vmatpush1.bf16.msra.mxu0 %v660
  %1768 = vmatprep.subr.bf16.mxu0 %v665
  %1769 = vmatpush1.bf16.msra.mxu0 %v664
  %1770 = vmatprep.subr.bf16.mxu0 %v669
  %1771 = vmatpush1.bf16.msra.mxu0 %v668
  %1772 = vmatprep.subr.bf16.mxu0 %v673
  %1773 = vmatpush1.bf16.msra.mxu0 %v672
  %1774 = vmatprep.subr.bf16.mxu0 %v677
  %1775 = vmatpush1.bf16.msra.mxu0 %v676
  %1776 = vmatprep.subr.bf16.mxu0 %v681
  %1777 = vmatpush1.bf16.msra.mxu0 %v680
  %1778 = vmatprep.subr.bf16.mxu0 %v685
  %1779 = vmatpush1.bf16.msra.mxu0 %v684
  %1780 = vmatprep.subr.bf16.mxu0 %v689
  %1781 = vmatpush1.bf16.msra.mxu0 %v688
  %1782 = vmatprep.subr.bf16.mxu0 %v693
  %1783 = vmatpush1.bf16.msra.mxu0 %v692
  %1784 = vmatprep.subr.bf16.mxu0 %v697
  %1785 = vmatpush1.bf16.msra.mxu0 %v696
  %1786 = vmatprep.subr.bf16.mxu0 %v701
  %1787 = vmatpush1.bf16.msra.mxu0 %v700
  %1788 = vmatprep.mubr.bf16.mxu0 %v1755
  %1789 = vmatmul.mubr.bf16.gmra.mrb[0].mxu0 %v1754
  %v1790 = vpop.f32.mrb[0].mxu0
  %v1791 = vadd.f32 %v127, %v1790
  %v1792 = vpop.f32.mrb[0].mxu0
  %v1793 = vadd.f32 %v131, %v1792
  %v1794 = vpop.f32.mrb[0].mxu0
  %v1795 = vpop.f32.mrb[0].mxu0
  %1796 = vdwg.mxu0
  %1797 = vmatprep.subr.bf16.mxu0 %v643
  %1798 = vmatpush1.bf16.msra.mxu0 %v642
  %1799 = vmatprep.subr.bf16.mxu0 %v647
  %1800 = vmatpush1.bf16.msra.mxu0 %v646
  %1801 = vmatprep.subr.bf16.mxu0 %v651
  %1802 = vmatpush1.bf16.msra.mxu0 %v650
  %1803 = vmatprep.subr.bf16.mxu0 %v655
  %1804 = vmatpush1.bf16.msra.mxu0 %v654
  %1805 = vmatprep.subr.bf16.mxu0 %v659
  %1806 = vmatpush1.bf16.msra.mxu0 %v658
  %1807 = vmatprep.subr.bf16.mxu0 %v663
  %1808 = vmatpush1.bf16.msra.mxu0 %v662
  %1809 = vmatprep.subr.bf16.mxu0 %v667
  %1810 = vmatpush1.bf16.msra.mxu0 %v666
  %1811 = vmatprep.subr.bf16.mxu0 %v671
  %1812 = vmatpush1.bf16.msra.mxu0 %v670
  %1813 = vmatprep.subr.bf16.mxu0 %v675
  %1814 = vmatpush1.bf16.msra.mxu0 %v674
  %1815 = vmatprep.subr.bf16.mxu0 %v679
  %1816 = vmatpush1.bf16.msra.mxu0 %v678
  %1817 = vmatprep.subr.bf16.mxu0 %v683
  %1818 = vmatpush1.bf16.msra.mxu0 %v682
  %1819 = vmatprep.subr.bf16.mxu0 %v687
  %1820 = vmatpush1.bf16.msra.mxu0 %v686
  %1821 = vmatprep.subr.bf16.mxu0 %v691
  %1822 = vmatpush1.bf16.msra.mxu0 %v690
  %1823 = vmatprep.subr.bf16.mxu0 %v695
  %1824 = vmatpush1.bf16.msra.mxu0 %v694
  %1825 = vmatprep.subr.bf16.mxu0 %v699
  %1826 = vmatpush1.bf16.msra.mxu0 %v698
  %1827 = vmatprep.subr.bf16.mxu0 %v703
  %1828 = vmatpush1.bf16.msra.mxu0 %v702
  %1829 = vmatprep.mubr.bf16.mxu0 %v1755
  %1830 = vmatmul.mubr.bf16.gmra.mrb[0].mxu0 %v1754
  %v1831 = vpop.f32.mrb[0].mxu0
  %v1832 = vadd.f32 %v135, %v1831
  %v1833 = vpop.f32.mrb[0].mxu0
  %v1834 = vadd.f32 %v139, %v1833
  %v1835 = vpop.f32.mrb[0].mxu0
  %v1836 = vpop.f32.mrb[0].mxu0
  %1837 = vdwg.mxu0
  %v1838 = vxor.u32 %v1791, 2147483648
  %v1839 = vmul.f32 %v1838, 1.442695
  %v1840 = vpow.pop %v1839
  %v1841 = vadd.f32 %v1840, 1.0
  %v1842 = vrcp.pop %v1841
  %v1843 = vmul.f32 1.0, %v1842
  %v1844 = vxor.u32 %v1793, 2147483648
  %v1845 = vmul.f32 %v1844, 1.442695
  %v1846 = vpow.pop %v1845
  %v1847 = vadd.f32 %v1846, 1.0
  %v1848 = vrcp.pop %v1847
  %v1849 = vmul.f32 1.0, %v1848
  %v1850 = vtanh.pop %v1832
  %v1851 = vxor.u32 %v1834, 2147483648
  %v1852 = vmul.f32 %v1851, 1.442695
  %v1853 = vpow.pop %v1852
  %v1854 = vadd.f32 %v1853, 1.0
  %v1855 = vrcp.pop %v1854
  %v1856 = vmul.f32 1.0, %v1855
  %v1857 = vmul.f32 %v1849, %v1612
  %v1858 = vmul.f32 %v1843, %v1850
  %v1859 = vadd.f32 %v1857, %v1858
  %v1860 = vtanh.pop %v1859
  %v1861 = vmul.f32 %v1856, %v1860
  %s1862 = scalar_lea.vmem %s0, 20
  %v1863 = vld [vmem:[%s1862] sm:$0xf]
  %v1864 = vunpack.c.l.bf16 %v1863
  %1865 = vmatprep.subr.bf16.mxu0 %v247
  %1866 = vmatpush1.bf16.msra.mxu0 %v246
  %1867 = vmatprep.subr.bf16.mxu0 %v251
  %1868 = vmatpush1.bf16.msra.mxu0 %v250
  %1869 = vmatprep.subr.bf16.mxu0 %v255
  %1870 = vmatpush1.bf16.msra.mxu0 %v254
  %1871 = vmatprep.subr.bf16.mxu0 %v259
  %1872 = vmatpush1.bf16.msra.mxu0 %v258
  %1873 = vmatprep.subr.bf16.mxu0 %v263
  %1874 = vmatpush1.bf16.msra.mxu0 %v262
  %1875 = vmatprep.subr.bf16.mxu0 %v267
  %1876 = vmatpush1.bf16.msra.mxu0 %v266
  %1877 = vmatprep.subr.bf16.mxu0 %v271
  %1878 = vmatpush1.bf16.msra.mxu0 %v270
  %1879 = vmatprep.subr.bf16.mxu0 %v275
  %1880 = vmatpush1.bf16.msra.mxu0 %v274
  %1881 = vmatprep.subr.bf16.mxu0 0
  %1882 = vmatpush1.bf16.msra.mxu0 0
  %1883 = vmatprep.subr.bf16.mxu0 0
  %1884 = vmatpush1.bf16.msra.mxu0 0
  %1885 = vmatprep.subr.bf16.mxu0 0
  %1886 = vmatpush1.bf16.msra.mxu0 0
  %1887 = vmatprep.subr.bf16.mxu0 0
  %1888 = vmatpush1.bf16.msra.mxu0 0
  %1889 = vmatprep.subr.bf16.mxu0 0
  %1890 = vmatpush1.bf16.msra.mxu0 0
  %1891 = vmatprep.subr.bf16.mxu0 0
  %1892 = vmatpush1.bf16.msra.mxu0 0
  %1893 = vmatprep.subr.bf16.mxu0 0
  %1894 = vmatpush1.bf16.msra.mxu0 0
  %1895 = vmatprep.subr.bf16.mxu0 0
  %1896 = vmatpush1.bf16.msra.mxu0 0
  %1897 = vmatprep.mubr.bf16.mxu0 0
  %1898 = vmatmul.mubr.bf16.gmra.mrb[0].mxu0 %v1754
  %v1899 = vpop.f32.mrb[0].mxu0
  %v1900 = vadd.f32 0.0, %v1899
  %v1901 = vpop.f32.mrb[0].mxu0
  %v1902 = vadd.f32 0.0, %v1901
  %v1903 = vpop.f32.mrb[0].mxu0
  %v1904 = vpop.f32.mrb[0].mxu0
  %1905 = vdwg.mxu0
  %1906 = vmatprep.subr.bf16.mxu0 %v249
  %1907 = vmatpush1.bf16.msra.mxu0 %v248
  %1908 = vmatprep.subr.bf16.mxu0 %v253
  %1909 = vmatpush1.bf16.msra.mxu0 %v252
  %1910 = vmatprep.subr.bf16.mxu0 %v257
  %1911 = vmatpush1.bf16.msra.mxu0 %v256
  %1912 = vmatprep.subr.bf16.mxu0 %v261
  %1913 = vmatpush1.bf16.msra.mxu0 %v260
  %1914 = vmatprep.subr.bf16.mxu0 %v265
  %1915 = vmatpush1.bf16.msra.mxu0 %v264
  %1916 = vmatprep.subr.bf16.mxu0 %v269
  %1917 = vmatpush1.bf16.msra.mxu0 %v268
  %1918 = vmatprep.subr.bf16.mxu0 %v273
  %1919 = vmatpush1.bf16.msra.mxu0 %v272
  %1920 = vmatprep.subr.bf16.mxu0 %v277
  %1921 = vmatpush1.bf16.msra.mxu0 %v276
  %1922 = vmatprep.subr.bf16.mxu0 0
  %1923 = vmatpush1.bf16.msra.mxu0 0
  %1924 = vmatprep.subr.bf16.mxu0 0
  %1925 = vmatpush1.bf16.msra.mxu0 0
  %1926 = vmatprep.subr.bf16.mxu0 0
  %1927 = vmatpush1.bf16.msra.mxu0 0
  %1928 = vmatprep.subr.bf16.mxu0 0
  %1929 = vmatpush1.bf16.msra.mxu0 0
  %1930 = vmatprep.subr.bf16.mxu0 0
  %1931 = vmatpush1.bf16.msra.mxu0 0
  %1932 = vmatprep.subr.bf16.mxu0 0
  %1933 = vmatpush1.bf16.msra.mxu0 0
  %1934 = vmatprep.subr.bf16.mxu0 0
  %1935 = vmatpush1.bf16.msra.mxu0 0
  %1936 = vmatprep.subr.bf16.mxu0 0
  %1937 = vmatpush1.bf16.msra.mxu0 0
  %1938 = vmatprep.mubr.bf16.mxu0 0
  %1939 = vmatmul.mubr.bf16.gmra.mrb[0].mxu0 %v1754
  %v1940 = vpop.f32.mrb[0].mxu0
  %v1941 = vadd.f32 0.0, %v1940
  %v1942 = vpop.f32.mrb[0].mxu0
  %v1943 = vadd.f32 0.0, %v1942
  %v1944 = vpop.f32.mrb[0].mxu0
  %v1945 = vpop.f32.mrb[0].mxu0
  %1946 = vdwg.mxu0
  %v1951 = vcombine.low %v1900, %v1902
  %v1952 = vcombine.low %v1941, %v1943
  %v1954 = vunpack.c.l.s4 1983009808
  %v1955 = vunpack.c.0.s8 %v1954
  %v1956 = vlaneseq
  %v1957 = vshrl.u32 %v1956, 7
  %v1958 = vsub.s32 %v1955, %v1957
  %v1959 = vrot.slane %v1951, %v1958
  %v1961 = vunpack.c.l.s4 1983009808
  %v1962 = vunpack.c.0.s8 %v1961
  %v1963 = vlaneseq
  %v1964 = vshrl.u32 %v1963, 7
  %v1965 = vsub.s32 %v1962, %v1964
  %v1966 = vrot.slane %v1952, %v1965
  %v1967 = vcombine.low %v1959, %v1966
  %v1969 = vadd.f32 %v1864, %v1967
  %v1970 = vxor.u32 %v1969, 2147483648
  %v1971 = vmul.f32 %v1970, 1.442695
  %v1972 = vpow.pop %v1971
  %v1973 = vadd.f32 %v1972, 1.0
  %v1974 = vrcp.pop %v1973
  %v1975 = vmul.f32 1.0, %v1974
  %v1977 = vrot.slane %v1969, 2
  %v1979 = vxor.u32 %v1977, 2147483648
  %v1980 = vmul.f32 %v1979, 1.442695
  %v1981 = vpow.pop %v1980
  %v1982 = vadd.f32 %v1981, 1.0
  %v1983 = vrcp.pop %v1982
  %v1984 = vmul.f32 1.0, %v1983
  %v1985 = vrot.slane %v1969, 4
  %v1987 = vtanh.pop %v1985
  %v1988 = vrot.slane %v1969, 6
  %v1990 = vxor.u32 %v1988, 2147483648
  %v1991 = vmul.f32 %v1990, 1.442695
  %v1992 = vpow.pop %v1991
  %v1993 = vadd.f32 %v1992, 1.0
  %v1994 = vrcp.pop %v1993
  %v1995 = vmul.f32 1.0, %v1994
  %v1996 = vmul.f32 %v1984, %v1751
  %v1997 = vmul.f32 %v1975, %v1987
  %v1998 = vadd.f32 %v1996, %v1997
  %v1999 = vtanh.pop %v1998
  %v2000 = vmul.f32 %v1995, %v1999
  %v2001 = vpack.c.bf16 %v2000, %v2000
  %v2002 = vpack.c.bf16 %v1861, %v1861
  %2003 = vmatprep.subr.bf16.mxu0 %v641
  %2004 = vmatpush1.bf16.msra.mxu0 %v640
  %2005 = vmatprep.subr.bf16.mxu0 %v645
  %2006 = vmatpush1.bf16.msra.mxu0 %v644
  %2007 = vmatprep.subr.bf16.mxu0 %v649
  %2008 = vmatpush1.bf16.msra.mxu0 %v648
  %2009 = vmatprep.subr.bf16.mxu0 %v653
  %2010 = vmatpush1.bf16.msra.mxu0 %v652
  %2011 = vmatprep.subr.bf16.mxu0 %v657
  %2012 = vmatpush1.bf16.msra.mxu0 %v656
  %2013 = vmatprep.subr.bf16.mxu0 %v661
  %2014 = vmatpush1.bf16.msra.mxu0 %v660
  %2015 = vmatprep.subr.bf16.mxu0 %v665
  %2016 = vmatpush1.bf16.msra.mxu0 %v664
  %2017 = vmatprep.subr.bf16.mxu0 %v669
  %2018 = vmatpush1.bf16.msra.mxu0 %v668
  %2019 = vmatprep.subr.bf16.mxu0 %v673
  %2020 = vmatpush1.bf16.msra.mxu0 %v672
  %2021 = vmatprep.subr.bf16.mxu0 %v677
  %2022 = vmatpush1.bf16.msra.mxu0 %v676
  %2023 = vmatprep.subr.bf16.mxu0 %v681
  %2024 = vmatpush1.bf16.msra.mxu0 %v680
  %2025 = vmatprep.subr.bf16.mxu0 %v685
  %2026 = vmatpush1.bf16.msra.mxu0 %v684
  %2027 = vmatprep.subr.bf16.mxu0 %v689
  %2028 = vmatpush1.bf16.msra.mxu0 %v688
  %2029 = vmatprep.subr.bf16.mxu0 %v693
  %2030 = vmatpush1.bf16.msra.mxu0 %v692
  %2031 = vmatprep.subr.bf16.mxu0 %v697
  %2032 = vmatpush1.bf16.msra.mxu0 %v696
  %2033 = vmatprep.subr.bf16.mxu0 %v701
  %2034 = vmatpush1.bf16.msra.mxu0 %v700
  %2035 = vmatprep.mubr.bf16.mxu0 %v2002
  %2036 = vmatmul.mubr.bf16.gmra.mrb[0].mxu0 %v2001
  %v2037 = vpop.f32.mrb[0].mxu0
  %v2038 = vadd.f32 %v127, %v2037
  %v2039 = vpop.f32.mrb[0].mxu0
  %v2040 = vadd.f32 %v131, %v2039
  %v2041 = vpop.f32.mrb[0].mxu0
  %v2042 = vpop.f32.mrb[0].mxu0
  %2043 = vdwg.mxu0
  %2044 = vmatprep.subr.bf16.mxu0 %v643
  %2045 = vmatpush1.bf16.msra.mxu0 %v642
  %2046 = vmatprep.subr.bf16.mxu0 %v647
  %2047 = vmatpush1.bf16.msra.mxu0 %v646
  %2048 = vmatprep.subr.bf16.mxu0 %v651
  %2049 = vmatpush1.bf16.msra.mxu0 %v650
  %2050 = vmatprep.subr.bf16.mxu0 %v655
  %2051 = vmatpush1.bf16.msra.mxu0 %v654
  %2052 = vmatprep.subr.bf16.mxu0 %v659
  %2053 = vmatpush1.bf16.msra.mxu0 %v658
  %2054 = vmatprep.subr.bf16.mxu0 %v663
  %2055 = vmatpush1.bf16.msra.mxu0 %v662
  %2056 = vmatprep.subr.bf16.mxu0 %v667
  %2057 = vmatpush1.bf16.msra.mxu0 %v666
  %2058 = vmatprep.subr.bf16.mxu0 %v671
  %2059 = vmatpush1.bf16.msra.mxu0 %v670
  %2060 = vmatprep.subr.bf16.mxu0 %v675
  %2061 = vmatpush1.bf16.msra.mxu0 %v674
  %2062 = vmatprep.subr.bf16.mxu0 %v679
  %2063 = vmatpush1.bf16.msra.mxu0 %v678
  %2064 = vmatprep.subr.bf16.mxu0 %v683
  %2065 = vmatpush1.bf16.msra.mxu0 %v682
  %2066 = vmatprep.subr.bf16.mxu0 %v687
  %2067 = vmatpush1.bf16.msra.mxu0 %v686
  %2068 = vmatprep.subr.bf16.mxu0 %v691
  %2069 = vmatpush1.bf16.msra.mxu0 %v690
  %2070 = vmatprep.subr.bf16.mxu0 %v695
  %2071 = vmatpush1.bf16.msra.mxu0 %v694
  %2072 = vmatprep.subr.bf16.mxu0 %v699
  %2073 = vmatpush1.bf16.msra.mxu0 %v698
  %2074 = vmatprep.subr.bf16.mxu0 %v703
  %2075 = vmatpush1.bf16.msra.mxu0 %v702
  %2076 = vmatprep.mubr.bf16.mxu0 %v2002
  %2077 = vmatmul.mubr.bf16.gmra.mrb[0].mxu0 %v2001
  %v2078 = vpop.f32.mrb[0].mxu0
  %v2079 = vadd.f32 %v135, %v2078
  %v2080 = vpop.f32.mrb[0].mxu0
  %v2081 = vadd.f32 %v139, %v2080
  %v2082 = vpop.f32.mrb[0].mxu0
  %v2083 = vpop.f32.mrb[0].mxu0
  %2084 = vdwg.mxu0
  %v2085 = vxor.u32 %v2038, 2147483648
  %v2086 = vmul.f32 %v2085, 1.442695
  %v2087 = vpow.pop %v2086
  %v2088 = vadd.f32 %v2087, 1.0
  %v2089 = vrcp.pop %v2088
  %v2090 = vmul.f32 1.0, %v2089
  %v2091 = vxor.u32 %v2040, 2147483648
  %v2092 = vmul.f32 %v2091, 1.442695
  %v2093 = vpow.pop %v2092
  %v2094 = vadd.f32 %v2093, 1.0
  %v2095 = vrcp.pop %v2094
  %v2096 = vmul.f32 1.0, %v2095
  %v2097 = vtanh.pop %v2079
  %v2098 = vxor.u32 %v2081, 2147483648
  %v2099 = vmul.f32 %v2098, 1.442695
  %v2100 = vpow.pop %v2099
  %v2101 = vadd.f32 %v2100, 1.0
  %v2102 = vrcp.pop %v2101
  %v2103 = vmul.f32 1.0, %v2102
  %v2104 = vmul.f32 %v2096, %v1859
  %v2105 = vmul.f32 %v2090, %v2097
  %v2106 = vadd.f32 %v2104, %v2105
  %v2107 = vtanh.pop %v2106
  %v2108 = vmul.f32 %v2103, %v2107
  %s2109 = scalar_lea.vmem %s0, 24
  %v2110 = vld [vmem:[%s2109] sm:$0xf]
  %v2111 = vunpack.c.l.bf16 %v2110
  %2112 = vmatprep.subr.bf16.mxu0 %v247
  %2113 = vmatpush1.bf16.msra.mxu0 %v246
  %2114 = vmatprep.subr.bf16.mxu0 %v251
  %2115 = vmatpush1.bf16.msra.mxu0 %v250
  %2116 = vmatprep.subr.bf16.mxu0 %v255
  %2117 = vmatpush1.bf16.msra.mxu0 %v254
  %2118 = vmatprep.subr.bf16.mxu0 %v259
  %2119 = vmatpush1.bf16.msra.mxu0 %v258
  %2120 = vmatprep.subr.bf16.mxu0 %v263
  %2121 = vmatpush1.bf16.msra.mxu0 %v262
  %2122 = vmatprep.subr.bf16.mxu0 %v267
  %2123 = vmatpush1.bf16.msra.mxu0 %v266
  %2124 = vmatprep.subr.bf16.mxu0 %v271
  %2125 = vmatpush1.bf16.msra.mxu0 %v270
  %2126 = vmatprep.subr.bf16.mxu0 %v275
  %2127 = vmatpush1.bf16.msra.mxu0 %v274
  %2128 = vmatprep.subr.bf16.mxu0 0
  %2129 = vmatpush1.bf16.msra.mxu0 0
  %2130 = vmatprep.subr.bf16.mxu0 0
  %2131 = vmatpush1.bf16.msra.mxu0 0
  %2132 = vmatprep.subr.bf16.mxu0 0
  %2133 = vmatpush1.bf16.msra.mxu0 0
  %2134 = vmatprep.subr.bf16.mxu0 0
  %2135 = vmatpush1.bf16.msra.mxu0 0
  %2136 = vmatprep.subr.bf16.mxu0 0
  %2137 = vmatpush1.bf16.msra.mxu0 0
  %2138 = vmatprep.subr.bf16.mxu0 0
  %2139 = vmatpush1.bf16.msra.mxu0 0
  %2140 = vmatprep.subr.bf16.mxu0 0
  %2141 = vmatpush1.bf16.msra.mxu0 0
  %2142 = vmatprep.subr.bf16.mxu0 0
  %2143 = vmatpush1.bf16.msra.mxu0 0
  %2144 = vmatprep.mubr.bf16.mxu0 0
  %2145 = vmatmul.mubr.bf16.gmra.mrb[0].mxu0 %v2001
  %v2146 = vpop.f32.mrb[0].mxu0
  %v2147 = vadd.f32 0.0, %v2146
  %v2148 = vpop.f32.mrb[0].mxu0
  %v2149 = vadd.f32 0.0, %v2148
  %v2150 = vpop.f32.mrb[0].mxu0
  %v2151 = vpop.f32.mrb[0].mxu0
  %2152 = vdwg.mxu0
  %2153 = vmatprep.subr.bf16.mxu0 %v249
  %2154 = vmatpush1.bf16.msra.mxu0 %v248
  %2155 = vmatprep.subr.bf16.mxu0 %v253
  %2156 = vmatpush1.bf16.msra.mxu0 %v252
  %2157 = vmatprep.subr.bf16.mxu0 %v257
  %2158 = vmatpush1.bf16.msra.mxu0 %v256
  %2159 = vmatprep.subr.bf16.mxu0 %v261
  %2160 = vmatpush1.bf16.msra.mxu0 %v260
  %2161 = vmatprep.subr.bf16.mxu0 %v265
  %2162 = vmatpush1.bf16.msra.mxu0 %v264
  %2163 = vmatprep.subr.bf16.mxu0 %v269
  %2164 = vmatpush1.bf16.msra.mxu0 %v268
  %2165 = vmatprep.subr.bf16.mxu0 %v273
  %2166 = vmatpush1.bf16.msra.mxu0 %v272
  %2167 = vmatprep.subr.bf16.mxu0 %v277
  %2168 = vmatpush1.bf16.msra.mxu0 %v276
  %2169 = vmatprep.subr.bf16.mxu0 0
  %2170 = vmatpush1.bf16.msra.mxu0 0
  %2171 = vmatprep.subr.bf16.mxu0 0
  %2172 = vmatpush1.bf16.msra.mxu0 0
  %2173 = vmatprep.subr.bf16.mxu0 0
  %2174 = vmatpush1.bf16.msra.mxu0 0
  %2175 = vmatprep.subr.bf16.mxu0 0
  %2176 = vmatpush1.bf16.msra.mxu0 0
  %2177 = vmatprep.subr.bf16.mxu0 0
  %2178 = vmatpush1.bf16.msra.mxu0 0
  %2179 = vmatprep.subr.bf16.mxu0 0
  %2180 = vmatpush1.bf16.msra.mxu0 0
  %2181 = vmatprep.subr.bf16.mxu0 0
  %2182 = vmatpush1.bf16.msra.mxu0 0
  %2183 = vmatprep.subr.bf16.mxu0 0
  %2184 = vmatpush1.bf16.msra.mxu0 0
  %2185 = vmatprep.mubr.bf16.mxu0 0
  %2186 = vmatmul.mubr.bf16.gmra.mrb[0].mxu0 %v2001
  %v2187 = vpop.f32.mrb[0].mxu0
  %v2188 = vadd.f32 0.0, %v2187
  %v2189 = vpop.f32.mrb[0].mxu0
  %v2190 = vadd.f32 0.0, %v2189
  %v2191 = vpop.f32.mrb[0].mxu0
  %v2192 = vpop.f32.mrb[0].mxu0
  %2193 = vdwg.mxu0
  %v2198 = vcombine.low %v2147, %v2149
  %v2199 = vcombine.low %v2188, %v2190
  %v2201 = vunpack.c.l.s4 1983009808
  %v2202 = vunpack.c.0.s8 %v2201
  %v2203 = vlaneseq
  %v2204 = vshrl.u32 %v2203, 7
  %v2205 = vsub.s32 %v2202, %v2204
  %v2206 = vrot.slane %v2198, %v2205
  %v2208 = vunpack.c.l.s4 1983009808
  %v2209 = vunpack.c.0.s8 %v2208
  %v2210 = vlaneseq
  %v2211 = vshrl.u32 %v2210, 7
  %v2212 = vsub.s32 %v2209, %v2211
  %v2213 = vrot.slane %v2199, %v2212
  %v2214 = vcombine.low %v2206, %v2213
  %v2216 = vadd.f32 %v2111, %v2214
  %v2217 = vxor.u32 %v2216, 2147483648
  %v2218 = vmul.f32 %v2217, 1.442695
  %v2219 = vpow.pop %v2218
  %v2220 = vadd.f32 %v2219, 1.0
  %v2221 = vrcp.pop %v2220
  %v2222 = vmul.f32 1.0, %v2221
  %v2224 = vrot.slane %v2216, 2
  %v2226 = vxor.u32 %v2224, 2147483648
  %v2227 = vmul.f32 %v2226, 1.442695
  %v2228 = vpow.pop %v2227
  %v2229 = vadd.f32 %v2228, 1.0
  %v2230 = vrcp.pop %v2229
  %v2231 = vmul.f32 1.0, %v2230
  %v2232 = vrot.slane %v2216, 4
  %v2234 = vtanh.pop %v2232
  %v2235 = vrot.slane %v2216, 6
  %v2237 = vxor.u32 %v2235, 2147483648
  %v2238 = vmul.f32 %v2237, 1.442695
  %v2239 = vpow.pop %v2238
  %v2240 = vadd.f32 %v2239, 1.0
  %v2241 = vrcp.pop %v2240
  %v2242 = vmul.f32 1.0, %v2241
  %v2243 = vmul.f32 %v2231, %v1998
  %v2244 = vmul.f32 %v2222, %v2234
  %v2245 = vadd.f32 %v2243, %v2244
  %v2246 = vtanh.pop %v2245
  %v2247 = vmul.f32 %v2242, %v2246
  %v2248 = vpack.c.bf16 %v2247, %v2247
  %v2249 = vpack.c.bf16 %v2108, %v2108
  %2250 = vmatprep.subr.bf16.mxu0 %v641
  %2251 = vmatpush1.bf16.msra.mxu0 %v640
  %2252 = vmatprep.subr.bf16.mxu0 %v645
  %2253 = vmatpush1.bf16.msra.mxu0 %v644
  %2254 = vmatprep.subr.bf16.mxu0 %v649
  %2255 = vmatpush1.bf16.msra.mxu0 %v648
  %2256 = vmatprep.subr.bf16.mxu0 %v653
  %2257 = vmatpush1.bf16.msra.mxu0 %v652
  %2258 = vmatprep.subr.bf16.mxu0 %v657
  %2259 = vmatpush1.bf16.msra.mxu0 %v656
  %2260 = vmatprep.subr.bf16.mxu0 %v661
  %2261 = vmatpush1.bf16.msra.mxu0 %v660
  %2262 = vmatprep.subr.bf16.mxu0 %v665
  %2263 = vmatpush1.bf16.msra.mxu0 %v664
  %2264 = vmatprep.subr.bf16.mxu0 %v669
  %2265 = vmatpush1.bf16.msra.mxu0 %v668
  %2266 = vmatprep.subr.bf16.mxu0 %v673
  %2267 = vmatpush1.bf16.msra.mxu0 %v672
  %2268 = vmatprep.subr.bf16.mxu0 %v677
  %2269 = vmatpush1.bf16.msra.mxu0 %v676
  %2270 = vmatprep.subr.bf16.mxu0 %v681
  %2271 = vmatpush1.bf16.msra.mxu0 %v680
  %2272 = vmatprep.subr.bf16.mxu0 %v685
  %2273 = vmatpush1.bf16.msra.mxu0 %v684
  %2274 = vmatprep.subr.bf16.mxu0 %v689
  %2275 = vmatpush1.bf16.msra.mxu0 %v688
  %2276 = vmatprep.subr.bf16.mxu0 %v693
  %2277 = vmatpush1.bf16.msra.mxu0 %v692
  %2278 = vmatprep.subr.bf16.mxu0 %v697
  %2279 = vmatpush1.bf16.msra.mxu0 %v696
  %2280 = vmatprep.subr.bf16.mxu0 %v701
  %2281 = vmatpush1.bf16.msra.mxu0 %v700
  %2282 = vmatprep.mubr.bf16.mxu0 %v2249
  %2283 = vmatmul.mubr.bf16.gmra.mrb[0].mxu0 %v2248
  %v2284 = vpop.f32.mrb[0].mxu0
  %v2285 = vadd.f32 %v127, %v2284
  %v2286 = vpop.f32.mrb[0].mxu0
  %v2287 = vadd.f32 %v131, %v2286
  %v2288 = vpop.f32.mrb[0].mxu0
  %v2289 = vpop.f32.mrb[0].mxu0
  %2290 = vdwg.mxu0
  %2291 = vmatprep.subr.bf16.mxu0 %v643
  %2292 = vmatpush1.bf16.msra.mxu0 %v642
  %2293 = vmatprep.subr.bf16.mxu0 %v647
  %2294 = vmatpush1.bf16.msra.mxu0 %v646
  %2295 = vmatprep.subr.bf16.mxu0 %v651
  %2296 = vmatpush1.bf16.msra.mxu0 %v650
  %2297 = vmatprep.subr.bf16.mxu0 %v655
  %2298 = vmatpush1.bf16.msra.mxu0 %v654
  %2299 = vmatprep.subr.bf16.mxu0 %v659
  %2300 = vmatpush1.bf16.msra.mxu0 %v658
  %2301 = vmatprep.subr.bf16.mxu0 %v663
  %2302 = vmatpush1.bf16.msra.mxu0 %v662
  %2303 = vmatprep.subr.bf16.mxu0 %v667
  %2304 = vmatpush1.bf16.msra.mxu0 %v666
  %2305 = vmatprep.subr.bf16.mxu0 %v671
  %2306 = vmatpush1.bf16.msra.mxu0 %v670
  %2307 = vmatprep.subr.bf16.mxu0 %v675
  %2308 = vmatpush1.bf16.msra.mxu0 %v674
  %2309 = vmatprep.subr.bf16.mxu0 %v679
  %2310 = vmatpush1.bf16.msra.mxu0 %v678
  %2311 = vmatprep.subr.bf16.mxu0 %v683
  %2312 = vmatpush1.bf16.msra.mxu0 %v682
  %2313 = vmatprep.subr.bf16.mxu0 %v687
  %2314 = vmatpush1.bf16.msra.mxu0 %v686
  %2315 = vmatprep.subr.bf16.mxu0 %v691
  %2316 = vmatpush1.bf16.msra.mxu0 %v690
  %2317 = vmatprep.subr.bf16.mxu0 %v695
  %2318 = vmatpush1.bf16.msra.mxu0 %v694
  %2319 = vmatprep.subr.bf16.mxu0 %v699
  %2320 = vmatpush1.bf16.msra.mxu0 %v698
  %2321 = vmatprep.subr.bf16.mxu0 %v703
  %2322 = vmatpush1.bf16.msra.mxu0 %v702
  %2323 = vmatprep.mubr.bf16.mxu0 %v2249
  %2324 = vmatmul.mubr.bf16.gmra.mrb[0].mxu0 %v2248
  %v2325 = vpop.f32.mrb[0].mxu0
  %v2326 = vadd.f32 %v135, %v2325
  %v2327 = vpop.f32.mrb[0].mxu0
  %v2328 = vadd.f32 %v139, %v2327
  %v2329 = vpop.f32.mrb[0].mxu0
  %v2330 = vpop.f32.mrb[0].mxu0
  %2331 = vdwg.mxu0
  %v2332 = vxor.u32 %v2285, 2147483648
  %v2333 = vmul.f32 %v2332, 1.442695
  %v2334 = vpow.pop %v2333
  %v2335 = vadd.f32 %v2334, 1.0
  %v2336 = vrcp.pop %v2335
  %v2337 = vmul.f32 1.0, %v2336
  %v2338 = vxor.u32 %v2287, 2147483648
  %v2339 = vmul.f32 %v2338, 1.442695
  %v2340 = vpow.pop %v2339
  %v2341 = vadd.f32 %v2340, 1.0
  %v2342 = vrcp.pop %v2341
  %v2343 = vmul.f32 1.0, %v2342
  %v2344 = vtanh.pop %v2326
  %v2345 = vxor.u32 %v2328, 2147483648
  %v2346 = vmul.f32 %v2345, 1.442695
  %v2347 = vpow.pop %v2346
  %v2348 = vadd.f32 %v2347, 1.0
  %v2349 = vrcp.pop %v2348
  %v2350 = vmul.f32 1.0, %v2349
  %v2351 = vmul.f32 %v2343, %v2106
  %v2352 = vmul.f32 %v2337, %v2344
  %v2353 = vadd.f32 %v2351, %v2352
  %v2354 = vtanh.pop %v2353
  %v2355 = vmul.f32 %v2350, %v2354
  %s2356 = scalar_lea.vmem %s0, 28
  %v2357 = vld [vmem:[%s2356] sm:$0xf]
  %v2358 = vunpack.c.l.bf16 %v2357
  %2359 = vmatprep.subr.bf16.mxu0 %v247
  %2360 = vmatpush1.bf16.msra.mxu0 %v246
  %2361 = vmatprep.subr.bf16.mxu0 %v251
  %2362 = vmatpush1.bf16.msra.mxu0 %v250
  %2363 = vmatprep.subr.bf16.mxu0 %v255
  %2364 = vmatpush1.bf16.msra.mxu0 %v254
  %2365 = vmatprep.subr.bf16.mxu0 %v259
  %2366 = vmatpush1.bf16.msra.mxu0 %v258
  %2367 = vmatprep.subr.bf16.mxu0 %v263
  %2368 = vmatpush1.bf16.msra.mxu0 %v262
  %2369 = vmatprep.subr.bf16.mxu0 %v267
  %2370 = vmatpush1.bf16.msra.mxu0 %v266
  %2371 = vmatprep.subr.bf16.mxu0 %v271
  %2372 = vmatpush1.bf16.msra.mxu0 %v270
  %2373 = vmatprep.subr.bf16.mxu0 %v275
  %2374 = vmatpush1.bf16.msra.mxu0 %v274
  %2375 = vmatprep.subr.bf16.mxu0 0
  %2376 = vmatpush1.bf16.msra.mxu0 0
  %2377 = vmatprep.subr.bf16.mxu0 0
  %2378 = vmatpush1.bf16.msra.mxu0 0
  %2379 = vmatprep.subr.bf16.mxu0 0
  %2380 = vmatpush1.bf16.msra.mxu0 0
  %2381 = vmatprep.subr.bf16.mxu0 0
  %2382 = vmatpush1.bf16.msra.mxu0 0
  %2383 = vmatprep.subr.bf16.mxu0 0
  %2384 = vmatpush1.bf16.msra.mxu0 0
  %2385 = vmatprep.subr.bf16.mxu0 0
  %2386 = vmatpush1.bf16.msra.mxu0 0
  %2387 = vmatprep.subr.bf16.mxu0 0
  %2388 = vmatpush1.bf16.msra.mxu0 0
  %2389 = vmatprep.subr.bf16.mxu0 0
  %2390 = vmatpush1.bf16.msra.mxu0 0
  %2391 = vmatprep.mubr.bf16.mxu0 0
  %2392 = vmatmul.mubr.bf16.gmra.mrb[0].mxu0 %v2248
  %v2393 = vpop.f32.mrb[0].mxu0
  %v2394 = vadd.f32 0.0, %v2393
  %v2395 = vpop.f32.mrb[0].mxu0
  %v2396 = vadd.f32 0.0, %v2395
  %v2397 = vpop.f32.mrb[0].mxu0
  %v2398 = vpop.f32.mrb[0].mxu0
  %2399 = vdwg.mxu0
  %2400 = vmatprep.subr.bf16.mxu0 %v249
  %2401 = vmatpush1.bf16.msra.mxu0 %v248
  %2402 = vmatprep.subr.bf16.mxu0 %v253
  %2403 = vmatpush1.bf16.msra.mxu0 %v252
  %2404 = vmatprep.subr.bf16.mxu0 %v257
  %2405 = vmatpush1.bf16.msra.mxu0 %v256
  %2406 = vmatprep.subr.bf16.mxu0 %v261
  %2407 = vmatpush1.bf16.msra.mxu0 %v260
  %2408 = vmatprep.subr.bf16.mxu0 %v265
  %2409 = vmatpush1.bf16.msra.mxu0 %v264
  %2410 = vmatprep.subr.bf16.mxu0 %v269
  %2411 = vmatpush1.bf16.msra.mxu0 %v268
  %2412 = vmatprep.subr.bf16.mxu0 %v273
  %2413 = vmatpush1.bf16.msra.mxu0 %v272
  %2414 = vmatprep.subr.bf16.mxu0 %v277
  %2415 = vmatpush1.bf16.msra.mxu0 %v276
  %2416 = vmatprep.subr.bf16.mxu0 0
  %2417 = vmatpush1.bf16.msra.mxu0 0
  %2418 = vmatprep.subr.bf16.mxu0 0
  %2419 = vmatpush1.bf16.msra.mxu0 0
  %2420 = vmatprep.subr.bf16.mxu0 0
  %2421 = vmatpush1.bf16.msra.mxu0 0
  %2422 = vmatprep.subr.bf16.mxu0 0
  %2423 = vmatpush1.bf16.msra.mxu0 0
  %2424 = vmatprep.subr.bf16.mxu0 0
  %2425 = vmatpush1.bf16.msra.mxu0 0
  %2426 = vmatprep.subr.bf16.mxu0 0
  %2427 = vmatpush1.bf16.msra.mxu0 0
  %2428 = vmatprep.subr.bf16.mxu0 0
  %2429 = vmatpush1.bf16.msra.mxu0 0
  %2430 = vmatprep.subr.bf16.mxu0 0
  %2431 = vmatpush1.bf16.msra.mxu0 0
  %2432 = vmatprep.mubr.bf16.mxu0 0
  %2433 = vmatmul.mubr.bf16.gmra.mrb[0].mxu0 %v2248
  %v2434 = vpop.f32.mrb[0].mxu0
  %v2435 = vadd.f32 0.0, %v2434
  %v2436 = vpop.f32.mrb[0].mxu0
  %v2437 = vadd.f32 0.0, %v2436
  %v2438 = vpop.f32.mrb[0].mxu0
  %v2439 = vpop.f32.mrb[0].mxu0
  %2440 = vdwg.mxu0
  %v2445 = vcombine.low %v2394, %v2396
  %v2446 = vcombine.low %v2435, %v2437
  %v2448 = vunpack.c.l.s4 1983009808
  %v2449 = vunpack.c.0.s8 %v2448
  %v2450 = vlaneseq
  %v2451 = vshrl.u32 %v2450, 7
  %v2452 = vsub.s32 %v2449, %v2451
  %v2453 = vrot.slane %v2445, %v2452
  %v2455 = vunpack.c.l.s4 1983009808
  %v2456 = vunpack.c.0.s8 %v2455
  %v2457 = vlaneseq
  %v2458 = vshrl.u32 %v2457, 7
  %v2459 = vsub.s32 %v2456, %v2458
  %v2460 = vrot.slane %v2446, %v2459
  %v2461 = vcombine.low %v2453, %v2460
  %v2463 = vadd.f32 %v2358, %v2461
  %v2464 = vxor.u32 %v2463, 2147483648
  %v2465 = vmul.f32 %v2464, 1.442695
  %v2466 = vpow.pop %v2465
  %v2467 = vadd.f32 %v2466, 1.0
  %v2468 = vrcp.pop %v2467
  %v2469 = vmul.f32 1.0, %v2468
  %v2471 = vrot.slane %v2463, 2
  %v2473 = vxor.u32 %v2471, 2147483648
  %v2474 = vmul.f32 %v2473, 1.442695
  %v2475 = vpow.pop %v2474
  %v2476 = vadd.f32 %v2475, 1.0
  %v2477 = vrcp.pop %v2476
  %v2478 = vmul.f32 1.0, %v2477
  %v2479 = vrot.slane %v2463, 4
  %v2481 = vtanh.pop %v2479
  %v2482 = vrot.slane %v2463, 6
  %v2484 = vxor.u32 %v2482, 2147483648
  %v2485 = vmul.f32 %v2484, 1.442695
  %v2486 = vpow.pop %v2485
  %v2487 = vadd.f32 %v2486, 1.0
  %v2488 = vrcp.pop %v2487
  %v2489 = vmul.f32 1.0, %v2488
  %v2490 = vmul.f32 %v2478, %v2245
  %v2491 = vmul.f32 %v2469, %v2481
  %v2492 = vadd.f32 %v2490, %v2491
  %v2493 = vtanh.pop %v2492
  %v2494 = vmul.f32 %v2489, %v2493
  %v2495 = vpack.c.bf16 %v2494, %v2494
  %v2496 = vpack.c.bf16 %v2355, %v2355
  %2497 = vmatprep.subr.bf16.mxu0 %v641
  %2498 = vmatpush1.bf16.msra.mxu0 %v640
  %2499 = vmatprep.subr.bf16.mxu0 %v645
  %2500 = vmatpush1.bf16.msra.mxu0 %v644
  %2501 = vmatprep.subr.bf16.mxu0 %v649
  %2502 = vmatpush1.bf16.msra.mxu0 %v648
  %2503 = vmatprep.subr.bf16.mxu0 %v653
  %2504 = vmatpush1.bf16.msra.mxu0 %v652
  %2505 = vmatprep.subr.bf16.mxu0 %v657
  %2506 = vmatpush1.bf16.msra.mxu0 %v656
  %2507 = vmatprep.subr.bf16.mxu0 %v661
  %2508 = vmatpush1.bf16.msra.mxu0 %v660
  %2509 = vmatprep.subr.bf16.mxu0 %v665
  %2510 = vmatpush1.bf16.msra.mxu0 %v664
  %2511 = vmatprep.subr.bf16.mxu0 %v669
  %2512 = vmatpush1.bf16.msra.mxu0 %v668
  %2513 = vmatprep.subr.bf16.mxu0 %v673
  %2514 = vmatpush1.bf16.msra.mxu0 %v672
  %2515 = vmatprep.subr.bf16.mxu0 %v677
  %2516 = vmatpush1.bf16.msra.mxu0 %v676
  %2517 = vmatprep.subr.bf16.mxu0 %v681
  %2518 = vmatpush1.bf16.msra.mxu0 %v680
  %2519 = vmatprep.subr.bf16.mxu0 %v685
  %2520 = vmatpush1.bf16.msra.mxu0 %v684
  %2521 = vmatprep.subr.bf16.mxu0 %v689
  %2522 = vmatpush1.bf16.msra.mxu0 %v688
  %2523 = vmatprep.subr.bf16.mxu0 %v693
  %2524 = vmatpush1.bf16.msra.mxu0 %v692
  %2525 = vmatprep.subr.bf16.mxu0 %v697
  %2526 = vmatpush1.bf16.msra.mxu0 %v696
  %2527 = vmatprep.subr.bf16.mxu0 %v701
  %2528 = vmatpush1.bf16.msra.mxu0 %v700
  %2529 = vmatprep.mubr.bf16.mxu0 %v2496
  %2530 = vmatmul.mubr.bf16.gmra.mrb[0].mxu0 %v2495
  %v2531 = vpop.f32.mrb[0].mxu0
  %v2532 = vadd.f32 %v127, %v2531
  %v2533 = vpop.f32.mrb[0].mxu0
  %v2534 = vadd.f32 %v131, %v2533
  %v2535 = vpop.f32.mrb[0].mxu0
  %v2536 = vpop.f32.mrb[0].mxu0
  %2537 = vdwg.mxu0
  %2538 = vmatprep.subr.bf16.mxu0 %v643
  %2539 = vmatpush1.bf16.msra.mxu0 %v642
  %2540 = vmatprep.subr.bf16.mxu0 %v647
  %2541 = vmatpush1.bf16.msra.mxu0 %v646
  %2542 = vmatprep.subr.bf16.mxu0 %v651
  %2543 = vmatpush1.bf16.msra.mxu0 %v650
  %2544 = vmatprep.subr.bf16.mxu0 %v655
  %2545 = vmatpush1.bf16.msra.mxu0 %v654
  %2546 = vmatprep.subr.bf16.mxu0 %v659
  %2547 = vmatpush1.bf16.msra.mxu0 %v658
  %2548 = vmatprep.subr.bf16.mxu0 %v663
  %2549 = vmatpush1.bf16.msra.mxu0 %v662
  %2550 = vmatprep.subr.bf16.mxu0 %v667
  %2551 = vmatpush1.bf16.msra.mxu0 %v666
  %2552 = vmatprep.subr.bf16.mxu0 %v671
  %2553 = vmatpush1.bf16.msra.mxu0 %v670
  %2554 = vmatprep.subr.bf16.mxu0 %v675
  %2555 = vmatpush1.bf16.msra.mxu0 %v674
  %2556 = vmatprep.subr.bf16.mxu0 %v679
  %2557 = vmatpush1.bf16.msra.mxu0 %v678
  %2558 = vmatprep.subr.bf16.mxu0 %v683
  %2559 = vmatpush1.bf16.msra.mxu0 %v682
  %2560 = vmatprep.subr.bf16.mxu0 %v687
  %2561 = vmatpush1.bf16.msra.mxu0 %v686
  %2562 = vmatprep.subr.bf16.mxu0 %v691
  %2563 = vmatpush1.bf16.msra.mxu0 %v690
  %2564 = vmatprep.subr.bf16.mxu0 %v695
  %2565 = vmatpush1.bf16.msra.mxu0 %v694
  %2566 = vmatprep.subr.bf16.mxu0 %v699
  %2567 = vmatpush1.bf16.msra.mxu0 %v698
  %2568 = vmatprep.subr.bf16.mxu0 %v703
  %2569 = vmatpush1.bf16.msra.mxu0 %v702
  %2570 = vmatprep.mubr.bf16.mxu0 %v2496
  %2571 = vmatmul.mubr.bf16.gmra.mrb[0].mxu0 %v2495
  %v2572 = vpop.f32.mrb[0].mxu0
  %v2573 = vadd.f32 %v135, %v2572
  %v2574 = vpop.f32.mrb[0].mxu0
  %v2575 = vadd.f32 %v139, %v2574
  %v2576 = vpop.f32.mrb[0].mxu0
  %v2577 = vpop.f32.mrb[0].mxu0
  %2578 = vdwg.mxu0
  %v2579 = vxor.u32 %v2532, 2147483648
  %v2580 = vmul.f32 %v2579, 1.442695
  %v2581 = vpow.pop %v2580
  %v2582 = vadd.f32 %v2581, 1.0
  %v2583 = vrcp.pop %v2582
  %v2584 = vmul.f32 1.0, %v2583
  %v2585 = vxor.u32 %v2534, 2147483648
  %v2586 = vmul.f32 %v2585, 1.442695
  %v2587 = vpow.pop %v2586
  %v2588 = vadd.f32 %v2587, 1.0
  %v2589 = vrcp.pop %v2588
  %v2590 = vmul.f32 1.0, %v2589
  %v2591 = vtanh.pop %v2573
  %v2592 = vxor.u32 %v2575, 2147483648
  %v2593 = vmul.f32 %v2592, 1.442695
  %v2594 = vpow.pop %v2593
  %v2595 = vadd.f32 %v2594, 1.0
  %v2596 = vrcp.pop %v2595
  %v2597 = vmul.f32 1.0, %v2596
  %v2598 = vmul.f32 %v2590, %v2353
  %v2599 = vmul.f32 %v2584, %v2591
  %v2600 = vadd.f32 %v2598, %v2599
  %v2601 = vtanh.pop %v2600
  %v2602 = vmul.f32 %v2597, %v2601
  %2603 = vst [vmem:[#allocation2] sm:$0x1] %v2495
  %2604 = vst [vmem:[#allocation3] sm:$0x3] %v2492
  %2605 = vst [vmem:[#allocation4] sm:$0x3] %v2602
  %2606 = vst [vmem:[#allocation5] sm:$0x3] %v2600
  // Predicated region
  $region22: #{bert_text_lstm_net.3} parent=0 // pred_check
    %p2607 = pneg %p18
  $region23: #{bert_text_lstm_net.3} parent=0 // pred_check_branch
    %2609 = sbr.rel (%p2607) target = $region25
  $region24: #{bert_text_lstm_net.3} parent=0 // pred_region
    %2610 = vst [vmem:[%s4] sm:$0x3] %v2602
  $region25: #{bert_text_lstm_net.3} parent=0 // pred_fallthru
    _
  // Predicated region
  $region26: #{bert_text_lstm_net.3} parent=0 // pred_check
    _
  $region27: #{bert_text_lstm_net.3} parent=0 // pred_check_branch
    %2612 = sbr.rel (0) target = $region29
  $region28: #{bert_text_lstm_net.3} parent=0 // pred_region
    _
  $region29: #{bert_text_lstm_net.3} parent=0 // pred_fallthru
    _
  // Predicated region
  $region30: #{bert_text_lstm_net.3} parent=0 // pred_check
    _
  $region31: #{bert_text_lstm_net.3} parent=0 // pred_check_branch
    %2614 = sbr.rel (0) target = $region33
  $region32: #{bert_text_lstm_net.3} parent=0 // pred_region
    _
  $region33: #{bert_text_lstm_net.3} parent=0 // pred_fallthru
    _

</llo_original>
